<compile_context>
chip_gen: v7x
topology: tpu7x:2x2x1
jax: 0.10.0
libtpu: 0.0.40
codegen_flags: <defaults>
</compile_context>

<pallas_src>
import jax
import jax.numpy as jnp
from jax import lax
from jax.experimental import pallas as pl
from jax.experimental.pallas import tpu as pltpu

EPS = 1e-5
KS = 3                                   # conv kernel size (padding = 1)
LANE = 128                               # lane width / output-channel padding
HIGHEST = jax.lax.Precision.HIGHEST      # only used by the pure-JAX reference


def _vmem_limit_bytes():
    """Generation-aware VMEM limit: ~3/4 of physical, capped at 100 MiB."""
    try:
        cap = int(pltpu.get_tpu_info().vmem_capacity_bytes)
    except Exception:
        cap = 64 * 1024 * 1024           # conservative (v7x-sized) fallback
    return int(min(cap * 3 // 4, 100 * 1024 * 1024))


def _pick_band_rows(H, W, cpad, budget_bytes, prefer_m=None):
    """Largest even divisor TH of H whose (TH*W, cpad) f32 scratch fits the
    budget, optionally preferring TH*W to be a multiple of prefer_m."""
    divs = [th for th in range(2, H + 1, 2) if H % th == 0]
    fit = [th for th in divs if th * W * cpad * 4 <= budget_bytes] or divs[:1]
    if prefer_m:
        pref = [th for th in fit if (th * W) % prefer_m == 0]
        if pref:
            return max(pref)
    return max(fit)


def down_block2d_forward_nhwc(x_nhwc, conv_w, conv_b, bn_gamma, bn_beta):
    """DownBlock2d forward on NHWC input; returns pooled NHWC output."""
    B, H, W, Cin = x_nhwc.shape
    Cout = conv_w.shape[0]
    assert H % 2 == 0 and W % 2 == 0, "AvgPool2d(2,2) needs even spatial dims"
    W2 = W // 2
    Cpad = ((Cout + LANE - 1) // LANE) * LANE          # lane-dense out channels
    vmem_limit = _vmem_limit_bytes()

    # Pass B band (pooling constraint, prefer M = TH*W multiple of 256) and a
    # larger pass-A band (stats only, fewer grid steps).
    TH = _pick_band_rows(H, W, Cpad, budget_bytes=2 << 20, prefer_m=256)
    TH_A = _pick_band_rows(H, W, Cpad, budget_bytes=4 << 20)
    NB, NB_A = H // TH, H // TH_A
    TH2 = TH // 2

    # ---- wrapper-side prep (cheap XLA ops, no 9x im2col tensor) -------------
    xp = jnp.pad(x_nhwc.astype(jnp.float32), ((0, 0), (1, 1), (1, 1), (0, 0)))
    xp = xp.astype(jnp.bfloat16)                                 # (B,H+2,W+2,Cin)
    wk = jnp.transpose(conv_w, (2, 3, 1, 0)).astype(jnp.bfloat16)  # (3,3,Cin,Cout)
    wk = jnp.pad(wk, ((0, 0), (0, 0), (0, 0), (0, Cpad - Cout)))   # (3,3,Cin,Cpad)

    fold_taps = Cin < 128                 # fold kw taps into the contraction
    if fold_taps:
        # xin[b, hp, w, kw*Cin+ci] = xp[b, hp, w+kw, ci]
        xin = jnp.concatenate([xp[:, :, kw:kw + W, :] for kw in range(KS)], axis=-1)
        win = wk.reshape(KS, KS * Cin, Cpad)          # win[kh, kw*Cin+ci, co]
        x_block = (1, H + 2, W, KS * Cin)
        w_block = (KS, KS * Cin, Cpad)
        w_index = lambda b, r: (0, 0, 0)
    else:
        xin, win = xp, wk
        x_block = (1, H + 2, W + 2, Cin)
        w_block = (KS, KS, Cin, Cpad)
        w_index = lambda b, r: (0, 0, 0, 0)
    x_index = lambda b, r: (b, 0, 0, 0)

    def accumulate_conv(acc_ref, x_ref, w_ref, band, th):
        """3x3 conv of one row band accumulated into acc_ref (th*W, Cpad) f32."""
        h0 = band * th                                # first padded row of band
        first = True
        for kh in range(KS):
            if fold_taps:
                taps = [(x_ref[0, pl.ds(h0 + kh, th), :, :].reshape(th * W, KS * Cin),
                         w_ref[kh])]
            else:
                taps = [(x_ref[0, pl.ds(h0 + kh, th), pl.ds(kw, W), :].reshape(th * W, Cin),
                         w_ref[kh, kw]) for kw in range(KS)]
            for patch, wmat in taps:
                z = jnp.dot(patch, wmat, preferred_element_type=jnp.float32)
                if first:
                    acc_ref[...] = z
                    first = False
                else:
                    acc_ref[...] += z

    def col_partial(v):
        """(M, Cpad) -> (8, Cpad) partial column sums without an XLU reduce."""
        m = v.shape[0]
        if m % 8 == 0:
            return v.reshape(m // 8, 8, Cpad).sum(axis=0)
        # fallback: spread the full sum over 8 rows so the wrapper-side
        # sum over rows stays uniform
        return jnp.broadcast_to(jnp.sum(v, axis=0, keepdims=True) * 0.125, (8, Cpad))

    # ---- pass A: conv + per-batch per-channel sum / sum-of-squares ----------
    def stats_kernel(x_ref, w_ref, sum_ref, sq_ref, acc_ref):
        @pl.when(pl.program_id(1) == 0)
        def _init():
            sum_ref[...] = jnp.zeros_like(sum_ref)
            sq_ref[...] = jnp.zeros_like(sq_ref)

        accumulate_conv(acc_ref, x_ref, w_ref, pl.program_id(1), TH_A)
        z = acc_ref[...]
        sum_ref[...] += col_partial(z).reshape(1, 8, Cpad)
        sq_ref[...] += col_partial(z * z).reshape(1, 8, Cpad)

    psum, psq = pl.pallas_call(
        stats_kernel,
        grid=(B, NB_A),
        in_specs=[pl.BlockSpec(x_block, x_index),
                  pl.BlockSpec(w_block, w_index)],
        out_specs=(pl.BlockSpec((1, 8, Cpad), lambda b, r: (b, 0, 0)),
                   pl.BlockSpec((1, 8, Cpad), lambda b, r: (b, 0, 0))),
        out_shape=(jax.ShapeDtypeStruct((B, 8, Cpad), jnp.float32),
                   jax.ShapeDtypeStruct((B, 8, Cpad), jnp.float32)),
        scratch_shapes=[pltpu.VMEM((TH_A * W, Cpad), jnp.float32)],
        compiler_params=pltpu.CompilerParams(
            dimension_semantics=("parallel", "arbitrary"),   # batch -> megacore
            vmem_limit_bytes=vmem_limit),
    )(xin, win)

    # ---- fold BN (batch stats) + conv bias into one scale/shift per channel -
    n = float(B * H * W)
    ch_sum = jnp.sum(psum, axis=(0, 1))[:Cout]         # (Cout,)
    ch_sq = jnp.sum(psq, axis=(0, 1))[:Cout]
    mean_z = ch_sum / n                                # mean of bias-free conv
    var = jnp.maximum(ch_sq / n - mean_z * mean_z, 0.0)
    scale = bn_gamma.astype(jnp.float32) * lax.rsqrt(var + EPS)
    shift = bn_beta.astype(jnp.float32) - mean_z * scale   # conv bias cancels
    scale_p = jnp.pad(scale, (0, Cpad - Cout)).reshape(1, Cpad)
    shift_p = jnp.pad(shift, (0, Cpad - Cout)).reshape(1, Cpad)

    # ---- pass B: conv + y = max(z*scale + shift, 0) + fused 2x2 avg pool ----
    def apply_kernel(x_ref, w_ref, scale_ref, shift_ref, out_ref, zs_ref):
        accumulate_conv(zs_ref, x_ref, w_ref, pl.program_id(1), TH)
        zs_ref[...] = jnp.maximum(zs_ref[...] * scale_ref[...] + shift_ref[...], 0.0)
        # W pool: pair even/odd w via sublane-strided reads (VPU).
        ev = zs_ref[pl.ds(0, TH * W2, stride=2), :]
        od = zs_ref[pl.ds(1, TH * W2, stride=2), :]
        # H pool: layout-clean reshape groups adjacent row pairs; single store.
        s = (ev + od).reshape(TH2, 2 * W2, Cpad)
        out_ref[0, :, :, :] = 0.25 * (s[:, :W2, :] + s[:, W2:, :])

    pooled = pl.pallas_call(
        apply_kernel,
        grid=(B, NB),
        in_specs=[pl.BlockSpec(x_block, x_index),
                  pl.BlockSpec(w_block, w_index),
                  pl.BlockSpec((1, Cpad), lambda b, r: (0, 0)),
                  pl.BlockSpec((1, Cpad), lambda b, r: (0, 0))],
        out_specs=pl.BlockSpec((1, TH2, W2, Cpad), lambda b, r: (b, r, 0, 0)),
        out_shape=jax.ShapeDtypeStruct((B, H // 2, W2, Cpad), jnp.float32),
        scratch_shapes=[pltpu.VMEM((TH * W, Cpad), jnp.float32)],
        compiler_params=pltpu.CompilerParams(
            dimension_semantics=("parallel", "parallel"),    # megacore on v7x
            vmem_limit_bytes=vmem_limit),
    )(xin, win, scale_p, shift_p)

    return pooled[..., :Cout]                          # drop lane padding


def down_block2d_forward(x_nchw, conv_w, conv_b, bn_gamma, bn_beta):
    # PyTorch-layout wrapper.  The NCHW<->NHWC transposes are pure XLA layout
    # plumbing kept only for API fidelity; call *_nhwc directly to keep the
    # surrounding graph NHWC end-to-end and avoid both transposes.
    x = jnp.transpose(x_nchw, (0, 2, 3, 1))
    out = down_block2d_forward_nhwc(x, conv_w, conv_b, bn_gamma, bn_beta)
    return jnp.transpose(out, (0, 3, 1, 2))


def reference(x_nchw, conv_w, conv_b, bn_gamma, bn_beta):
    """Pure-JAX f32 reference of DownBlock2d.forward (default config)."""
    out = lax.conv_general_dilated(
        x_nchw, conv_w, window_strides=(1, 1), padding=((1, 1), (1, 1)),
        dimension_numbers=('NCHW', 'OIHW', 'NCHW'), precision=HIGHEST)
    out = out + conv_b[None, :, None, None]
    mean = out.mean(axis=(0, 2, 3), keepdims=True)
    var = ((out - mean) ** 2).mean(axis=(0, 2, 3), keepdims=True)
    out = (out - mean) / jnp.sqrt(var + EPS)
    out = out * bn_gamma[None, :, None, None] + bn_beta[None, :, None, None]
    out = jnp.maximum(out, 0.0)
    B, C, H, W = out.shape
    return out.reshape(B, C, H // 2, 2, W // 2, 2).mean(axis=(3, 5))


if __name__ == "__main__":
    key = jax.random.PRNGKey(0)
    k1, k2, k3 = jax.random.split(key, 3)

    B, Cin, H, W = 2, 4, 16, 16
    Cout = 8

    x = jax.random.normal(k1, (B, Cin, H, W), dtype=jnp.float32)
    # deterministic synthetic parameters (Conv2d weight/bias; BN affine defaults)
    conv_w = 0.2 * jax.random.normal(k2, (Cout, Cin, 3, 3), dtype=jnp.float32)
    conv_b = 0.1 * jax.random.normal(k3, (Cout,), dtype=jnp.float32)
    bn_gamma = jnp.ones((Cout,), jnp.float32)   # BatchNorm2d default weight = 1
    bn_beta = jnp.zeros((Cout,), jnp.float32)   # BatchNorm2d default bias   = 0

    fwd = jax.jit(down_block2d_forward)
    out = jax.block_until_ready(fwd(x, conv_w, conv_b, bn_gamma, bn_beta))

    ref = reference(x, conv_w, conv_b, bn_gamma, bn_beta)
    assert out.shape == (B, Cout, H // 2, W // 2), out.shape
    # bf16 MXU operands (f32 accumulation) vs the f32/HIGHEST reference:
    # expected max abs error is a few 1e-3; 2e-2 gives comfortable margin.
    max_err = float(jnp.max(jnp.abs(out - ref)))
    assert jnp.allclose(out, ref, rtol=2e-2, atol=2e-2), max_err

    print("KERNEL_OK")
</pallas_src>

<mosaic_0001>
module attributes {stable_mosaic.version = 11 : i64} {
  func.func @stats_kernel(%arg0: i32, %arg1: i32, %arg2: memref<1x18x16x12xbf16, #tpu.memory_space<vmem>>, %arg3: memref<3x12x128xbf16, #tpu.memory_space<vmem>>, %arg4: memref<1x8x128xf32, #tpu.memory_space<vmem>>, %arg5: memref<1x8x128xf32, #tpu.memory_space<vmem>>, %arg6: memref<256x128xf32, #tpu.memory_space<vmem>>) attributes {dimension_semantics = [#tpu.dimension_semantics<parallel>, #tpu.dimension_semantics<arbitrary>], iteration_bounds = array<i64: 2, 1>, scalar_prefetch = 0 : i64, scratch_operands = 1 : i64, tpu.core_type = #tpu.core_type<tc>, window_params = [{transform_indices = @transform_0, window_bounds = array<i64: 1, 18, 16, 12>}, {pipeline_mode = #tpu.pipeline_mode<synchronous>, transform_indices = @transform_1, window_bounds = array<i64: 3, 12, 128>}, {transform_indices = @transform_2, window_bounds = array<i64: 1, 8, 128>}, {transform_indices = @transform_3, window_bounds = array<i64: 1, 8, 128>}]} {
    %c0_i32 = arith.constant 0 : i32
    %0 = arith.cmpi eq, %arg1, %c0_i32 : i32
    %1 = arith.extui %0 : i1 to i32
    %c0_i32_0 = arith.constant 0 : i32
    %2 = arith.cmpi ne, %1, %c0_i32_0 : i32
    scf.if %2 {
      %cst_45 = arith.constant 0.000000e+00 : f32
      %49 = vector.broadcast %cst_45 : f32 to vector<1x8x128xf32>
      %c0_46 = arith.constant 0 : index
      %c0_47 = arith.constant 0 : index
      %c0_48 = arith.constant 0 : index
      %50 = vector.load %arg4[%c0_46, %c0_47, %c0_48] : memref<1x8x128xf32, #tpu.memory_space<vmem>>, vector<1x8x128xf32>
      tpu.vector_store %arg4[%c0_46, %c0_47, %c0_48], %49 {strides = array<i32>} : memref<1x8x128xf32, #tpu.memory_space<vmem>>, vector<1x8x128xf32>,
      %cst_49 = arith.constant 0.000000e+00 : f32
      %51 = vector.broadcast %cst_49 : f32 to vector<1x8x128xf32>
      %c0_50 = arith.constant 0 : index
      %c0_51 = arith.constant 0 : index
      %c0_52 = arith.constant 0 : index
      %52 = vector.load %arg5[%c0_50, %c0_51, %c0_52] : memref<1x8x128xf32, #tpu.memory_space<vmem>>, vector<1x8x128xf32>
      tpu.vector_store %arg5[%c0_50, %c0_51, %c0_52], %51 {strides = array<i32>} : memref<1x8x128xf32, #tpu.memory_space<vmem>>, vector<1x8x128xf32>,
    } else {
    }
    %c16_i32 = arith.constant 16 : i32
    %3 = arith.muli %arg1, %c16_i32 : i32
    %c0_i32_1 = arith.constant 0 : i32
    %4 = arith.addi %3, %c0_i32_1 : i32
    %c0 = arith.constant 0 : index
    %5 = arith.index_cast %4 : i32 to index
    %c0_2 = arith.constant 0 : index
    %c0_3 = arith.constant 0 : index
    %6 = vector.load %arg2[%c0, %5, %c0_2, %c0_3] : memref<1x18x16x12xbf16, #tpu.memory_space<vmem>>, vector<1x16x16x12xbf16>
    %7 = vector.shape_cast %6 : vector<1x16x16x12xbf16> to vector<16x16x12xbf16>
    %8 = vector.shape_cast %7 : vector<16x16x12xbf16> to vector<256x12xbf16>
    %c0_4 = arith.constant 0 : index
    %c0_5 = arith.constant 0 : index
    %c0_6 = arith.constant 0 : index
    %9 = vector.load %arg3[%c0_4, %c0_5, %c0_6] : memref<3x12x128xbf16, #tpu.memory_space<vmem>>, vector<1x12x128xbf16>
    %10 = vector.shape_cast %9 : vector<1x12x128xbf16> to vector<12x128xbf16>
    %cst = arith.constant dense<0.000000e+00> : vector<256x128xf32>
    %11 = tpu.matmul %8, %10, %cst {dimension_numbers = #tpu.dot_dimension_numbers<[1], [0], [0], [1], [0, 0, 1, 1], [], []>} : vector<256x12xbf16>, vector<12x128xbf16>, vector<256x128xf32> -> vector<256x128xf32>
    %c0_7 = arith.constant 0 : index
    %c0_8 = arith.constant 0 : index
    %12 = vector.load %arg6[%c0_7, %c0_8] : memref<256x128xf32, #tpu.memory_space<vmem>>, vector<256x128xf32>
    tpu.vector_store %arg6[%c0_7, %c0_8], %11 {strides = array<i32>} : memref<256x128xf32, #tpu.memory_space<vmem>>, vector<256x128xf32>,
    %c1_i32 = arith.constant 1 : i32
    %13 = arith.addi %3, %c1_i32 : i32
    %c0_9 = arith.constant 0 : index
    %14 = arith.index_cast %13 : i32 to index
    %c0_10 = arith.constant 0 : index
    %c0_11 = arith.constant 0 : index
    %15 = vector.load %arg2[%c0_9, %14, %c0_10, %c0_11] : memref<1x18x16x12xbf16, #tpu.memory_space<vmem>>, vector<1x16x16x12xbf16>
    %16 = vector.shape_cast %15 : vector<1x16x16x12xbf16> to vector<16x16x12xbf16>
    %17 = vector.shape_cast %16 : vector<16x16x12xbf16> to vector<256x12xbf16>
    %c1 = arith.constant 1 : index
    %c0_12 = arith.constant 0 : index
    %c0_13 = arith.constant 0 : index
    %18 = vector.load %arg3[%c1, %c0_12, %c0_13] : memref<3x12x128xbf16, #tpu.memory_space<vmem>>, vector<1x12x128xbf16>
    %19 = vector.shape_cast %18 : vector<1x12x128xbf16> to vector<12x128xbf16>
    %cst_14 = arith.constant dense<0.000000e+00> : vector<256x128xf32>
    %20 = tpu.matmul %17, %19, %cst_14 {dimension_numbers = #tpu.dot_dimension_numbers<[1], [0], [0], [1], [0, 0, 1, 1], [], []>} : vector<256x12xbf16>, vector<12x128xbf16>, vector<256x128xf32> -> vector<256x128xf32>
    %c0_15 = arith.constant 0 : index
    %c0_16 = arith.constant 0 : index
    %21 = vector.load %arg6[%c0_15, %c0_16] : memref<256x128xf32, #tpu.memory_space<vmem>>, vector<256x128xf32>
    %22 = arith.addf %21, %20 : vector<256x128xf32>
    %c0_17 = arith.constant 0 : index
    %c0_18 = arith.constant 0 : index
    %23 = vector.load %arg6[%c0_17, %c0_18] : memref<256x128xf32, #tpu.memory_space<vmem>>, vector<256x128xf32>
    tpu.vector_store %arg6[%c0_17, %c0_18], %22 {strides = array<i32>} : memref<256x128xf32, #tpu.memory_space<vmem>>, vector<256x128xf32>,
    %c2_i32 = arith.constant 2 : i32
    %24 = arith.addi %3, %c2_i32 : i32
    %c0_19 = arith.constant 0 : index
    %25 = arith.index_cast %24 : i32 to index
    %c0_20 = arith.constant 0 : index
    %c0_21 = arith.constant 0 : index
    %26 = vector.load %arg2[%c0_19, %25, %c0_20, %c0_21] : memref<1x18x16x12xbf16, #tpu.memory_space<vmem>>, vector<1x16x16x12xbf16>
    %27 = vector.shape_cast %26 : vector<1x16x16x12xbf16> to vector<16x16x12xbf16>
    %28 = vector.shape_cast %27 : vector<16x16x12xbf16> to vector<256x12xbf16>
    %c2 = arith.constant 2 : index
    %c0_22 = arith.constant 0 : index
    %c0_23 = arith.constant 0 : index
    %29 = vector.load %arg3[%c2, %c0_22, %c0_23] : memref<3x12x128xbf16, #tpu.memory_space<vmem>>, vector<1x12x128xbf16>
    %30 = vector.shape_cast %29 : vector<1x12x128xbf16> to vector<12x128xbf16>
    %cst_24 = arith.constant dense<0.000000e+00> : vector<256x128xf32>
    %31 = tpu.matmul %28, %30, %cst_24 {dimension_numbers = #tpu.dot_dimension_numbers<[1], [0], [0], [1], [0, 0, 1, 1], [], []>} : vector<256x12xbf16>, vector<12x128xbf16>, vector<256x128xf32> -> vector<256x128xf32>
    %c0_25 = arith.constant 0 : index
    %c0_26 = arith.constant 0 : index
    %32 = vector.load %arg6[%c0_25, %c0_26] : memref<256x128xf32, #tpu.memory_space<vmem>>, vector<256x128xf32>
    %33 = arith.addf %32, %31 : vector<256x128xf32>
    %c0_27 = arith.constant 0 : index
    %c0_28 = arith.constant 0 : index
    %34 = vector.load %arg6[%c0_27, %c0_28] : memref<256x128xf32, #tpu.memory_space<vmem>>, vector<256x128xf32>
    tpu.vector_store %arg6[%c0_27, %c0_28], %33 {strides = array<i32>} : memref<256x128xf32, #tpu.memory_space<vmem>>, vector<256x128xf32>,
    %c0_29 = arith.constant 0 : index
    %c0_30 = arith.constant 0 : index
    %35 = vector.load %arg6[%c0_29, %c0_30] : memref<256x128xf32, #tpu.memory_space<vmem>>, vector<256x128xf32>
    %c0_31 = arith.constant 0 : index
    %c0_32 = arith.constant 0 : index
    %c0_33 = arith.constant 0 : index
    %36 = vector.load %arg4[%c0_31, %c0_32, %c0_33] : memref<1x8x128xf32, #tpu.memory_space<vmem>>, vector<1x8x128xf32>
    %37 = vector.shape_cast %35 : vector<256x128xf32> to vector<32x8x128xf32>
    %cst_34 = arith.constant dense<0.000000e+00> : vector<8x128xf32>
    %38 = vector.multi_reduction <add>, %37, %cst_34 [0] : vector<32x8x128xf32> to vector<8x128xf32>
    %39 = vector.shape_cast %38 : vector<8x128xf32> to vector<1x8x128xf32>
    %40 = arith.addf %36, %39 : vector<1x8x128xf32>
    %c0_35 = arith.constant 0 : index
    %c0_36 = arith.constant 0 : index
    %c0_37 = arith.constant 0 : index
    %41 = vector.load %arg4[%c0_35, %c0_36, %c0_37] : memref<1x8x128xf32, #tpu.memory_space<vmem>>, vector<1x8x128xf32>
    tpu.vector_store %arg4[%c0_35, %c0_36, %c0_37], %40 {strides = array<i32>} : memref<1x8x128xf32, #tpu.memory_space<vmem>>, vector<1x8x128xf32>,
    %c0_38 = arith.constant 0 : index
    %c0_39 = arith.constant 0 : index
    %c0_40 = arith.constant 0 : index
    %42 = vector.load %arg5[%c0_38, %c0_39, %c0_40] : memref<1x8x128xf32, #tpu.memory_space<vmem>>, vector<1x8x128xf32>
    %43 = arith.mulf %35, %35 : vector<256x128xf32>
    %44 = vector.shape_cast %43 : vector<256x128xf32> to vector<32x8x128xf32>
    %cst_41 = arith.constant dense<0.000000e+00> : vector<8x128xf32>
    %45 = vector.multi_reduction <add>, %44, %cst_41 [0] : vector<32x8x128xf32> to vector<8x128xf32>
    %46 = vector.shape_cast %45 : vector<8x128xf32> to vector<1x8x128xf32>
    %47 = arith.addf %42, %46 : vector<1x8x128xf32>
    %c0_42 = arith.constant 0 : index
    %c0_43 = arith.constant 0 : index
    %c0_44 = arith.constant 0 : index
    %48 = vector.load %arg5[%c0_42, %c0_43, %c0_44] : memref<1x8x128xf32, #tpu.memory_space<vmem>>, vector<1x8x128xf32>
    tpu.vector_store %arg5[%c0_42, %c0_43, %c0_44], %47 {strides = array<i32>} : memref<1x8x128xf32, #tpu.memory_space<vmem>>, vector<1x8x128xf32>,
    return
  }
  func.func @transform_0(%arg0: i32, %arg1: i32) -> (i32, i32, i32, i32) {
    %c0_i32 = arith.constant 0 : i32
    %c0_i32_0 = arith.constant 0 : i32
    %c0_i32_1 = arith.constant 0 : i32
    %c0_i32_2 = arith.constant 0 : i32
    return %arg0, %c0_i32, %c0_i32_0, %c0_i32_1 : i32, i32, i32, i32
  }
  func.func @transform_1(%arg0: i32, %arg1: i32) -> (i32, i32, i32) {
    %c0_i32 = arith.constant 0 : i32
    %c0_i32_0 = arith.constant 0 : i32
    %c0_i32_1 = arith.constant 0 : i32
    %c0_i32_2 = arith.constant 0 : i32
    return %c0_i32, %c0_i32_0, %c0_i32_1 : i32, i32, i32
  }
  func.func @transform_2(%arg0: i32, %arg1: i32) -> (i32, i32, i32) {
    %c0_i32 = arith.constant 0 : i32
    %c0_i32_0 = arith.constant 0 : i32
    %c0_i32_1 = arith.constant 0 : i32
    return %arg0, %c0_i32, %c0_i32_0 : i32, i32, i32
  }
  func.func @transform_3(%arg0: i32, %arg1: i32) -> (i32, i32, i32) {
    %c0_i32 = arith.constant 0 : i32
    %c0_i32_0 = arith.constant 0 : i32
    %c0_i32_1 = arith.constant 0 : i32
    return %arg0, %c0_i32, %c0_i32_0 : i32, i32, i32
  }
}

module attributes {stable_mosaic.version = 11 : i64} {
  func.func @apply_kernel(%arg0: i32, %arg1: i32, %arg2: memref<1x18x16x12xbf16, #tpu.memory_space<vmem>>, %arg3: memref<3x12x128xbf16, #tpu.memory_space<vmem>>, %arg4: memref<1x128xf32, #tpu.memory_space<vmem>>, %arg5: memref<1x128xf32, #tpu.memory_space<vmem>>, %arg6: memref<1x8x8x128xf32, #tpu.memory_space<vmem>>, %arg7: memref<256x128xf32, #tpu.memory_space<vmem>>) attributes {dimension_semantics = [#tpu.dimension_semantics<parallel>, #tpu.dimension_semantics<parallel>], iteration_bounds = array<i64: 2, 1>, scalar_prefetch = 0 : i64, scratch_operands = 1 : i64, tpu.core_type = #tpu.core_type<tc>, window_params = [{transform_indices = @transform_0, window_bounds = array<i64: 1, 18, 16, 12>}, {pipeline_mode = #tpu.pipeline_mode<synchronous>, transform_indices = @transform_1, window_bounds = array<i64: 3, 12, 128>}, {pipeline_mode = #tpu.pipeline_mode<synchronous>, transform_indices = @transform_2, window_bounds = array<i64: 1, 128>}, {pipeline_mode = #tpu.pipeline_mode<synchronous>, transform_indices = @transform_3, window_bounds = array<i64: 1, 128>}, {transform_indices = @transform_4, window_bounds = array<i64: 1, 8, 8, 128>}]} {
    %c16_i32 = arith.constant 16 : i32
    %0 = arith.muli %arg1, %c16_i32 : i32
    %c0_i32 = arith.constant 0 : i32
    %1 = arith.addi %0, %c0_i32 : i32
    %c0 = arith.constant 0 : index
    %2 = arith.index_cast %1 : i32 to index
    %c0_0 = arith.constant 0 : index
    %c0_1 = arith.constant 0 : index
    %3 = vector.load %arg2[%c0, %2, %c0_0, %c0_1] : memref<1x18x16x12xbf16, #tpu.memory_space<vmem>>, vector<1x16x16x12xbf16>
    %4 = vector.shape_cast %3 : vector<1x16x16x12xbf16> to vector<16x16x12xbf16>
    %5 = vector.shape_cast %4 : vector<16x16x12xbf16> to vector<256x12xbf16>
    %c0_2 = arith.constant 0 : index
    %c0_3 = arith.constant 0 : index
    %c0_4 = arith.constant 0 : index
    %6 = vector.load %arg3[%c0_2, %c0_3, %c0_4] : memref<3x12x128xbf16, #tpu.memory_space<vmem>>, vector<1x12x128xbf16>
    %7 = vector.shape_cast %6 : vector<1x12x128xbf16> to vector<12x128xbf16>
    %cst = arith.constant dense<0.000000e+00> : vector<256x128xf32>
    %8 = tpu.matmul %5, %7, %cst {dimension_numbers = #tpu.dot_dimension_numbers<[1], [0], [0], [1], [0, 0, 1, 1], [], []>} : vector<256x12xbf16>, vector<12x128xbf16>, vector<256x128xf32> -> vector<256x128xf32>
    %c0_5 = arith.constant 0 : index
    %c0_6 = arith.constant 0 : index
    %9 = vector.load %arg7[%c0_5, %c0_6] : memref<256x128xf32, #tpu.memory_space<vmem>>, vector<256x128xf32>
    tpu.vector_store %arg7[%c0_5, %c0_6], %8 {strides = array<i32>} : memref<256x128xf32, #tpu.memory_space<vmem>>, vector<256x128xf32>,
    %c1_i32 = arith.constant 1 : i32
    %10 = arith.addi %0, %c1_i32 : i32
    %c0_7 = arith.constant 0 : index
    %11 = arith.index_cast %10 : i32 to index
    %c0_8 = arith.constant 0 : index
    %c0_9 = arith.constant 0 : index
    %12 = vector.load %arg2[%c0_7, %11, %c0_8, %c0_9] : memref<1x18x16x12xbf16, #tpu.memory_space<vmem>>, vector<1x16x16x12xbf16>
    %13 = vector.shape_cast %12 : vector<1x16x16x12xbf16> to vector<16x16x12xbf16>
    %14 = vector.shape_cast %13 : vector<16x16x12xbf16> to vector<256x12xbf16>
    %c1 = arith.constant 1 : index
    %c0_10 = arith.constant 0 : index
    %c0_11 = arith.constant 0 : index
    %15 = vector.load %arg3[%c1, %c0_10, %c0_11] : memref<3x12x128xbf16, #tpu.memory_space<vmem>>, vector<1x12x128xbf16>
    %16 = vector.shape_cast %15 : vector<1x12x128xbf16> to vector<12x128xbf16>
    %cst_12 = arith.constant dense<0.000000e+00> : vector<256x128xf32>
    %17 = tpu.matmul %14, %16, %cst_12 {dimension_numbers = #tpu.dot_dimension_numbers<[1], [0], [0], [1], [0, 0, 1, 1], [], []>} : vector<256x12xbf16>, vector<12x128xbf16>, vector<256x128xf32> -> vector<256x128xf32>
    %c0_13 = arith.constant 0 : index
    %c0_14 = arith.constant 0 : index
    %18 = vector.load %arg7[%c0_13, %c0_14] : memref<256x128xf32, #tpu.memory_space<vmem>>, vector<256x128xf32>
    %19 = arith.addf %18, %17 : vector<256x128xf32>
    %c0_15 = arith.constant 0 : index
    %c0_16 = arith.constant 0 : index
    %20 = vector.load %arg7[%c0_15, %c0_16] : memref<256x128xf32, #tpu.memory_space<vmem>>, vector<256x128xf32>
    tpu.vector_store %arg7[%c0_15, %c0_16], %19 {strides = array<i32>} : memref<256x128xf32, #tpu.memory_space<vmem>>, vector<256x128xf32>,
    %c2_i32 = arith.constant 2 : i32
    %21 = arith.addi %0, %c2_i32 : i32
    %c0_17 = arith.constant 0 : index
    %22 = arith.index_cast %21 : i32 to index
    %c0_18 = arith.constant 0 : index
    %c0_19 = arith.constant 0 : index
    %23 = vector.load %arg2[%c0_17, %22, %c0_18, %c0_19] : memref<1x18x16x12xbf16, #tpu.memory_space<vmem>>, vector<1x16x16x12xbf16>
    %24 = vector.shape_cast %23 : vector<1x16x16x12xbf16> to vector<16x16x12xbf16>
    %25 = vector.shape_cast %24 : vector<16x16x12xbf16> to vector<256x12xbf16>
    %c2 = arith.constant 2 : index
    %c0_20 = arith.constant 0 : index
    %c0_21 = arith.constant 0 : index
    %26 = vector.load %arg3[%c2, %c0_20, %c0_21] : memref<3x12x128xbf16, #tpu.memory_space<vmem>>, vector<1x12x128xbf16>
    %27 = vector.shape_cast %26 : vector<1x12x128xbf16> to vector<12x128xbf16>
    %cst_22 = arith.constant dense<0.000000e+00> : vector<256x128xf32>
    %28 = tpu.matmul %25, %27, %cst_22 {dimension_numbers = #tpu.dot_dimension_numbers<[1], [0], [0], [1], [0, 0, 1, 1], [], []>} : vector<256x12xbf16>, vector<12x128xbf16>, vector<256x128xf32> -> vector<256x128xf32>
    %c0_23 = arith.constant 0 : index
    %c0_24 = arith.constant 0 : index
    %29 = vector.load %arg7[%c0_23, %c0_24] : memref<256x128xf32, #tpu.memory_space<vmem>>, vector<256x128xf32>
    %30 = arith.addf %29, %28 : vector<256x128xf32>
    %c0_25 = arith.constant 0 : index
    %c0_26 = arith.constant 0 : index
    %31 = vector.load %arg7[%c0_25, %c0_26] : memref<256x128xf32, #tpu.memory_space<vmem>>, vector<256x128xf32>
    tpu.vector_store %arg7[%c0_25, %c0_26], %30 {strides = array<i32>} : memref<256x128xf32, #tpu.memory_space<vmem>>, vector<256x128xf32>,
    %c0_27 = arith.constant 0 : index
    %c0_28 = arith.constant 0 : index
    %32 = vector.load %arg7[%c0_27, %c0_28] : memref<256x128xf32, #tpu.memory_space<vmem>>, vector<256x128xf32>
    %c0_29 = arith.constant 0 : index
    %c0_30 = arith.constant 0 : index
    %33 = vector.load %arg4[%c0_29, %c0_30] : memref<1x128xf32, #tpu.memory_space<vmem>>, vector<1x128xf32>
    %34 = vector.broadcast %33 : vector<1x128xf32> to vector<256x128xf32>
    %35 = arith.mulf %32, %34 : vector<256x128xf32>
    %c0_31 = arith.constant 0 : index
    %c0_32 = arith.constant 0 : index
    %36 = vector.load %arg5[%c0_31, %c0_32] : memref<1x128xf32, #tpu.memory_space<vmem>>, vector<1x128xf32>
    %37 = vector.broadcast %36 : vector<1x128xf32> to vector<256x128xf32>
    %38 = arith.addf %35, %37 : vector<256x128xf32>
    %cst_33 = arith.constant 0.000000e+00 : f32
    %39 = vector.broadcast %cst_33 : f32 to vector<256x128xf32>
    %40 = arith.maximumf %38, %39 : vector<256x128xf32>
    %c0_34 = arith.constant 0 : index
    %c0_35 = arith.constant 0 : index
    %41 = vector.load %arg7[%c0_34, %c0_35] : memref<256x128xf32, #tpu.memory_space<vmem>>, vector<256x128xf32>
    tpu.vector_store %arg7[%c0_34, %c0_35], %40 {strides = array<i32>} : memref<256x128xf32, #tpu.memory_space<vmem>>, vector<256x128xf32>,
    %c0_36 = arith.constant 0 : index
    %c0_37 = arith.constant 0 : index
    %42 = tpu.strided_load %arg7[%c0_36, %c0_37] {strides = array<i32: 2, 1>} : memref<256x128xf32, #tpu.memory_space<vmem>>, vector<128x128xf32>
    %c1_38 = arith.constant 1 : index
    %c0_39 = arith.constant 0 : index
    %43 = tpu.strided_load %arg7[%c1_38, %c0_39] {strides = array<i32: 2, 1>} : memref<256x128xf32, #tpu.memory_space<vmem>>, vector<128x128xf32>
    %44 = arith.addf %42, %43 : vector<128x128xf32>
    %45 = vector.shape_cast %44 : vector<128x128xf32> to vector<8x16x128xf32>
    %46 = vector.extract_strided_slice %45 {offsets = [0, 0, 0], sizes = [8, 8, 128], strides = [1, 1, 1]} : vector<8x16x128xf32> to vector<8x8x128xf32>
    %47 = vector.extract_strided_slice %45 {offsets = [0, 8, 0], sizes = [8, 8, 128], strides = [1, 1, 1]} : vector<8x16x128xf32> to vector<8x8x128xf32>
    %48 = arith.addf %46, %47 : vector<8x8x128xf32>
    %cst_40 = arith.constant 2.500000e-01 : f32
    %49 = vector.broadcast %cst_40 : f32 to vector<8x8x128xf32>
    %50 = arith.mulf %49, %48 : vector<8x8x128xf32>
    %c0_41 = arith.constant 0 : index
    %c0_42 = arith.constant 0 : index
    %c0_43 = arith.constant 0 : index
    %c0_44 = arith.constant 0 : index
    %51 = vector.load %arg6[%c0_41, %c0_42, %c0_43, %c0_44] : memref<1x8x8x128xf32, #tpu.memory_space<vmem>>, vector<1x8x8x128xf32>
    %52 = vector.shape_cast %51 : vector<1x8x8x128xf32> to vector<8x8x128xf32>
    %53 = vector.shape_cast %50 : vector<8x8x128xf32> to vector<1x8x8x128xf32>
    tpu.vector_store %arg6[%c0_41, %c0_42, %c0_43, %c0_44], %53 {strides = array<i32>} : memref<1x8x8x128xf32, #tpu.memory_space<vmem>>, vector<1x8x8x128xf32>,
    return
  }
  func.func @transform_0(%arg0: i32, %arg1: i32) -> (i32, i32, i32, i32) {
    %c0_i32 = arith.constant 0 : i32
    %c0_i32_0 = arith.constant 0 : i32
    %c0_i32_1 = arith.constant 0 : i32
    %c0_i32_2 = arith.constant 0 : i32
    return %arg0, %c0_i32, %c0_i32_0, %c0_i32_1 : i32, i32, i32, i32
  }
  func.func @transform_1(%arg0: i32, %arg1: i32) -> (i32, i32, i32) {
    %c0_i32 = arith.constant 0 : i32
    %c0_i32_0 = arith.constant 0 : i32
    %c0_i32_1 = arith.constant 0 : i32
    %c0_i32_2 = arith.constant 0 : i32
    return %c0_i32, %c0_i32_0, %c0_i32_1 : i32, i32, i32
  }
  func.func @transform_2(%arg0: i32, %arg1: i32) -> (i32, i32) {
    %c0_i32 = arith.constant 0 : i32
    %c0_i32_0 = arith.constant 0 : i32
    %c0_i32_1 = arith.constant 0 : i32
    return %c0_i32, %c0_i32_0 : i32, i32
  }
  func.func @transform_3(%arg0: i32, %arg1: i32) -> (i32, i32) {
    %c0_i32 = arith.constant 0 : i32
    %c0_i32_0 = arith.constant 0 : i32
    %c0_i32_1 = arith.constant 0 : i32
    return %c0_i32, %c0_i32_0 : i32, i32
  }
  func.func @transform_4(%arg0: i32, %arg1: i32) -> (i32, i32, i32, i32) {
    %c0_i32 = arith.constant 0 : i32
    %c0_i32_0 = arith.constant 0 : i32
    %c0_i32_1 = arith.constant 0 : i32
    return %arg0, %arg1, %c0_i32, %c0_i32_0 : i32, i32, i32, i32
  }
}

</mosaic_0001>

<llo_original>
// kernel: down_block2d_forward.2
$region0: #{down_block2d_forward.2}
  #allocation0 [shape = 'u32[]', space=smem, size = 0x4, offset = 0x4, fixed_abs, tag = 'smem constant byte address 0x4 - core index']
  #allocation1 [shape = 'u32[144,128]{1,0:T(1,128)}', space=vmem, size = 0x12000, scoped, tag = 'internal scratch']
  #allocation2 [shape = 'f32[256,128]{1,0:T(8,128)}', space=vmem, size = 0x20000, scoped, tag = 'scratch operand']
  %s0 = inlined_call_operand.vmem [shape: bf16[2,18,16,12], index: 0, kind: input, shape index: {}]
  %s1 = inlined_call_operand.vmem [shape: bf16[3,12,128], index: 1, kind: input, shape index: {}]
  %s2 = inlined_call_operand.vmem [shape: f32[2,8,128], index: 2, kind: output, shape index: {0}]
  %s3 = inlined_call_operand.vmem [shape: f32[2,8,128], index: 3, kind: output, shape index: {1}]
  %4 = xla_tuple %s2, %s3
  %s5 = sld [smem:[#allocation0]]
  $region53: #{down_block2d_forward.2} parent=0
    _
  %s7 = ssub.s32 1, %s5
  %s8 = scalar_select 0, %s7, %s5
  loop: start=0, step=1, limit=4
  $region2: #{down_block2d_forward.2} parent=0 // loop_pre_header
    _
  $region3: #{down_block2d_forward.2} parent=0 // loop_header
    %s10 = sphi 0, %s14
    %p11 = scmp.ge.s32.totalorder %s10, 4
    %s17 = sphi 0, %s29
    %s18 = sphi 0, %s25
    %s19 = sphi 0, %s17
    %s20 = sphi 0, %s18
    %s21 = sphi 0, %s19
    %s22 = sphi 0, %s20
    %s32 = sphi 0, %s34
    %s35 = sphi 0, %s32
    %s36 = sphi 0, %s35
    %s52 = sphi 0, %s36
    %s56 = sphi 0, %s56
    %s58 = sphi 0, %s56
    %s59 = sphi 0, %s58
    %s73 = sphi 0, %s59
    %s79 = sphi 0, %s81
    %s82 = sphi 0, %s79
    %s83 = sphi 0, %s82
    %s99 = sphi 0, %s83
    %s105 = sphi 0, %s107
    %s108 = sphi 0, %s105
    %s109 = sphi 0, %s108
    %s125 = sphi 0, %s109
  $region4: #{down_block2d_forward.2} parent=0 // loop_header_branch
    %13 = sbr.rel (%p11) target = $region8
  $region5: #{down_block2d_forward.2} parent=0 // loop_body
    %s15 = ssub.s32 %s10, 1
    %s16 = ssub.s32 %s10, 2
    %s23 = sadd.s32 1, %s18
    %p24 = scmp.ge.s32.totalorder %s23, 1
    %s25 = scalar_select %p24, 0, %s23
    %s26 = sadd.s32 1, %s17
    %s27 = scalar_select %p24, %s26, %s17
    %p28 = scmp.ge.s32.totalorder %s27, 2
    %s29 = scalar_select %p28, 0, %s27
    %s30 = ssub.s32 %s17, %s29
    %p31 = scmp.eq.s32.totalorder %s30, 0
    %s33 = sadd.s32 %s32, 1
    %s34 = scalar_select %p31, %s32, %s33
    %p37 = pneg %p31
    %p38 = scmp.eq.s32.totalorder %s10, 1
    %p39 = por %p37, %p38
    %p40 = scmp.ne.s32.totalorder %s32, %s35
    %p41 = scmp.eq.s32.totalorder %s10, 0
    %p42 = por %p40, %p41
    %p43 = scmp.ne.s32.totalorder %s32, %s35
    %p44 = scmp.eq.s32.totalorder %s15, 1
    %p45 = por %p43, %p44
    %p46 = scmp.ne.s32.totalorder %s35, %s36
    %p47 = scmp.eq.s32.totalorder %s15, 0
    %p48 = por %p46, %p47
    %p49 = scmp.ne.s32.totalorder %s35, %s36
    %p50 = scmp.eq.s32.totalorder %s16, 1
    %p51 = por %p49, %p50
    %p53 = scmp.ne.s32.totalorder %s36, %s52
    %p54 = scmp.eq.s32.totalorder %s16, 0
    %p55 = por %p53, %p54
    %s57 = sadd.s32 %s56, 1
    %p60 = scmp.eq.s32.totalorder %s10, 1
    %p61 = scmp.ne.s32.totalorder %s56, %s58
    %p62 = scmp.eq.s32.totalorder %s10, 0
    %p63 = por %p61, %p62
    %p64 = scmp.ne.s32.totalorder %s56, %s58
    %p65 = scmp.eq.s32.totalorder %s15, 1
    %p66 = por %p64, %p65
    %p67 = scmp.ne.s32.totalorder %s58, %s59
    %p68 = scmp.eq.s32.totalorder %s15, 0
    %p69 = por %p67, %p68
    %p70 = scmp.ne.s32.totalorder %s58, %s59
    %p71 = scmp.eq.s32.totalorder %s16, 1
    %p72 = por %p70, %p71
    %p74 = scmp.ne.s32.totalorder %s59, %s73
    %p75 = scmp.eq.s32.totalorder %s16, 0
    %p76 = por %p74, %p75
    %s77 = ssub.s32 %s17, %s29
    %p78 = scmp.eq.s32.totalorder %s77, 0
    %s80 = sadd.s32 %s79, 1
    %s81 = scalar_select %p78, %s79, %s80
    %p84 = pneg %p78
    %p85 = scmp.eq.s32.totalorder %s10, 1
    %p86 = por %p84, %p85
    %p87 = scmp.ne.s32.totalorder %s79, %s82
    %p88 = scmp.eq.s32.totalorder %s10, 0
    %p89 = por %p87, %p88
    %p90 = scmp.ne.s32.totalorder %s79, %s82
    %p91 = scmp.eq.s32.totalorder %s15, 1
    %p92 = por %p90, %p91
    %p93 = scmp.ne.s32.totalorder %s82, %s83
    %p94 = scmp.eq.s32.totalorder %s15, 0
    %p95 = por %p93, %p94
    %p96 = scmp.ne.s32.totalorder %s82, %s83
    %p97 = scmp.eq.s32.totalorder %s16, 1
    %p98 = por %p96, %p97
    %p100 = scmp.ne.s32.totalorder %s83, %s99
    %p101 = scmp.eq.s32.totalorder %s16, 0
    %p102 = por %p100, %p101
    %s103 = ssub.s32 %s17, %s29
    %p104 = scmp.eq.s32.totalorder %s103, 0
    %s106 = sadd.s32 %s105, 1
    %s107 = scalar_select %p104, %s105, %s106
    %p110 = pneg %p104
    %p111 = scmp.eq.s32.totalorder %s10, 1
    %p112 = por %p110, %p111
    %p113 = scmp.ne.s32.totalorder %s105, %s108
    %p114 = scmp.eq.s32.totalorder %s10, 0
    %p115 = por %p113, %p114
    %p116 = scmp.ne.s32.totalorder %s105, %s108
    %p117 = scmp.eq.s32.totalorder %s15, 1
    %p118 = por %p116, %p117
    %p119 = scmp.ne.s32.totalorder %s108, %s109
    %p120 = scmp.eq.s32.totalorder %s15, 0
    %p121 = por %p119, %p120
    %p122 = scmp.ne.s32.totalorder %s108, %s109
    %p123 = scmp.eq.s32.totalorder %s16, 1
    %p124 = por %p122, %p123
    %p126 = scmp.ne.s32.totalorder %s109, %s125
    %p127 = scmp.eq.s32.totalorder %s16, 0
    %p128 = por %p126, %p127
    %p129 = scmp.le.s32.totalorder 1, %s10
    %p130 = scmp.lt.s32.totalorder %s10, 3
    %p131 = pnand %p129, %p130
    %p132 = pneg %p131
    // Predicated region
    $region9: #{down_block2d_forward.2} parent=5 // pred_check
      _
    $region10: #{down_block2d_forward.2} parent=5 // pred_check_branch
      %134 = sbr.rel (%p131) target = $region12
    $region11: #{down_block2d_forward.2} parent=5 // pred_region
      %s135 = ssub.s32 %s10, 1
      // Predicated region
      $region13: #{down_block2d_forward.2} parent=11 // pred_check
        %p136 = pneg %p69
      $region14: #{down_block2d_forward.2} parent=11 // pred_check_branch
        %138 = sbr.rel (%p136) target = $region16
      $region15: #{down_block2d_forward.2} parent=11 // pred_region
        _
      $region16: #{down_block2d_forward.2} parent=11 // pred_fallthru
        _
    $region12: #{down_block2d_forward.2} parent=5 // pred_fallthru
      _
    %p139 = scmp.lt.s32.totalorder %s10, 2
    // Predicated region
    $region17: #{down_block2d_forward.2} parent=5 // pred_check
      %p140 = pneg %p139
    $region18: #{down_block2d_forward.2} parent=5 // pred_check_branch
      %142 = sbr.rel (%p140) target = $region20
    $region19: #{down_block2d_forward.2} parent=5 // pred_region
      // Predicated region
      $region21: #{down_block2d_forward.2} parent=19 // pred_check
        %p143 = pneg %p42
      $region22: #{down_block2d_forward.2} parent=19 // pred_check_branch
        %145 = sbr.rel (%p143) target = $region24
      $region23: #{down_block2d_forward.2} parent=19 // pred_region
        %p146 = scmp.lt.s32.totalorder %s17, 1
        %s147 = scalar_select %p146, %s17, 1
        %s148 = smul.addr %s147, 36
        %s149 = smul.addr %s148, 4
        %s150 = scalar_lea.vmem %s0, %s149
      $region24: #{down_block2d_forward.2} parent=19 // pred_fallthru
        _
    $region20: #{down_block2d_forward.2} parent=5 // pred_fallthru
      _
    %p151 = scmp.le.s32.totalorder 1, %s10
    %p152 = scmp.lt.s32.totalorder %s10, 3
    %p153 = pnand %p151, %p152
    %p154 = pneg %p153
    // Predicated region
    $region25: #{down_block2d_forward.2} parent=5 // pred_check
      _
    $region26: #{down_block2d_forward.2} parent=5 // pred_check_branch
      %156 = sbr.rel (%p153) target = $region28
    $region27: #{down_block2d_forward.2} parent=5 // pred_region
      %s157 = ssub.s32 %s10, 1
      %p158 = scmp.lt.s32.totalorder %s19, 1
      %s159 = scalar_select %p158, %s19, 1
      %s160 = smul.addr %s159, 36
      %s161 = smul.addr %s160, 4
      %s162 = scalar_lea.vmem %s0, %s161
      %p163 = pneg %p48
      %p164 = pneg %p45
      %p165 = pneg %p69
      %p166 = pneg %p66
      %p167 = pneg %p95
      %p168 = pneg %p92
      %p169 = scmp.lt.s32.totalorder %s19, 1
      %s170 = scalar_select %p169, %s19, 1
      %s171 = smul.addr %s170, 8
      %s172 = scalar_lea.vmem %s2, %s171
      %p173 = pneg %p121
      %p174 = pneg %p118
      %p175 = scmp.lt.s32.totalorder %s19, 1
      %s176 = scalar_select %p175, %s19, 1
      %s177 = smul.addr %s176, 8
      %s178 = scalar_lea.vmem %s3, %s177
      %p179 = scmp.lt.s32.totalorder %s19, 1
      %s180 = scalar_select %p179, %s19, 1
      %s181 = smul.addr %s180, 36
      %s182 = smul.addr %s181, 4
      %s183 = scalar_lea.vmem %s0, %s182
      %p184 = scmp.lt.s32.totalorder %s19, 1
      %s185 = scalar_select %p184, %s19, 1
      %s186 = smul.addr %s185, 8
      %s187 = scalar_lea.vmem %s2, %s186
      %p188 = scmp.lt.s32.totalorder %s19, 1
      %s189 = scalar_select %p188, %s19, 1
      %s190 = smul.addr %s189, 8
      %s191 = scalar_lea.vmem %s3, %s190
      %p193 = scmp.eq.s32.totalorder %s20, 0
      // Predicated region
      $region29: #{down_block2d_forward.2} parent=27 // pred_check
        %p194 = pneg %p193
      $region30: #{down_block2d_forward.2} parent=27 // pred_check_branch
        %196 = sbr.rel (%p194) target = $region32
      $region31: #{down_block2d_forward.2} parent=27 // pred_region
        %197 = vst [vmem:[%s187] sm:$0xff] 0.0
        %198 = vst [vmem:[%s191] sm:$0xff] 0.0
      $region32: #{down_block2d_forward.2} parent=27 // pred_fallthru
        _
      %s199 = smul.u32 %s20, 16
      %s200 = smul.u32 %s199, 2
      %s201 = smul.addr %s200, 4
      %s202 = scalar_lea.vmem %s183, %s201
      %v203 = vld [vmem:[%s202] sm:$0xf]
      %v204 = vld [vmem:[%s202 + $0x4] sm:$0xf]
      %v205 = vld [vmem:[%s202 + $0x8] sm:$0xf]
      %v206 = vld [vmem:[%s202 + $0xc] sm:$0xf]
      %v207 = vld [vmem:[%s202 + $0x10] sm:$0xf]
      %v208 = vld [vmem:[%s202 + $0x14] sm:$0xf]
      %v209 = vld [vmem:[%s202 + $0x18] sm:$0xf]
      %v210 = vld [vmem:[%s202 + $0x1c] sm:$0xf]
      %v211 = vld [vmem:[%s202 + $0x20] sm:$0xf]
      %v212 = vld [vmem:[%s202 + $0x24] sm:$0xf]
      %v213 = vld [vmem:[%s202 + $0x28] sm:$0xf]
      %v214 = vld [vmem:[%s202 + $0x2c] sm:$0xf]
      %v215 = vld [vmem:[%s202 + $0x30] sm:$0xf]
      %v216 = vld [vmem:[%s202 + $0x34] sm:$0xf]
      %v217 = vld [vmem:[%s202 + $0x38] sm:$0xf]
      %v218 = vld [vmem:[%s202 + $0x3c] sm:$0xf]
      %v219 = vld [vmem:[%s202 + $0x40] sm:$0xf]
      %v220 = vld [vmem:[%s202 + $0x44] sm:$0xf]
      %v221 = vld [vmem:[%s202 + $0x48] sm:$0xf]
      %v222 = vld [vmem:[%s202 + $0x4c] sm:$0xf]
      %v223 = vld [vmem:[%s202 + $0x50] sm:$0xf]
      %v224 = vld [vmem:[%s202 + $0x54] sm:$0xf]
      %v225 = vld [vmem:[%s202 + $0x58] sm:$0xf]
      %v226 = vld [vmem:[%s202 + $0x5c] sm:$0xf]
      %v227 = vld [vmem:[%s202 + $0x60] sm:$0xf]
      %v228 = vld [vmem:[%s202 + $0x64] sm:$0xf]
      %v229 = vld [vmem:[%s202 + $0x68] sm:$0xf]
      %v230 = vld [vmem:[%s202 + $0x6c] sm:$0xf]
      %v231 = vld [vmem:[%s202 + $0x70] sm:$0xf]
      %v232 = vld [vmem:[%s202 + $0x74] sm:$0xf]
      %v233 = vld [vmem:[%s202 + $0x78] sm:$0xf]
      %v234 = vld [vmem:[%s202 + $0x7c] sm:$0xf]
      %v235 = vld [vmem:[%s1] sm:$0xf]
      %v236 = vld [vmem:[%s1 + $0x4] sm:$0x3]
      %v269 = vunpack.c.l.b16 %v203
      %v270 = vunpack.c.l.b16 %v204
      %v271 = vunpack.c.l.b16 %v205
      %v272 = vunpack.c.l.b16 %v206
      %v273 = vunpack.c.l.b16 %v207
      %v274 = vunpack.c.l.b16 %v208
      %v275 = vunpack.c.l.b16 %v209
      %v276 = vunpack.c.l.b16 %v210
      %v277 = vunpack.c.l.b16 %v211
      %v278 = vunpack.c.l.b16 %v212
      %v279 = vunpack.c.l.b16 %v213
      %v280 = vunpack.c.l.b16 %v214
      %v281 = vunpack.c.l.b16 %v215
      %v282 = vunpack.c.l.b16 %v216
      %v283 = vunpack.c.l.b16 %v217
      %v284 = vunpack.c.l.b16 %v218
      %v285 = vunpack.c.l.b16 %v219
      %v286 = vunpack.c.l.b16 %v220
      %v287 = vunpack.c.l.b16 %v221
      %v288 = vunpack.c.l.b16 %v222
      %v289 = vunpack.c.l.b16 %v223
      %v290 = vunpack.c.l.b16 %v224
      %v291 = vunpack.c.l.b16 %v225
      %v292 = vunpack.c.l.b16 %v226
      %v293 = vunpack.c.l.b16 %v227
      %v294 = vunpack.c.l.b16 %v228
      %v295 = vunpack.c.l.b16 %v229
      %v296 = vunpack.c.l.b16 %v230
      %v297 = vunpack.c.l.b16 %v231
      %v298 = vunpack.c.l.b16 %v232
      %v299 = vunpack.c.l.b16 %v233
      %v300 = vunpack.c.l.b16 %v234
      %v301 = vpack.c.b16 %v270, %v269
      %v302 = vpack.c.b16 %v272, %v271
      %v303 = vpack.c.b16 %v274, %v273
      %v304 = vpack.c.b16 %v276, %v275
      %v305 = vpack.c.b16 %v278, %v277
      %v306 = vpack.c.b16 %v280, %v279
      %v307 = vpack.c.b16 %v282, %v281
      %v308 = vpack.c.b16 %v284, %v283
      %v309 = vpack.c.b16 %v286, %v285
      %v310 = vpack.c.b16 %v288, %v287
      %v311 = vpack.c.b16 %v290, %v289
      %v312 = vpack.c.b16 %v292, %v291
      %v313 = vpack.c.b16 %v294, %v293
      %v314 = vpack.c.b16 %v296, %v295
      %v315 = vpack.c.b16 %v298, %v297
      %v316 = vpack.c.b16 %v300, %v299
      %v319 = vunpack.c.l.b16 %v235
      %v320 = vunpack.c.l.b16 %v236
      %v321 = vpack.c.b16 %v320, %v319
      %vm322 = vcmask 97280
      %v324 = vsel %vm322, %v301, 0
      %v327 = vsel %vm322, %v302, 0
      %v330 = vsel %vm322, %v303, 0
      %v333 = vsel %vm322, %v304, 0
      %v336 = vsel %vm322, %v305, 0
      %v339 = vsel %vm322, %v306, 0
      %v342 = vsel %vm322, %v307, 0
      %v345 = vsel %vm322, %v308, 0
      %v348 = vsel %vm322, %v309, 0
      %v351 = vsel %vm322, %v310, 0
      %v354 = vsel %vm322, %v311, 0
      %v357 = vsel %vm322, %v312, 0
      %v360 = vsel %vm322, %v313, 0
      %v363 = vsel %vm322, %v314, 0
      %v366 = vsel %vm322, %v315, 0
      %v369 = vsel %vm322, %v316, 0
      %vm371 = vcmask 1045504
      %v373 = vsel %vm371, %v321, 0
      %375 = vmatprep.subr.bf16.mxu0 0
      %376 = vmatpush1.bf16.msra.mxu0 %v373
      %377 = vmatprep.subr.bf16.mxu0 0
      %378 = vmatpush1.bf16.msra.mxu0 0
      %379 = vmatprep.subr.bf16.mxu0 0
      %380 = vmatpush1.bf16.msra.mxu0 0
      %381 = vmatprep.subr.bf16.mxu0 0
      %382 = vmatpush1.bf16.msra.mxu0 0
      %383 = vmatprep.subr.bf16.mxu0 0
      %384 = vmatpush1.bf16.msra.mxu0 0
      %385 = vmatprep.subr.bf16.mxu0 0
      %386 = vmatpush1.bf16.msra.mxu0 0
      %387 = vmatprep.subr.bf16.mxu0 0
      %388 = vmatpush1.bf16.msra.mxu0 0
      %389 = vmatprep.subr.bf16.mxu0 0
      %390 = vmatpush1.bf16.msra.mxu0 0
      %391 = vmatprep.subr.bf16.mxu0 0
      %392 = vmatpush1.bf16.msra.mxu0 0
      %393 = vmatprep.subr.bf16.mxu0 0
      %394 = vmatpush1.bf16.msra.mxu0 0
      %395 = vmatprep.subr.bf16.mxu0 0
      %396 = vmatpush1.bf16.msra.mxu0 0
      %397 = vmatprep.subr.bf16.mxu0 0
      %398 = vmatpush1.bf16.msra.mxu0 0
      %399 = vmatprep.subr.bf16.mxu0 0
      %400 = vmatpush1.bf16.msra.mxu0 0
      %401 = vmatprep.subr.bf16.mxu0 0
      %402 = vmatpush1.bf16.msra.mxu0 0
      %403 = vmatprep.subr.bf16.mxu0 0
      %404 = vmatpush1.bf16.msra.mxu0 0
      %405 = vmatprep.subr.bf16.mxu0 0
      %406 = vmatpush1.bf16.msra.mxu0 0
      %407 = vmatprep.mubr.bf16.mxu0 0
      %408 = vmatmul.mubr.bf16.gmra.mrb[0].mxu0 %v324
      %v409 = vpop.f32.mrb[0].mxu0
      %v410 = vadd.f32 0.0, %v409
      %v411 = vpop.f32.mrb[0].mxu0
      %v412 = vpop.f32.mrb[0].mxu0
      %v413 = vadd.f32 0.0, %v412
      %v414 = vpop.f32.mrb[0].mxu0
      %415 = vmatprep.mubr.bf16.mxu0 0
      %416 = vmatmul.mubr.bf16.gmra.mrb[0].mxu0 %v327
      %v417 = vpop.f32.mrb[0].mxu0
      %v418 = vadd.f32 0.0, %v417
      %v419 = vpop.f32.mrb[0].mxu0
      %v420 = vpop.f32.mrb[0].mxu0
      %v421 = vadd.f32 0.0, %v420
      %v422 = vpop.f32.mrb[0].mxu0
      %423 = vmatprep.mubr.bf16.mxu0 0
      %424 = vmatmul.mubr.bf16.gmra.mrb[0].mxu0 %v330
      %v425 = vpop.f32.mrb[0].mxu0
      %v426 = vadd.f32 0.0, %v425
      %v427 = vpop.f32.mrb[0].mxu0
      %v428 = vpop.f32.mrb[0].mxu0
      %v429 = vadd.f32 0.0, %v428
      %v430 = vpop.f32.mrb[0].mxu0
      %431 = vmatprep.mubr.bf16.mxu0 0
      %432 = vmatmul.mubr.bf16.gmra.mrb[0].mxu0 %v333
      %v433 = vpop.f32.mrb[0].mxu0
      %v434 = vadd.f32 0.0, %v433
      %v435 = vpop.f32.mrb[0].mxu0
      %v436 = vpop.f32.mrb[0].mxu0
      %v437 = vadd.f32 0.0, %v436
      %v438 = vpop.f32.mrb[0].mxu0
      %439 = vmatprep.mubr.bf16.mxu0 0
      %440 = vmatmul.mubr.bf16.gmra.mrb[0].mxu0 %v336
      %v441 = vpop.f32.mrb[0].mxu0
      %v442 = vadd.f32 0.0, %v441
      %v443 = vpop.f32.mrb[0].mxu0
      %v444 = vpop.f32.mrb[0].mxu0
      %v445 = vadd.f32 0.0, %v444
      %v446 = vpop.f32.mrb[0].mxu0
      %447 = vmatprep.mubr.bf16.mxu0 0
      %448 = vmatmul.mubr.bf16.gmra.mrb[0].mxu0 %v339
      %v449 = vpop.f32.mrb[0].mxu0
      %v450 = vadd.f32 0.0, %v449
      %v451 = vpop.f32.mrb[0].mxu0
      %v452 = vpop.f32.mrb[0].mxu0
      %v453 = vadd.f32 0.0, %v452
      %v454 = vpop.f32.mrb[0].mxu0
      %455 = vmatprep.mubr.bf16.mxu0 0
      %456 = vmatmul.mubr.bf16.gmra.mrb[0].mxu0 %v342
      %v457 = vpop.f32.mrb[0].mxu0
      %v458 = vadd.f32 0.0, %v457
      %v459 = vpop.f32.mrb[0].mxu0
      %v460 = vpop.f32.mrb[0].mxu0
      %v461 = vadd.f32 0.0, %v460
      %v462 = vpop.f32.mrb[0].mxu0
      %463 = vmatprep.mubr.bf16.mxu0 0
      %464 = vmatmul.mubr.bf16.gmra.mrb[0].mxu0 %v345
      %v465 = vpop.f32.mrb[0].mxu0
      %v466 = vadd.f32 0.0, %v465
      %v467 = vpop.f32.mrb[0].mxu0
      %v468 = vpop.f32.mrb[0].mxu0
      %v469 = vadd.f32 0.0, %v468
      %v470 = vpop.f32.mrb[0].mxu0
      %471 = vmatprep.mubr.bf16.mxu0 0
      %472 = vmatmul.mubr.bf16.gmra.mrb[0].mxu0 %v348
      %v473 = vpop.f32.mrb[0].mxu0
      %v474 = vadd.f32 0.0, %v473
      %v475 = vpop.f32.mrb[0].mxu0
      %v476 = vpop.f32.mrb[0].mxu0
      %v477 = vadd.f32 0.0, %v476
      %v478 = vpop.f32.mrb[0].mxu0
      %479 = vmatprep.mubr.bf16.mxu0 0
      %480 = vmatmul.mubr.bf16.gmra.mrb[0].mxu0 %v351
      %v481 = vpop.f32.mrb[0].mxu0
      %v482 = vadd.f32 0.0, %v481
      %v483 = vpop.f32.mrb[0].mxu0
      %v484 = vpop.f32.mrb[0].mxu0
      %v485 = vadd.f32 0.0, %v484
      %v486 = vpop.f32.mrb[0].mxu0
      %487 = vmatprep.mubr.bf16.mxu0 0
      %488 = vmatmul.mubr.bf16.gmra.mrb[0].mxu0 %v354
      %v489 = vpop.f32.mrb[0].mxu0
      %v490 = vadd.f32 0.0, %v489
      %v491 = vpop.f32.mrb[0].mxu0
      %v492 = vpop.f32.mrb[0].mxu0
      %v493 = vadd.f32 0.0, %v492
      %v494 = vpop.f32.mrb[0].mxu0
      %495 = vmatprep.mubr.bf16.mxu0 0
      %496 = vmatmul.mubr.bf16.gmra.mrb[0].mxu0 %v357
      %v497 = vpop.f32.mrb[0].mxu0
      %v498 = vadd.f32 0.0, %v497
      %v499 = vpop.f32.mrb[0].mxu0
      %v500 = vpop.f32.mrb[0].mxu0
      %v501 = vadd.f32 0.0, %v500
      %v502 = vpop.f32.mrb[0].mxu0
      %503 = vmatprep.mubr.bf16.mxu0 0
      %504 = vmatmul.mubr.bf16.gmra.mrb[0].mxu0 %v360
      %v505 = vpop.f32.mrb[0].mxu0
      %v506 = vadd.f32 0.0, %v505
      %v507 = vpop.f32.mrb[0].mxu0
      %v508 = vpop.f32.mrb[0].mxu0
      %v509 = vadd.f32 0.0, %v508
      %v510 = vpop.f32.mrb[0].mxu0
      %511 = vmatprep.mubr.bf16.mxu0 0
      %512 = vmatmul.mubr.bf16.gmra.mrb[0].mxu0 %v363
      %v513 = vpop.f32.mrb[0].mxu0
      %v514 = vadd.f32 0.0, %v513
      %v515 = vpop.f32.mrb[0].mxu0
      %v516 = vpop.f32.mrb[0].mxu0
      %v517 = vadd.f32 0.0, %v516
      %v518 = vpop.f32.mrb[0].mxu0
      %519 = vmatprep.mubr.bf16.mxu0 0
      %520 = vmatmul.mubr.bf16.gmra.mrb[0].mxu0 %v366
      %v521 = vpop.f32.mrb[0].mxu0
      %v522 = vadd.f32 0.0, %v521
      %v523 = vpop.f32.mrb[0].mxu0
      %v524 = vpop.f32.mrb[0].mxu0
      %v525 = vadd.f32 0.0, %v524
      %v526 = vpop.f32.mrb[0].mxu0
      %527 = vmatprep.mubr.bf16.mxu0 0
      %528 = vmatmul.mubr.bf16.gmra.mrb[0].mxu0 %v369
      %v529 = vpop.f32.mrb[0].mxu0
      %v530 = vadd.f32 0.0, %v529
      %v531 = vpop.f32.mrb[0].mxu0
      %v532 = vpop.f32.mrb[0].mxu0
      %v533 = vadd.f32 0.0, %v532
      %v534 = vpop.f32.mrb[0].mxu0
      %535 = vdwg.mxu0
      %536 = vst [vmem:[#allocation2] sm:$0xff] %v410
      %537 = vst [vmem:[#allocation2 + $0x8] sm:$0xff] %v413
      %538 = vst [vmem:[#allocation2 + $0x10] sm:$0xff] %v418
      %539 = vst [vmem:[#allocation2 + $0x18] sm:$0xff] %v421
      %540 = vst [vmem:[#allocation2 + $0x20] sm:$0xff] %v426
      %541 = vst [vmem:[#allocation2 + $0x28] sm:$0xff] %v429
      %542 = vst [vmem:[#allocation2 + $0x30] sm:$0xff] %v434
      %543 = vst [vmem:[#allocation2 + $0x38] sm:$0xff] %v437
      %544 = vst [vmem:[#allocation2 + $0x40] sm:$0xff] %v442
      %545 = vst [vmem:[#allocation2 + $0x48] sm:$0xff] %v445
      %546 = vst [vmem:[#allocation2 + $0x50] sm:$0xff] %v450
      %547 = vst [vmem:[#allocation2 + $0x58] sm:$0xff] %v453
      %548 = vst [vmem:[#allocation2 + $0x60] sm:$0xff] %v458
      %549 = vst [vmem:[#allocation2 + $0x68] sm:$0xff] %v461
      %550 = vst [vmem:[#allocation2 + $0x70] sm:$0xff] %v466
      %551 = vst [vmem:[#allocation2 + $0x78] sm:$0xff] %v469
      %552 = vst [vmem:[#allocation2 + $0x80] sm:$0xff] %v474
      %553 = vst [vmem:[#allocation2 + $0x88] sm:$0xff] %v477
      %554 = vst [vmem:[#allocation2 + $0x90] sm:$0xff] %v482
      %555 = vst [vmem:[#allocation2 + $0x98] sm:$0xff] %v485
      %556 = vst [vmem:[#allocation2 + $0xa0] sm:$0xff] %v490
      %557 = vst [vmem:[#allocation2 + $0xa8] sm:$0xff] %v493
      %558 = vst [vmem:[#allocation2 + $0xb0] sm:$0xff] %v498
      %559 = vst [vmem:[#allocation2 + $0xb8] sm:$0xff] %v501
      %560 = vst [vmem:[#allocation2 + $0xc0] sm:$0xff] %v506
      %561 = vst [vmem:[#allocation2 + $0xc8] sm:$0xff] %v509
      %562 = vst [vmem:[#allocation2 + $0xd0] sm:$0xff] %v514
      %563 = vst [vmem:[#allocation2 + $0xd8] sm:$0xff] %v517
      %564 = vst [vmem:[#allocation2 + $0xe0] sm:$0xff] %v522
      %565 = vst [vmem:[#allocation2 + $0xe8] sm:$0xff] %v525
      %566 = vst [vmem:[#allocation2 + $0xf0] sm:$0xff] %v530
      %567 = vst [vmem:[#allocation2 + $0xf8] sm:$0xff] %v533
      %s568 = sadd.s32 %s199, 1
      %s569 = smul.u32 %s568, 2
      %s570 = smul.addr %s569, 4
      %s571 = scalar_lea.vmem %s183, %s570
      %v572 = vld [vmem:[%s571] sm:$0xf]
      %v573 = vld [vmem:[%s571 + $0x4] sm:$0xf]
      %v574 = vld [vmem:[%s571 + $0x8] sm:$0xf]
      %v575 = vld [vmem:[%s571 + $0xc] sm:$0xf]
      %v576 = vld [vmem:[%s571 + $0x10] sm:$0xf]
      %v577 = vld [vmem:[%s571 + $0x14] sm:$0xf]
      %v578 = vld [vmem:[%s571 + $0x18] sm:$0xf]
      %v579 = vld [vmem:[%s571 + $0x1c] sm:$0xf]
      %v580 = vld [vmem:[%s571 + $0x20] sm:$0xf]
      %v581 = vld [vmem:[%s571 + $0x24] sm:$0xf]
      %v582 = vld [vmem:[%s571 + $0x28] sm:$0xf]
      %v583 = vld [vmem:[%s571 + $0x2c] sm:$0xf]
      %v584 = vld [vmem:[%s571 + $0x30] sm:$0xf]
      %v585 = vld [vmem:[%s571 + $0x34] sm:$0xf]
      %v586 = vld [vmem:[%s571 + $0x38] sm:$0xf]
      %v587 = vld [vmem:[%s571 + $0x3c] sm:$0xf]
      %v588 = vld [vmem:[%s571 + $0x40] sm:$0xf]
      %v589 = vld [vmem:[%s571 + $0x44] sm:$0xf]
      %v590 = vld [vmem:[%s571 + $0x48] sm:$0xf]
      %v591 = vld [vmem:[%s571 + $0x4c] sm:$0xf]
      %v592 = vld [vmem:[%s571 + $0x50] sm:$0xf]
      %v593 = vld [vmem:[%s571 + $0x54] sm:$0xf]
      %v594 = vld [vmem:[%s571 + $0x58] sm:$0xf]
      %v595 = vld [vmem:[%s571 + $0x5c] sm:$0xf]
      %v596 = vld [vmem:[%s571 + $0x60] sm:$0xf]
      %v597 = vld [vmem:[%s571 + $0x64] sm:$0xf]
      %v598 = vld [vmem:[%s571 + $0x68] sm:$0xf]
      %v599 = vld [vmem:[%s571 + $0x6c] sm:$0xf]
      %v600 = vld [vmem:[%s571 + $0x70] sm:$0xf]
      %v601 = vld [vmem:[%s571 + $0x74] sm:$0xf]
      %v602 = vld [vmem:[%s571 + $0x78] sm:$0xf]
      %v603 = vld [vmem:[%s571 + $0x7c] sm:$0xf]
      %s604 = scalar_lea.vmem %s1, 8
      %v605 = vld [vmem:[%s604] sm:$0xf]
      %v606 = vld [vmem:[%s604 + $0x4] sm:$0x3]
      %v639 = vunpack.c.l.b16 %v572
      %v640 = vunpack.c.l.b16 %v573
      %v641 = vunpack.c.l.b16 %v574
      %v642 = vunpack.c.l.b16 %v575
      %v643 = vunpack.c.l.b16 %v576
      %v644 = vunpack.c.l.b16 %v577
      %v645 = vunpack.c.l.b16 %v578
      %v646 = vunpack.c.l.b16 %v579
      %v647 = vunpack.c.l.b16 %v580
      %v648 = vunpack.c.l.b16 %v581
      %v649 = vunpack.c.l.b16 %v582
      %v650 = vunpack.c.l.b16 %v583
      %v651 = vunpack.c.l.b16 %v584
      %v652 = vunpack.c.l.b16 %v585
      %v653 = vunpack.c.l.b16 %v586
      %v654 = vunpack.c.l.b16 %v587
      %v655 = vunpack.c.l.b16 %v588
      %v656 = vunpack.c.l.b16 %v589
      %v657 = vunpack.c.l.b16 %v590
      %v658 = vunpack.c.l.b16 %v591
      %v659 = vunpack.c.l.b16 %v592
      %v660 = vunpack.c.l.b16 %v593
      %v661 = vunpack.c.l.b16 %v594
      %v662 = vunpack.c.l.b16 %v595
      %v663 = vunpack.c.l.b16 %v596
      %v664 = vunpack.c.l.b16 %v597
      %v665 = vunpack.c.l.b16 %v598
      %v666 = vunpack.c.l.b16 %v599
      %v667 = vunpack.c.l.b16 %v600
      %v668 = vunpack.c.l.b16 %v601
      %v669 = vunpack.c.l.b16 %v602
      %v670 = vunpack.c.l.b16 %v603
      %v671 = vpack.c.b16 %v640, %v639
      %v672 = vpack.c.b16 %v642, %v641
      %v673 = vpack.c.b16 %v644, %v643
      %v674 = vpack.c.b16 %v646, %v645
      %v675 = vpack.c.b16 %v648, %v647
      %v676 = vpack.c.b16 %v650, %v649
      %v677 = vpack.c.b16 %v652, %v651
      %v678 = vpack.c.b16 %v654, %v653
      %v679 = vpack.c.b16 %v656, %v655
      %v680 = vpack.c.b16 %v658, %v657
      %v681 = vpack.c.b16 %v660, %v659
      %v682 = vpack.c.b16 %v662, %v661
      %v683 = vpack.c.b16 %v664, %v663
      %v684 = vpack.c.b16 %v666, %v665
      %v685 = vpack.c.b16 %v668, %v667
      %v686 = vpack.c.b16 %v670, %v669
      %v689 = vunpack.c.l.b16 %v605
      %v690 = vunpack.c.l.b16 %v606
      %v691 = vpack.c.b16 %v690, %v689
      %v693 = vsel %vm322, %v671, 0
      %v696 = vsel %vm322, %v672, 0
      %v699 = vsel %vm322, %v673, 0
      %v702 = vsel %vm322, %v674, 0
      %v705 = vsel %vm322, %v675, 0
      %v708 = vsel %vm322, %v676, 0
      %v711 = vsel %vm322, %v677, 0
      %v714 = vsel %vm322, %v678, 0
      %v717 = vsel %vm322, %v679, 0
      %v720 = vsel %vm322, %v680, 0
      %v723 = vsel %vm322, %v681, 0
      %v726 = vsel %vm322, %v682, 0
      %v729 = vsel %vm322, %v683, 0
      %v732 = vsel %vm322, %v684, 0
      %v735 = vsel %vm322, %v685, 0
      %v738 = vsel %vm322, %v686, 0
      %v741 = vsel %vm371, %v691, 0
      %743 = vmatprep.subr.bf16.mxu0 0
      %744 = vmatpush1.bf16.msra.mxu0 %v741
      %745 = vmatprep.subr.bf16.mxu0 0
      %746 = vmatpush1.bf16.msra.mxu0 0
      %747 = vmatprep.subr.bf16.mxu0 0
      %748 = vmatpush1.bf16.msra.mxu0 0
      %749 = vmatprep.subr.bf16.mxu0 0
      %750 = vmatpush1.bf16.msra.mxu0 0
      %751 = vmatprep.subr.bf16.mxu0 0
      %752 = vmatpush1.bf16.msra.mxu0 0
      %753 = vmatprep.subr.bf16.mxu0 0
      %754 = vmatpush1.bf16.msra.mxu0 0
      %755 = vmatprep.subr.bf16.mxu0 0
      %756 = vmatpush1.bf16.msra.mxu0 0
      %757 = vmatprep.subr.bf16.mxu0 0
      %758 = vmatpush1.bf16.msra.mxu0 0
      %759 = vmatprep.subr.bf16.mxu0 0
      %760 = vmatpush1.bf16.msra.mxu0 0
      %761 = vmatprep.subr.bf16.mxu0 0
      %762 = vmatpush1.bf16.msra.mxu0 0
      %763 = vmatprep.subr.bf16.mxu0 0
      %764 = vmatpush1.bf16.msra.mxu0 0
      %765 = vmatprep.subr.bf16.mxu0 0
      %766 = vmatpush1.bf16.msra.mxu0 0
      %767 = vmatprep.subr.bf16.mxu0 0
      %768 = vmatpush1.bf16.msra.mxu0 0
      %769 = vmatprep.subr.bf16.mxu0 0
      %770 = vmatpush1.bf16.msra.mxu0 0
      %771 = vmatprep.subr.bf16.mxu0 0
      %772 = vmatpush1.bf16.msra.mxu0 0
      %773 = vmatprep.subr.bf16.mxu0 0
      %774 = vmatpush1.bf16.msra.mxu0 0
      %775 = vmatprep.mubr.bf16.mxu0 0
      %776 = vmatmul.mubr.bf16.gmra.mrb[0].mxu0 %v693
      %v777 = vpop.f32.mrb[0].mxu0
      %v778 = vadd.f32 0.0, %v777
      %v779 = vpop.f32.mrb[0].mxu0
      %v780 = vpop.f32.mrb[0].mxu0
      %v781 = vadd.f32 0.0, %v780
      %v782 = vpop.f32.mrb[0].mxu0
      %783 = vmatprep.mubr.bf16.mxu0 0
      %784 = vmatmul.mubr.bf16.gmra.mrb[0].mxu0 %v696
      %v785 = vpop.f32.mrb[0].mxu0
      %v786 = vadd.f32 0.0, %v785
      %v787 = vpop.f32.mrb[0].mxu0
      %v788 = vpop.f32.mrb[0].mxu0
      %v789 = vadd.f32 0.0, %v788
      %v790 = vpop.f32.mrb[0].mxu0
      %791 = vmatprep.mubr.bf16.mxu0 0
      %792 = vmatmul.mubr.bf16.gmra.mrb[0].mxu0 %v699
      %v793 = vpop.f32.mrb[0].mxu0
      %v794 = vadd.f32 0.0, %v793
      %v795 = vpop.f32.mrb[0].mxu0
      %v796 = vpop.f32.mrb[0].mxu0
      %v797 = vadd.f32 0.0, %v796
      %v798 = vpop.f32.mrb[0].mxu0
      %799 = vmatprep.mubr.bf16.mxu0 0
      %800 = vmatmul.mubr.bf16.gmra.mrb[0].mxu0 %v702
      %v801 = vpop.f32.mrb[0].mxu0
      %v802 = vadd.f32 0.0, %v801
      %v803 = vpop.f32.mrb[0].mxu0
      %v804 = vpop.f32.mrb[0].mxu0
      %v805 = vadd.f32 0.0, %v804
      %v806 = vpop.f32.mrb[0].mxu0
      %807 = vmatprep.mubr.bf16.mxu0 0
      %808 = vmatmul.mubr.bf16.gmra.mrb[0].mxu0 %v705
      %v809 = vpop.f32.mrb[0].mxu0
      %v810 = vadd.f32 0.0, %v809
      %v811 = vpop.f32.mrb[0].mxu0
      %v812 = vpop.f32.mrb[0].mxu0
      %v813 = vadd.f32 0.0, %v812
      %v814 = vpop.f32.mrb[0].mxu0
      %815 = vmatprep.mubr.bf16.mxu0 0
      %816 = vmatmul.mubr.bf16.gmra.mrb[0].mxu0 %v708
      %v817 = vpop.f32.mrb[0].mxu0
      %v818 = vadd.f32 0.0, %v817
      %v819 = vpop.f32.mrb[0].mxu0
      %v820 = vpop.f32.mrb[0].mxu0
      %v821 = vadd.f32 0.0, %v820
      %v822 = vpop.f32.mrb[0].mxu0
      %823 = vmatprep.mubr.bf16.mxu0 0
      %824 = vmatmul.mubr.bf16.gmra.mrb[0].mxu0 %v711
      %v825 = vpop.f32.mrb[0].mxu0
      %v826 = vadd.f32 0.0, %v825
      %v827 = vpop.f32.mrb[0].mxu0
      %v828 = vpop.f32.mrb[0].mxu0
      %v829 = vadd.f32 0.0, %v828
      %v830 = vpop.f32.mrb[0].mxu0
      %831 = vmatprep.mubr.bf16.mxu0 0
      %832 = vmatmul.mubr.bf16.gmra.mrb[0].mxu0 %v714
      %v833 = vpop.f32.mrb[0].mxu0
      %v834 = vadd.f32 0.0, %v833
      %v835 = vpop.f32.mrb[0].mxu0
      %v836 = vpop.f32.mrb[0].mxu0
      %v837 = vadd.f32 0.0, %v836
      %v838 = vpop.f32.mrb[0].mxu0
      %839 = vmatprep.mubr.bf16.mxu0 0
      %840 = vmatmul.mubr.bf16.gmra.mrb[0].mxu0 %v717
      %v841 = vpop.f32.mrb[0].mxu0
      %v842 = vadd.f32 0.0, %v841
      %v843 = vpop.f32.mrb[0].mxu0
      %v844 = vpop.f32.mrb[0].mxu0
      %v845 = vadd.f32 0.0, %v844
      %v846 = vpop.f32.mrb[0].mxu0
      %847 = vmatprep.mubr.bf16.mxu0 0
      %848 = vmatmul.mubr.bf16.gmra.mrb[0].mxu0 %v720
      %v849 = vpop.f32.mrb[0].mxu0
      %v850 = vadd.f32 0.0, %v849
      %v851 = vpop.f32.mrb[0].mxu0
      %v852 = vpop.f32.mrb[0].mxu0
      %v853 = vadd.f32 0.0, %v852
      %v854 = vpop.f32.mrb[0].mxu0
      %855 = vmatprep.mubr.bf16.mxu0 0
      %856 = vmatmul.mubr.bf16.gmra.mrb[0].mxu0 %v723
      %v857 = vpop.f32.mrb[0].mxu0
      %v858 = vadd.f32 0.0, %v857
      %v859 = vpop.f32.mrb[0].mxu0
      %v860 = vpop.f32.mrb[0].mxu0
      %v861 = vadd.f32 0.0, %v860
      %v862 = vpop.f32.mrb[0].mxu0
      %863 = vmatprep.mubr.bf16.mxu0 0
      %864 = vmatmul.mubr.bf16.gmra.mrb[0].mxu0 %v726
      %v865 = vpop.f32.mrb[0].mxu0
      %v866 = vadd.f32 0.0, %v865
      %v867 = vpop.f32.mrb[0].mxu0
      %v868 = vpop.f32.mrb[0].mxu0
      %v869 = vadd.f32 0.0, %v868
      %v870 = vpop.f32.mrb[0].mxu0
      %871 = vmatprep.mubr.bf16.mxu0 0
      %872 = vmatmul.mubr.bf16.gmra.mrb[0].mxu0 %v729
      %v873 = vpop.f32.mrb[0].mxu0
      %v874 = vadd.f32 0.0, %v873
      %v875 = vpop.f32.mrb[0].mxu0
      %v876 = vpop.f32.mrb[0].mxu0
      %v877 = vadd.f32 0.0, %v876
      %v878 = vpop.f32.mrb[0].mxu0
      %879 = vmatprep.mubr.bf16.mxu0 0
      %880 = vmatmul.mubr.bf16.gmra.mrb[0].mxu0 %v732
      %v881 = vpop.f32.mrb[0].mxu0
      %v882 = vadd.f32 0.0, %v881
      %v883 = vpop.f32.mrb[0].mxu0
      %v884 = vpop.f32.mrb[0].mxu0
      %v885 = vadd.f32 0.0, %v884
      %v886 = vpop.f32.mrb[0].mxu0
      %887 = vmatprep.mubr.bf16.mxu0 0
      %888 = vmatmul.mubr.bf16.gmra.mrb[0].mxu0 %v735
      %v889 = vpop.f32.mrb[0].mxu0
      %v890 = vadd.f32 0.0, %v889
      %v891 = vpop.f32.mrb[0].mxu0
      %v892 = vpop.f32.mrb[0].mxu0
      %v893 = vadd.f32 0.0, %v892
      %v894 = vpop.f32.mrb[0].mxu0
      %895 = vmatprep.mubr.bf16.mxu0 0
      %896 = vmatmul.mubr.bf16.gmra.mrb[0].mxu0 %v738
      %v897 = vpop.f32.mrb[0].mxu0
      %v898 = vadd.f32 0.0, %v897
      %v899 = vpop.f32.mrb[0].mxu0
      %v900 = vpop.f32.mrb[0].mxu0
      %v901 = vadd.f32 0.0, %v900
      %v902 = vpop.f32.mrb[0].mxu0
      %903 = vdwg.mxu0
      %v904 = vld [vmem:[#allocation2] sm:$0xff]
      %v905 = vld [vmem:[#allocation2 + $0x8] sm:$0xff]
      %v906 = vld [vmem:[#allocation2 + $0x10] sm:$0xff]
      %v907 = vld [vmem:[#allocation2 + $0x18] sm:$0xff]
      %v908 = vld [vmem:[#allocation2 + $0x20] sm:$0xff]
      %v909 = vld [vmem:[#allocation2 + $0x28] sm:$0xff]
      %v910 = vld [vmem:[#allocation2 + $0x30] sm:$0xff]
      %v911 = vld [vmem:[#allocation2 + $0x38] sm:$0xff]
      %v912 = vld [vmem:[#allocation2 + $0x40] sm:$0xff]
      %v913 = vld [vmem:[#allocation2 + $0x48] sm:$0xff]
      %v914 = vld [vmem:[#allocation2 + $0x50] sm:$0xff]
      %v915 = vld [vmem:[#allocation2 + $0x58] sm:$0xff]
      %v916 = vld [vmem:[#allocation2 + $0x60] sm:$0xff]
      %v917 = vld [vmem:[#allocation2 + $0x68] sm:$0xff]
      %v918 = vld [vmem:[#allocation2 + $0x70] sm:$0xff]
      %v919 = vld [vmem:[#allocation2 + $0x78] sm:$0xff]
      %v920 = vld [vmem:[#allocation2 + $0x80] sm:$0xff]
      %v921 = vld [vmem:[#allocation2 + $0x88] sm:$0xff]
      %v922 = vld [vmem:[#allocation2 + $0x90] sm:$0xff]
      %v923 = vld [vmem:[#allocation2 + $0x98] sm:$0xff]
      %v924 = vld [vmem:[#allocation2 + $0xa0] sm:$0xff]
      %v925 = vld [vmem:[#allocation2 + $0xa8] sm:$0xff]
      %v926 = vld [vmem:[#allocation2 + $0xb0] sm:$0xff]
      %v927 = vld [vmem:[#allocation2 + $0xb8] sm:$0xff]
      %v928 = vld [vmem:[#allocation2 + $0xc0] sm:$0xff]
      %v929 = vld [vmem:[#allocation2 + $0xc8] sm:$0xff]
      %v930 = vld [vmem:[#allocation2 + $0xd0] sm:$0xff]
      %v931 = vld [vmem:[#allocation2 + $0xd8] sm:$0xff]
      %v932 = vld [vmem:[#allocation2 + $0xe0] sm:$0xff]
      %v933 = vld [vmem:[#allocation2 + $0xe8] sm:$0xff]
      %v934 = vld [vmem:[#allocation2 + $0xf0] sm:$0xff]
      %v935 = vld [vmem:[#allocation2 + $0xf8] sm:$0xff]
      %v936 = vadd.f32 %v904, %v778
      %v937 = vadd.f32 %v905, %v781
      %v938 = vadd.f32 %v906, %v786
      %v939 = vadd.f32 %v907, %v789
      %v940 = vadd.f32 %v908, %v794
      %v941 = vadd.f32 %v909, %v797
      %v942 = vadd.f32 %v910, %v802
      %v943 = vadd.f32 %v911, %v805
      %v944 = vadd.f32 %v912, %v810
      %v945 = vadd.f32 %v913, %v813
      %v946 = vadd.f32 %v914, %v818
      %v947 = vadd.f32 %v915, %v821
      %v948 = vadd.f32 %v916, %v826
      %v949 = vadd.f32 %v917, %v829
      %v950 = vadd.f32 %v918, %v834
      %v951 = vadd.f32 %v919, %v837
      %v952 = vadd.f32 %v920, %v842
      %v953 = vadd.f32 %v921, %v845
      %v954 = vadd.f32 %v922, %v850
      %v955 = vadd.f32 %v923, %v853
      %v956 = vadd.f32 %v924, %v858
      %v957 = vadd.f32 %v925, %v861
      %v958 = vadd.f32 %v926, %v866
      %v959 = vadd.f32 %v927, %v869
      %v960 = vadd.f32 %v928, %v874
      %v961 = vadd.f32 %v929, %v877
      %v962 = vadd.f32 %v930, %v882
      %v963 = vadd.f32 %v931, %v885
      %v964 = vadd.f32 %v932, %v890
      %v965 = vadd.f32 %v933, %v893
      %v966 = vadd.f32 %v934, %v898
      %v967 = vadd.f32 %v935, %v901
      %968 = vst [vmem:[#allocation2] sm:$0xff] %v936
      %969 = vst [vmem:[#allocation2 + $0x8] sm:$0xff] %v937
      %970 = vst [vmem:[#allocation2 + $0x10] sm:$0xff] %v938
      %971 = vst [vmem:[#allocation2 + $0x18] sm:$0xff] %v939
      %972 = vst [vmem:[#allocation2 + $0x20] sm:$0xff] %v940
      %973 = vst [vmem:[#allocation2 + $0x28] sm:$0xff] %v941
      %974 = vst [vmem:[#allocation2 + $0x30] sm:$0xff] %v942
      %975 = vst [vmem:[#allocation2 + $0x38] sm:$0xff] %v943
      %976 = vst [vmem:[#allocation2 + $0x40] sm:$0xff] %v944
      %977 = vst [vmem:[#allocation2 + $0x48] sm:$0xff] %v945
      %978 = vst [vmem:[#allocation2 + $0x50] sm:$0xff] %v946
      %979 = vst [vmem:[#allocation2 + $0x58] sm:$0xff] %v947
      %980 = vst [vmem:[#allocation2 + $0x60] sm:$0xff] %v948
      %981 = vst [vmem:[#allocation2 + $0x68] sm:$0xff] %v949
      %982 = vst [vmem:[#allocation2 + $0x70] sm:$0xff] %v950
      %983 = vst [vmem:[#allocation2 + $0x78] sm:$0xff] %v951
      %984 = vst [vmem:[#allocation2 + $0x80] sm:$0xff] %v952
      %985 = vst [vmem:[#allocation2 + $0x88] sm:$0xff] %v953
      %986 = vst [vmem:[#allocation2 + $0x90] sm:$0xff] %v954
      %987 = vst [vmem:[#allocation2 + $0x98] sm:$0xff] %v955
      %988 = vst [vmem:[#allocation2 + $0xa0] sm:$0xff] %v956
      %989 = vst [vmem:[#allocation2 + $0xa8] sm:$0xff] %v957
      %990 = vst [vmem:[#allocation2 + $0xb0] sm:$0xff] %v958
      %991 = vst [vmem:[#allocation2 + $0xb8] sm:$0xff] %v959
      %992 = vst [vmem:[#allocation2 + $0xc0] sm:$0xff] %v960
      %993 = vst [vmem:[#allocation2 + $0xc8] sm:$0xff] %v961
      %994 = vst [vmem:[#allocation2 + $0xd0] sm:$0xff] %v962
      %995 = vst [vmem:[#allocation2 + $0xd8] sm:$0xff] %v963
      %996 = vst [vmem:[#allocation2 + $0xe0] sm:$0xff] %v964
      %997 = vst [vmem:[#allocation2 + $0xe8] sm:$0xff] %v965
      %998 = vst [vmem:[#allocation2 + $0xf0] sm:$0xff] %v966
      %999 = vst [vmem:[#allocation2 + $0xf8] sm:$0xff] %v967
      %s1000 = sadd.s32 %s199, 2
      %s1001 = smul.u32 %s1000, 2
      %s1002 = smul.addr %s1001, 4
      %s1003 = scalar_lea.vmem %s183, %s1002
      %v1004 = vld [vmem:[%s1003] sm:$0xf]
      %v1005 = vld [vmem:[%s1003 + $0x4] sm:$0xf]
      %v1006 = vld [vmem:[%s1003 + $0x8] sm:$0xf]
      %v1007 = vld [vmem:[%s1003 + $0xc] sm:$0xf]
      %v1008 = vld [vmem:[%s1003 + $0x10] sm:$0xf]
      %v1009 = vld [vmem:[%s1003 + $0x14] sm:$0xf]
      %v1010 = vld [vmem:[%s1003 + $0x18] sm:$0xf]
      %v1011 = vld [vmem:[%s1003 + $0x1c] sm:$0xf]
      %v1012 = vld [vmem:[%s1003 + $0x20] sm:$0xf]
      %v1013 = vld [vmem:[%s1003 + $0x24] sm:$0xf]
      %v1014 = vld [vmem:[%s1003 + $0x28] sm:$0xf]
      %v1015 = vld [vmem:[%s1003 + $0x2c] sm:$0xf]
      %v1016 = vld [vmem:[%s1003 + $0x30] sm:$0xf]
      %v1017 = vld [vmem:[%s1003 + $0x34] sm:$0xf]
      %v1018 = vld [vmem:[%s1003 + $0x38] sm:$0xf]
      %v1019 = vld [vmem:[%s1003 + $0x3c] sm:$0xf]
      %v1020 = vld [vmem:[%s1003 + $0x40] sm:$0xf]
      %v1021 = vld [vmem:[%s1003 + $0x44] sm:$0xf]
      %v1022 = vld [vmem:[%s1003 + $0x48] sm:$0xf]
      %v1023 = vld [vmem:[%s1003 + $0x4c] sm:$0xf]
      %v1024 = vld [vmem:[%s1003 + $0x50] sm:$0xf]
      %v1025 = vld [vmem:[%s1003 + $0x54] sm:$0xf]
      %v1026 = vld [vmem:[%s1003 + $0x58] sm:$0xf]
      %v1027 = vld [vmem:[%s1003 + $0x5c] sm:$0xf]
      %v1028 = vld [vmem:[%s1003 + $0x60] sm:$0xf]
      %v1029 = vld [vmem:[%s1003 + $0x64] sm:$0xf]
      %v1030 = vld [vmem:[%s1003 + $0x68] sm:$0xf]
      %v1031 = vld [vmem:[%s1003 + $0x6c] sm:$0xf]
      %v1032 = vld [vmem:[%s1003 + $0x70] sm:$0xf]
      %v1033 = vld [vmem:[%s1003 + $0x74] sm:$0xf]
      %v1034 = vld [vmem:[%s1003 + $0x78] sm:$0xf]
      %v1035 = vld [vmem:[%s1003 + $0x7c] sm:$0xf]
      %s1036 = scalar_lea.vmem %s1, 16
      %v1037 = vld [vmem:[%s1036] sm:$0xf]
      %v1038 = vld [vmem:[%s1036 + $0x4] sm:$0x3]
      %v1071 = vunpack.c.l.b16 %v1004
      %v1072 = vunpack.c.l.b16 %v1005
      %v1073 = vunpack.c.l.b16 %v1006
      %v1074 = vunpack.c.l.b16 %v1007
      %v1075 = vunpack.c.l.b16 %v1008
      %v1076 = vunpack.c.l.b16 %v1009
      %v1077 = vunpack.c.l.b16 %v1010
      %v1078 = vunpack.c.l.b16 %v1011
      %v1079 = vunpack.c.l.b16 %v1012
      %v1080 = vunpack.c.l.b16 %v1013
      %v1081 = vunpack.c.l.b16 %v1014
      %v1082 = vunpack.c.l.b16 %v1015
      %v1083 = vunpack.c.l.b16 %v1016
      %v1084 = vunpack.c.l.b16 %v1017
      %v1085 = vunpack.c.l.b16 %v1018
      %v1086 = vunpack.c.l.b16 %v1019
      %v1087 = vunpack.c.l.b16 %v1020
      %v1088 = vunpack.c.l.b16 %v1021
      %v1089 = vunpack.c.l.b16 %v1022
      %v1090 = vunpack.c.l.b16 %v1023
      %v1091 = vunpack.c.l.b16 %v1024
      %v1092 = vunpack.c.l.b16 %v1025
      %v1093 = vunpack.c.l.b16 %v1026
      %v1094 = vunpack.c.l.b16 %v1027
      %v1095 = vunpack.c.l.b16 %v1028
      %v1096 = vunpack.c.l.b16 %v1029
      %v1097 = vunpack.c.l.b16 %v1030
      %v1098 = vunpack.c.l.b16 %v1031
      %v1099 = vunpack.c.l.b16 %v1032
      %v1100 = vunpack.c.l.b16 %v1033
      %v1101 = vunpack.c.l.b16 %v1034
      %v1102 = vunpack.c.l.b16 %v1035
      %v1103 = vpack.c.b16 %v1072, %v1071
      %v1104 = vpack.c.b16 %v1074, %v1073
      %v1105 = vpack.c.b16 %v1076, %v1075
      %v1106 = vpack.c.b16 %v1078, %v1077
      %v1107 = vpack.c.b16 %v1080, %v1079
      %v1108 = vpack.c.b16 %v1082, %v1081
      %v1109 = vpack.c.b16 %v1084, %v1083
      %v1110 = vpack.c.b16 %v1086, %v1085
      %v1111 = vpack.c.b16 %v1088, %v1087
      %v1112 = vpack.c.b16 %v1090, %v1089
      %v1113 = vpack.c.b16 %v1092, %v1091
      %v1114 = vpack.c.b16 %v1094, %v1093
      %v1115 = vpack.c.b16 %v1096, %v1095
      %v1116 = vpack.c.b16 %v1098, %v1097
      %v1117 = vpack.c.b16 %v1100, %v1099
      %v1118 = vpack.c.b16 %v1102, %v1101
      %v1121 = vunpack.c.l.b16 %v1037
      %v1122 = vunpack.c.l.b16 %v1038
      %v1123 = vpack.c.b16 %v1122, %v1121
      %v1125 = vsel %vm322, %v1103, 0
      %v1128 = vsel %vm322, %v1104, 0
      %v1131 = vsel %vm322, %v1105, 0
      %v1134 = vsel %vm322, %v1106, 0
      %v1137 = vsel %vm322, %v1107, 0
      %v1140 = vsel %vm322, %v1108, 0
      %v1143 = vsel %vm322, %v1109, 0
      %v1146 = vsel %vm322, %v1110, 0
      %v1149 = vsel %vm322, %v1111, 0
      %v1152 = vsel %vm322, %v1112, 0
      %v1155 = vsel %vm322, %v1113, 0
      %v1158 = vsel %vm322, %v1114, 0
      %v1161 = vsel %vm322, %v1115, 0
      %v1164 = vsel %vm322, %v1116, 0
      %v1167 = vsel %vm322, %v1117, 0
      %v1170 = vsel %vm322, %v1118, 0
      %v1173 = vsel %vm371, %v1123, 0
      %1175 = vmatprep.subr.bf16.mxu0 0
      %1176 = vmatpush1.bf16.msra.mxu0 %v1173
      %1177 = vmatprep.subr.bf16.mxu0 0
      %1178 = vmatpush1.bf16.msra.mxu0 0
      %1179 = vmatprep.subr.bf16.mxu0 0
      %1180 = vmatpush1.bf16.msra.mxu0 0
      %1181 = vmatprep.subr.bf16.mxu0 0
      %1182 = vmatpush1.bf16.msra.mxu0 0
      %1183 = vmatprep.subr.bf16.mxu0 0
      %1184 = vmatpush1.bf16.msra.mxu0 0
      %1185 = vmatprep.subr.bf16.mxu0 0
      %1186 = vmatpush1.bf16.msra.mxu0 0
      %1187 = vmatprep.subr.bf16.mxu0 0
      %1188 = vmatpush1.bf16.msra.mxu0 0
      %1189 = vmatprep.subr.bf16.mxu0 0
      %1190 = vmatpush1.bf16.msra.mxu0 0
      %1191 = vmatprep.subr.bf16.mxu0 0
      %1192 = vmatpush1.bf16.msra.mxu0 0
      %1193 = vmatprep.subr.bf16.mxu0 0
      %1194 = vmatpush1.bf16.msra.mxu0 0
      %1195 = vmatprep.subr.bf16.mxu0 0
      %1196 = vmatpush1.bf16.msra.mxu0 0
      %1197 = vmatprep.subr.bf16.mxu0 0
      %1198 = vmatpush1.bf16.msra.mxu0 0
      %1199 = vmatprep.subr.bf16.mxu0 0
      %1200 = vmatpush1.bf16.msra.mxu0 0
      %1201 = vmatprep.subr.bf16.mxu0 0
      %1202 = vmatpush1.bf16.msra.mxu0 0
      %1203 = vmatprep.subr.bf16.mxu0 0
      %1204 = vmatpush1.bf16.msra.mxu0 0
      %1205 = vmatprep.subr.bf16.mxu0 0
      %1206 = vmatpush1.bf16.msra.mxu0 0
      %1207 = vmatprep.mubr.bf16.mxu0 0
      %1208 = vmatmul.mubr.bf16.gmra.mrb[0].mxu0 %v1125
      %v1209 = vpop.f32.mrb[0].mxu0
      %v1210 = vadd.f32 0.0, %v1209
      %v1211 = vpop.f32.mrb[0].mxu0
      %v1212 = vpop.f32.mrb[0].mxu0
      %v1213 = vadd.f32 0.0, %v1212
      %v1214 = vpop.f32.mrb[0].mxu0
      %1215 = vmatprep.mubr.bf16.mxu0 0
      %1216 = vmatmul.mubr.bf16.gmra.mrb[0].mxu0 %v1128
      %v1217 = vpop.f32.mrb[0].mxu0
      %v1218 = vadd.f32 0.0, %v1217
      %v1219 = vpop.f32.mrb[0].mxu0
      %v1220 = vpop.f32.mrb[0].mxu0
      %v1221 = vadd.f32 0.0, %v1220
      %v1222 = vpop.f32.mrb[0].mxu0
      %1223 = vmatprep.mubr.bf16.mxu0 0
      %1224 = vmatmul.mubr.bf16.gmra.mrb[0].mxu0 %v1131
      %v1225 = vpop.f32.mrb[0].mxu0
      %v1226 = vadd.f32 0.0, %v1225
      %v1227 = vpop.f32.mrb[0].mxu0
      %v1228 = vpop.f32.mrb[0].mxu0
      %v1229 = vadd.f32 0.0, %v1228
      %v1230 = vpop.f32.mrb[0].mxu0
      %1231 = vmatprep.mubr.bf16.mxu0 0
      %1232 = vmatmul.mubr.bf16.gmra.mrb[0].mxu0 %v1134
      %v1233 = vpop.f32.mrb[0].mxu0
      %v1234 = vadd.f32 0.0, %v1233
      %v1235 = vpop.f32.mrb[0].mxu0
      %v1236 = vpop.f32.mrb[0].mxu0
      %v1237 = vadd.f32 0.0, %v1236
      %v1238 = vpop.f32.mrb[0].mxu0
      %1239 = vmatprep.mubr.bf16.mxu0 0
      %1240 = vmatmul.mubr.bf16.gmra.mrb[0].mxu0 %v1137
      %v1241 = vpop.f32.mrb[0].mxu0
      %v1242 = vadd.f32 0.0, %v1241
      %v1243 = vpop.f32.mrb[0].mxu0
      %v1244 = vpop.f32.mrb[0].mxu0
      %v1245 = vadd.f32 0.0, %v1244
      %v1246 = vpop.f32.mrb[0].mxu0
      %1247 = vmatprep.mubr.bf16.mxu0 0
      %1248 = vmatmul.mubr.bf16.gmra.mrb[0].mxu0 %v1140
      %v1249 = vpop.f32.mrb[0].mxu0
      %v1250 = vadd.f32 0.0, %v1249
      %v1251 = vpop.f32.mrb[0].mxu0
      %v1252 = vpop.f32.mrb[0].mxu0
      %v1253 = vadd.f32 0.0, %v1252
      %v1254 = vpop.f32.mrb[0].mxu0
      %1255 = vmatprep.mubr.bf16.mxu0 0
      %1256 = vmatmul.mubr.bf16.gmra.mrb[0].mxu0 %v1143
      %v1257 = vpop.f32.mrb[0].mxu0
      %v1258 = vadd.f32 0.0, %v1257
      %v1259 = vpop.f32.mrb[0].mxu0
      %v1260 = vpop.f32.mrb[0].mxu0
      %v1261 = vadd.f32 0.0, %v1260
      %v1262 = vpop.f32.mrb[0].mxu0
      %1263 = vmatprep.mubr.bf16.mxu0 0
      %1264 = vmatmul.mubr.bf16.gmra.mrb[0].mxu0 %v1146
      %v1265 = vpop.f32.mrb[0].mxu0
      %v1266 = vadd.f32 0.0, %v1265
      %v1267 = vpop.f32.mrb[0].mxu0
      %v1268 = vpop.f32.mrb[0].mxu0
      %v1269 = vadd.f32 0.0, %v1268
      %v1270 = vpop.f32.mrb[0].mxu0
      %1271 = vmatprep.mubr.bf16.mxu0 0
      %1272 = vmatmul.mubr.bf16.gmra.mrb[0].mxu0 %v1149
      %v1273 = vpop.f32.mrb[0].mxu0
      %v1274 = vadd.f32 0.0, %v1273
      %v1275 = vpop.f32.mrb[0].mxu0
      %v1276 = vpop.f32.mrb[0].mxu0
      %v1277 = vadd.f32 0.0, %v1276
      %v1278 = vpop.f32.mrb[0].mxu0
      %1279 = vmatprep.mubr.bf16.mxu0 0
      %1280 = vmatmul.mubr.bf16.gmra.mrb[0].mxu0 %v1152
      %v1281 = vpop.f32.mrb[0].mxu0
      %v1282 = vadd.f32 0.0, %v1281
      %v1283 = vpop.f32.mrb[0].mxu0
      %v1284 = vpop.f32.mrb[0].mxu0
      %v1285 = vadd.f32 0.0, %v1284
      %v1286 = vpop.f32.mrb[0].mxu0
      %1287 = vmatprep.mubr.bf16.mxu0 0
      %1288 = vmatmul.mubr.bf16.gmra.mrb[0].mxu0 %v1155
      %v1289 = vpop.f32.mrb[0].mxu0
      %v1290 = vadd.f32 0.0, %v1289
      %v1291 = vpop.f32.mrb[0].mxu0
      %v1292 = vpop.f32.mrb[0].mxu0
      %v1293 = vadd.f32 0.0, %v1292
      %v1294 = vpop.f32.mrb[0].mxu0
      %1295 = vmatprep.mubr.bf16.mxu0 0
      %1296 = vmatmul.mubr.bf16.gmra.mrb[0].mxu0 %v1158
      %v1297 = vpop.f32.mrb[0].mxu0
      %v1298 = vadd.f32 0.0, %v1297
      %v1299 = vpop.f32.mrb[0].mxu0
      %v1300 = vpop.f32.mrb[0].mxu0
      %v1301 = vadd.f32 0.0, %v1300
      %v1302 = vpop.f32.mrb[0].mxu0
      %1303 = vmatprep.mubr.bf16.mxu0 0
      %1304 = vmatmul.mubr.bf16.gmra.mrb[0].mxu0 %v1161
      %v1305 = vpop.f32.mrb[0].mxu0
      %v1306 = vadd.f32 0.0, %v1305
      %v1307 = vpop.f32.mrb[0].mxu0
      %v1308 = vpop.f32.mrb[0].mxu0
      %v1309 = vadd.f32 0.0, %v1308
      %v1310 = vpop.f32.mrb[0].mxu0
      %1311 = vmatprep.mubr.bf16.mxu0 0
      %1312 = vmatmul.mubr.bf16.gmra.mrb[0].mxu0 %v1164
      %v1313 = vpop.f32.mrb[0].mxu0
      %v1314 = vadd.f32 0.0, %v1313
      %v1315 = vpop.f32.mrb[0].mxu0
      %v1316 = vpop.f32.mrb[0].mxu0
      %v1317 = vadd.f32 0.0, %v1316
      %v1318 = vpop.f32.mrb[0].mxu0
      %1319 = vmatprep.mubr.bf16.mxu0 0
      %1320 = vmatmul.mubr.bf16.gmra.mrb[0].mxu0 %v1167
      %v1321 = vpop.f32.mrb[0].mxu0
      %v1322 = vadd.f32 0.0, %v1321
      %v1323 = vpop.f32.mrb[0].mxu0
      %v1324 = vpop.f32.mrb[0].mxu0
      %v1325 = vadd.f32 0.0, %v1324
      %v1326 = vpop.f32.mrb[0].mxu0
      %1327 = vmatprep.mubr.bf16.mxu0 0
      %1328 = vmatmul.mubr.bf16.gmra.mrb[0].mxu0 %v1170
      %v1329 = vpop.f32.mrb[0].mxu0
      %v1330 = vadd.f32 0.0, %v1329
      %v1331 = vpop.f32.mrb[0].mxu0
      %v1332 = vpop.f32.mrb[0].mxu0
      %v1333 = vadd.f32 0.0, %v1332
      %v1334 = vpop.f32.mrb[0].mxu0
      %1335 = vdwg.mxu0
      %v1336 = vld [vmem:[#allocation2] sm:$0xff]
      %v1337 = vld [vmem:[#allocation2 + $0x8] sm:$0xff]
      %v1338 = vld [vmem:[#allocation2 + $0x10] sm:$0xff]
      %v1339 = vld [vmem:[#allocation2 + $0x18] sm:$0xff]
      %v1340 = vld [vmem:[#allocation2 + $0x20] sm:$0xff]
      %v1341 = vld [vmem:[#allocation2 + $0x28] sm:$0xff]
      %v1342 = vld [vmem:[#allocation2 + $0x30] sm:$0xff]
      %v1343 = vld [vmem:[#allocation2 + $0x38] sm:$0xff]
      %v1344 = vld [vmem:[#allocation2 + $0x40] sm:$0xff]
      %v1345 = vld [vmem:[#allocation2 + $0x48] sm:$0xff]
      %v1346 = vld [vmem:[#allocation2 + $0x50] sm:$0xff]
      %v1347 = vld [vmem:[#allocation2 + $0x58] sm:$0xff]
      %v1348 = vld [vmem:[#allocation2 + $0x60] sm:$0xff]
      %v1349 = vld [vmem:[#allocation2 + $0x68] sm:$0xff]
      %v1350 = vld [vmem:[#allocation2 + $0x70] sm:$0xff]
      %v1351 = vld [vmem:[#allocation2 + $0x78] sm:$0xff]
      %v1352 = vld [vmem:[#allocation2 + $0x80] sm:$0xff]
      %v1353 = vld [vmem:[#allocation2 + $0x88] sm:$0xff]
      %v1354 = vld [vmem:[#allocation2 + $0x90] sm:$0xff]
      %v1355 = vld [vmem:[#allocation2 + $0x98] sm:$0xff]
      %v1356 = vld [vmem:[#allocation2 + $0xa0] sm:$0xff]
      %v1357 = vld [vmem:[#allocation2 + $0xa8] sm:$0xff]
      %v1358 = vld [vmem:[#allocation2 + $0xb0] sm:$0xff]
      %v1359 = vld [vmem:[#allocation2 + $0xb8] sm:$0xff]
      %v1360 = vld [vmem:[#allocation2 + $0xc0] sm:$0xff]
      %v1361 = vld [vmem:[#allocation2 + $0xc8] sm:$0xff]
      %v1362 = vld [vmem:[#allocation2 + $0xd0] sm:$0xff]
      %v1363 = vld [vmem:[#allocation2 + $0xd8] sm:$0xff]
      %v1364 = vld [vmem:[#allocation2 + $0xe0] sm:$0xff]
      %v1365 = vld [vmem:[#allocation2 + $0xe8] sm:$0xff]
      %v1366 = vld [vmem:[#allocation2 + $0xf0] sm:$0xff]
      %v1367 = vld [vmem:[#allocation2 + $0xf8] sm:$0xff]
      %v1368 = vadd.f32 %v1336, %v1210
      %v1369 = vadd.f32 %v1337, %v1213
      %v1370 = vadd.f32 %v1338, %v1218
      %v1371 = vadd.f32 %v1339, %v1221
      %v1372 = vadd.f32 %v1340, %v1226
      %v1373 = vadd.f32 %v1341, %v1229
      %v1374 = vadd.f32 %v1342, %v1234
      %v1375 = vadd.f32 %v1343, %v1237
      %v1376 = vadd.f32 %v1344, %v1242
      %v1377 = vadd.f32 %v1345, %v1245
      %v1378 = vadd.f32 %v1346, %v1250
      %v1379 = vadd.f32 %v1347, %v1253
      %v1380 = vadd.f32 %v1348, %v1258
      %v1381 = vadd.f32 %v1349, %v1261
      %v1382 = vadd.f32 %v1350, %v1266
      %v1383 = vadd.f32 %v1351, %v1269
      %v1384 = vadd.f32 %v1352, %v1274
      %v1385 = vadd.f32 %v1353, %v1277
      %v1386 = vadd.f32 %v1354, %v1282
      %v1387 = vadd.f32 %v1355, %v1285
      %v1388 = vadd.f32 %v1356, %v1290
      %v1389 = vadd.f32 %v1357, %v1293
      %v1390 = vadd.f32 %v1358, %v1298
      %v1391 = vadd.f32 %v1359, %v1301
      %v1392 = vadd.f32 %v1360, %v1306
      %v1393 = vadd.f32 %v1361, %v1309
      %v1394 = vadd.f32 %v1362, %v1314
      %v1395 = vadd.f32 %v1363, %v1317
      %v1396 = vadd.f32 %v1364, %v1322
      %v1397 = vadd.f32 %v1365, %v1325
      %v1398 = vadd.f32 %v1366, %v1330
      %v1399 = vadd.f32 %v1367, %v1333
      %1400 = vst [vmem:[#allocation2] sm:$0xff] %v1368
      %1401 = vst [vmem:[#allocation2 + $0x8] sm:$0xff] %v1369
      %1402 = vst [vmem:[#allocation2 + $0x10] sm:$0xff] %v1370
      %1403 = vst [vmem:[#allocation2 + $0x18] sm:$0xff] %v1371
      %1404 = vst [vmem:[#allocation2 + $0x20] sm:$0xff] %v1372
      %1405 = vst [vmem:[#allocation2 + $0x28] sm:$0xff] %v1373
      %1406 = vst [vmem:[#allocation2 + $0x30] sm:$0xff] %v1374
      %1407 = vst [vmem:[#allocation2 + $0x38] sm:$0xff] %v1375
      %1408 = vst [vmem:[#allocation2 + $0x40] sm:$0xff] %v1376
      %1409 = vst [vmem:[#allocation2 + $0x48] sm:$0xff] %v1377
      %1410 = vst [vmem:[#allocation2 + $0x50] sm:$0xff] %v1378
      %1411 = vst [vmem:[#allocation2 + $0x58] sm:$0xff] %v1379
      %1412 = vst [vmem:[#allocation2 + $0x60] sm:$0xff] %v1380
      %1413 = vst [vmem:[#allocation2 + $0x68] sm:$0xff] %v1381
      %1414 = vst [vmem:[#allocation2 + $0x70] sm:$0xff] %v1382
      %1415 = vst [vmem:[#allocation2 + $0x78] sm:$0xff] %v1383
      %1416 = vst [vmem:[#allocation2 + $0x80] sm:$0xff] %v1384
      %1417 = vst [vmem:[#allocation2 + $0x88] sm:$0xff] %v1385
      %1418 = vst [vmem:[#allocation2 + $0x90] sm:$0xff] %v1386
      %1419 = vst [vmem:[#allocation2 + $0x98] sm:$0xff] %v1387
      %1420 = vst [vmem:[#allocation2 + $0xa0] sm:$0xff] %v1388
      %1421 = vst [vmem:[#allocation2 + $0xa8] sm:$0xff] %v1389
      %1422 = vst [vmem:[#allocation2 + $0xb0] sm:$0xff] %v1390
      %1423 = vst [vmem:[#allocation2 + $0xb8] sm:$0xff] %v1391
      %1424 = vst [vmem:[#allocation2 + $0xc0] sm:$0xff] %v1392
      %1425 = vst [vmem:[#allocation2 + $0xc8] sm:$0xff] %v1393
      %1426 = vst [vmem:[#allocation2 + $0xd0] sm:$0xff] %v1394
      %1427 = vst [vmem:[#allocation2 + $0xd8] sm:$0xff] %v1395
      %1428 = vst [vmem:[#allocation2 + $0xe0] sm:$0xff] %v1396
      %1429 = vst [vmem:[#allocation2 + $0xe8] sm:$0xff] %v1397
      %1430 = vst [vmem:[#allocation2 + $0xf0] sm:$0xff] %v1398
      %1431 = vst [vmem:[#allocation2 + $0xf8] sm:$0xff] %v1399
      %v1432 = vld [vmem:[#allocation2] sm:$0xff]
      %v1433 = vld [vmem:[#allocation2 + $0x8] sm:$0xff]
      %v1434 = vld [vmem:[#allocation2 + $0x10] sm:$0xff]
      %v1435 = vld [vmem:[#allocation2 + $0x18] sm:$0xff]
      %v1436 = vld [vmem:[#allocation2 + $0x20] sm:$0xff]
      %v1437 = vld [vmem:[#allocation2 + $0x28] sm:$0xff]
      %v1438 = vld [vmem:[#allocation2 + $0x30] sm:$0xff]
      %v1439 = vld [vmem:[#allocation2 + $0x38] sm:$0xff]
      %v1440 = vld [vmem:[#allocation2 + $0x40] sm:$0xff]
      %v1441 = vld [vmem:[#allocation2 + $0x48] sm:$0xff]
      %v1442 = vld [vmem:[#allocation2 + $0x50] sm:$0xff]
      %v1443 = vld [vmem:[#allocation2 + $0x58] sm:$0xff]
      %v1444 = vld [vmem:[#allocation2 + $0x60] sm:$0xff]
      %v1445 = vld [vmem:[#allocation2 + $0x68] sm:$0xff]
      %v1446 = vld [vmem:[#allocation2 + $0x70] sm:$0xff]
      %v1447 = vld [vmem:[#allocation2 + $0x78] sm:$0xff]
      %v1448 = vld [vmem:[#allocation2 + $0x80] sm:$0xff]
      %v1449 = vld [vmem:[#allocation2 + $0x88] sm:$0xff]
      %v1450 = vld [vmem:[#allocation2 + $0x90] sm:$0xff]
      %v1451 = vld [vmem:[#allocation2 + $0x98] sm:$0xff]
      %v1452 = vld [vmem:[#allocation2 + $0xa0] sm:$0xff]
      %v1453 = vld [vmem:[#allocation2 + $0xa8] sm:$0xff]
      %v1454 = vld [vmem:[#allocation2 + $0xb0] sm:$0xff]
      %v1455 = vld [vmem:[#allocation2 + $0xb8] sm:$0xff]
      %v1456 = vld [vmem:[#allocation2 + $0xc0] sm:$0xff]
      %v1457 = vld [vmem:[#allocation2 + $0xc8] sm:$0xff]
      %v1458 = vld [vmem:[#allocation2 + $0xd0] sm:$0xff]
      %v1459 = vld [vmem:[#allocation2 + $0xd8] sm:$0xff]
      %v1460 = vld [vmem:[#allocation2 + $0xe0] sm:$0xff]
      %v1461 = vld [vmem:[#allocation2 + $0xe8] sm:$0xff]
      %v1462 = vld [vmem:[#allocation2 + $0xf0] sm:$0xff]
      %v1463 = vld [vmem:[#allocation2 + $0xf8] sm:$0xff]
      %v1464 = vld [vmem:[%s187] sm:$0xff]
      %v1465 = vadd.f32 %v1432, %v1433
      %v1466 = vadd.f32 %v1465, %v1434
      %v1467 = vadd.f32 %v1466, %v1435
      %v1468 = vadd.f32 %v1467, %v1436
      %v1469 = vadd.f32 %v1468, %v1437
      %v1470 = vadd.f32 %v1469, %v1438
      %v1471 = vadd.f32 %v1470, %v1439
      %v1472 = vadd.f32 %v1471, %v1440
      %v1473 = vadd.f32 %v1472, %v1441
      %v1474 = vadd.f32 %v1473, %v1442
      %v1475 = vadd.f32 %v1474, %v1443
      %v1476 = vadd.f32 %v1475, %v1444
      %v1477 = vadd.f32 %v1476, %v1445
      %v1478 = vadd.f32 %v1477, %v1446
      %v1479 = vadd.f32 %v1478, %v1447
      %v1480 = vadd.f32 %v1479, %v1448
      %v1481 = vadd.f32 %v1480, %v1449
      %v1482 = vadd.f32 %v1481, %v1450
      %v1483 = vadd.f32 %v1482, %v1451
      %v1484 = vadd.f32 %v1483, %v1452
      %v1485 = vadd.f32 %v1484, %v1453
      %v1486 = vadd.f32 %v1485, %v1454
      %v1487 = vadd.f32 %v1486, %v1455
      %v1488 = vadd.f32 %v1487, %v1456
      %v1489 = vadd.f32 %v1488, %v1457
      %v1490 = vadd.f32 %v1489, %v1458
      %v1491 = vadd.f32 %v1490, %v1459
      %v1492 = vadd.f32 %v1491, %v1460
      %v1493 = vadd.f32 %v1492, %v1461
      %v1494 = vadd.f32 %v1493, %v1462
      %v1495 = vadd.f32 %v1494, %v1463
      %v1496 = vadd.f32 %v1464, %v1495
      %1497 = vst [vmem:[%s187] sm:$0xff] %v1496
      %v1498 = vld [vmem:[%s191] sm:$0xff]
      %v1499 = vmul.f32 %v1432, %v1432
      %v1500 = vmul.f32 %v1433, %v1433
      %v1501 = vmul.f32 %v1434, %v1434
      %v1502 = vmul.f32 %v1435, %v1435
      %v1503 = vmul.f32 %v1436, %v1436
      %v1504 = vmul.f32 %v1437, %v1437
      %v1505 = vmul.f32 %v1438, %v1438
      %v1506 = vmul.f32 %v1439, %v1439
      %v1507 = vmul.f32 %v1440, %v1440
      %v1508 = vmul.f32 %v1441, %v1441
      %v1509 = vmul.f32 %v1442, %v1442
      %v1510 = vmul.f32 %v1443, %v1443
      %v1511 = vmul.f32 %v1444, %v1444
      %v1512 = vmul.f32 %v1445, %v1445
      %v1513 = vmul.f32 %v1446, %v1446
      %v1514 = vmul.f32 %v1447, %v1447
      %v1515 = vmul.f32 %v1448, %v1448
      %v1516 = vmul.f32 %v1449, %v1449
      %v1517 = vmul.f32 %v1450, %v1450
      %v1518 = vmul.f32 %v1451, %v1451
      %v1519 = vmul.f32 %v1452, %v1452
      %v1520 = vmul.f32 %v1453, %v1453
      %v1521 = vmul.f32 %v1454, %v1454
      %v1522 = vmul.f32 %v1455, %v1455
      %v1523 = vmul.f32 %v1456, %v1456
      %v1524 = vmul.f32 %v1457, %v1457
      %v1525 = vmul.f32 %v1458, %v1458
      %v1526 = vmul.f32 %v1459, %v1459
      %v1527 = vmul.f32 %v1460, %v1460
      %v1528 = vmul.f32 %v1461, %v1461
      %v1529 = vmul.f32 %v1462, %v1462
      %v1530 = vmul.f32 %v1463, %v1463
      %v1531 = vadd.f32 %v1499, %v1500
      %v1532 = vadd.f32 %v1531, %v1501
      %v1533 = vadd.f32 %v1532, %v1502
      %v1534 = vadd.f32 %v1533, %v1503
      %v1535 = vadd.f32 %v1534, %v1504
      %v1536 = vadd.f32 %v1535, %v1505
      %v1537 = vadd.f32 %v1536, %v1506
      %v1538 = vadd.f32 %v1537, %v1507
      %v1539 = vadd.f32 %v1538, %v1508
      %v1540 = vadd.f32 %v1539, %v1509
      %v1541 = vadd.f32 %v1540, %v1510
      %v1542 = vadd.f32 %v1541, %v1511
      %v1543 = vadd.f32 %v1542, %v1512
      %v1544 = vadd.f32 %v1543, %v1513
      %v1545 = vadd.f32 %v1544, %v1514
      %v1546 = vadd.f32 %v1545, %v1515
      %v1547 = vadd.f32 %v1546, %v1516
      %v1548 = vadd.f32 %v1547, %v1517
      %v1549 = vadd.f32 %v1548, %v1518
      %v1550 = vadd.f32 %v1549, %v1519
      %v1551 = vadd.f32 %v1550, %v1520
      %v1552 = vadd.f32 %v1551, %v1521
      %v1553 = vadd.f32 %v1552, %v1522
      %v1554 = vadd.f32 %v1553, %v1523
      %v1555 = vadd.f32 %v1554, %v1524
      %v1556 = vadd.f32 %v1555, %v1525
      %v1557 = vadd.f32 %v1556, %v1526
      %v1558 = vadd.f32 %v1557, %v1527
      %v1559 = vadd.f32 %v1558, %v1528
      %v1560 = vadd.f32 %v1559, %v1529
      %v1561 = vadd.f32 %v1560, %v1530
      %v1562 = vadd.f32 %v1498, %v1561
      %1563 = vst [vmem:[%s191] sm:$0xff] %v1562
      %p1564 = scmp.lt.s32.totalorder %s19, 1
      %s1565 = scalar_select %p1564, %s19, 1
      %s1566 = smul.addr %s1565, 8
      %s1567 = scalar_lea.vmem %s2, %s1566
      %p1568 = scmp.lt.s32.totalorder %s19, 1
      %s1569 = scalar_select %p1568, %s19, 1
      %s1570 = smul.addr %s1569, 8
      %s1571 = scalar_lea.vmem %s3, %s1570
      // Predicated region
      $region33: #{down_block2d_forward.2} parent=27 // pred_check
        %p1572 = pneg %p92
      $region34: #{down_block2d_forward.2} parent=27 // pred_check_branch
        %1574 = sbr.rel (%p1572) target = $region36
      $region35: #{down_block2d_forward.2} parent=27 // pred_region
        _
      $region36: #{down_block2d_forward.2} parent=27 // pred_fallthru
        _
      // Predicated region
      $region37: #{down_block2d_forward.2} parent=27 // pred_check
        %p1575 = pneg %p118
      $region38: #{down_block2d_forward.2} parent=27 // pred_check_branch
        %1577 = sbr.rel (%p1575) target = $region40
      $region39: #{down_block2d_forward.2} parent=27 // pred_region
        _
      $region40: #{down_block2d_forward.2} parent=27 // pred_fallthru
        _
    $region28: #{down_block2d_forward.2} parent=5 // pred_fallthru
      _
    %p1578 = scmp.le.s32.totalorder 2, %s10
    // Predicated region
    $region41: #{down_block2d_forward.2} parent=5 // pred_check
      %p1579 = pneg %p1578
    $region42: #{down_block2d_forward.2} parent=5 // pred_check_branch
      %1581 = sbr.rel (%p1579) target = $region44
    $region43: #{down_block2d_forward.2} parent=5 // pred_region
      %s1582 = ssub.s32 %s10, 2
      // Predicated region
      $region45: #{down_block2d_forward.2} parent=43 // pred_check
        %p1583 = pneg %p98
      $region46: #{down_block2d_forward.2} parent=43 // pred_check_branch
        %1585 = sbr.rel (%p1583) target = $region48
      $region47: #{down_block2d_forward.2} parent=43 // pred_region
        %p1586 = scmp.lt.s32.totalorder %s21, 1
        %s1587 = scalar_select %p1586, %s21, 1
        %s1588 = smul.addr %s1587, 8
        %s1589 = scalar_lea.vmem %s2, %s1588
      $region48: #{down_block2d_forward.2} parent=43 // pred_fallthru
        _
      // Predicated region
      $region49: #{down_block2d_forward.2} parent=43 // pred_check
        %p1590 = pneg %p124
      $region50: #{down_block2d_forward.2} parent=43 // pred_check_branch
        %1592 = sbr.rel (%p1590) target = $region52
      $region51: #{down_block2d_forward.2} parent=43 // pred_region
        %p1593 = scmp.lt.s32.totalorder %s21, 1
        %s1594 = scalar_select %p1593, %s21, 1
        %s1595 = smul.addr %s1594, 8
        %s1596 = scalar_lea.vmem %s3, %s1595
      $region52: #{down_block2d_forward.2} parent=43 // pred_fallthru
        _
    $region44: #{down_block2d_forward.2} parent=5 // pred_fallthru
      _
  $region6: #{down_block2d_forward.2} parent=0 // loop_footer
    %s14 = sadd.s32 1, %s10
  $region7: #{down_block2d_forward.2} parent=0 // loop_footer_branch
    %9 = sbr.rel target = $region3
  $region8: #{down_block2d_forward.2} parent=0 // loop_exit
    _

// kernel: down_block2d_forward.3
$region0: #{down_block2d_forward.3}
  #allocation0 [shape = 'u32[]', space=smem, size = 0x4, offset = 0x4, fixed_abs, tag = 'smem constant byte address 0x4 - core index']
  #allocation1 [shape = 'u32[144,128]{1,0:T(1,128)}', space=vmem, size = 0x12000, scoped, tag = 'internal scratch']
  #allocation2 [shape = 'f32[256,128]{1,0:T(8,128)}', space=vmem, size = 0x20000, scoped, tag = 'scratch operand']
  %s0 = inlined_call_operand.vmem [shape: bf16[2,18,16,12], index: 0, kind: input, shape index: {}]
  %s1 = inlined_call_operand.vmem [shape: bf16[3,12,128], index: 1, kind: input, shape index: {}]
  %s2 = inlined_call_operand.vmem [shape: f32[1,128], index: 2, kind: input, shape index: {}]
  %s3 = inlined_call_operand.vmem [shape: f32[1,128], index: 3, kind: input, shape index: {}]
  %s4 = inlined_call_operand.vmem [shape: f32[2,8,8,128], index: 4, kind: output, shape index: {}]
  %s5 = sld [smem:[#allocation0]]
  $region49: #{down_block2d_forward.3} parent=0
    _
  %s7 = ssub.s32 1, %s5
  %s8 = scalar_select 0, %s7, %s5
  loop: start=0, step=1, limit=4
  $region2: #{down_block2d_forward.3} parent=0 // loop_pre_header
    _
  $region3: #{down_block2d_forward.3} parent=0 // loop_header
    %s10 = sphi 0, %s14
    %p11 = scmp.ge.s32.totalorder %s10, 4
    %s17 = sphi 0, %s29
    %s18 = sphi 0, %s25
    %s19 = sphi 0, %s17
    %s20 = sphi 0, %s18
    %s21 = sphi 0, %s19
    %s22 = sphi 0, %s20
    %s32 = sphi 0, %s34
    %s35 = sphi 0, %s32
    %s36 = sphi 0, %s35
    %s52 = sphi 0, %s36
    %s56 = sphi 0, %s56
    %s58 = sphi 0, %s56
    %s59 = sphi 0, %s58
    %s73 = sphi 0, %s59
    %s77 = sphi 0, %s77
    %s79 = sphi 0, %s77
    %s80 = sphi 0, %s79
    %s94 = sphi 0, %s80
    %s98 = sphi 0, %s98
    %s100 = sphi 0, %s98
    %s101 = sphi 0, %s100
    %s115 = sphi 0, %s101
    %s123 = sphi 0, %s125
    %s126 = sphi 0, %s123
    %s127 = sphi 0, %s126
    %s143 = sphi 0, %s127
  $region4: #{down_block2d_forward.3} parent=0 // loop_header_branch
    %13 = sbr.rel (%p11) target = $region8
  $region5: #{down_block2d_forward.3} parent=0 // loop_body
    %s15 = ssub.s32 %s10, 1
    %s16 = ssub.s32 %s10, 2
    %s23 = sadd.s32 1, %s18
    %p24 = scmp.ge.s32.totalorder %s23, 1
    %s25 = scalar_select %p24, 0, %s23
    %s26 = sadd.s32 1, %s17
    %s27 = scalar_select %p24, %s26, %s17
    %p28 = scmp.ge.s32.totalorder %s27, 2
    %s29 = scalar_select %p28, 0, %s27
    %s30 = ssub.s32 %s17, %s29
    %p31 = scmp.eq.s32.totalorder %s30, 0
    %s33 = sadd.s32 %s32, 1
    %s34 = scalar_select %p31, %s32, %s33
    %p37 = pneg %p31
    %p38 = scmp.eq.s32.totalorder %s10, 1
    %p39 = por %p37, %p38
    %p40 = scmp.ne.s32.totalorder %s32, %s35
    %p41 = scmp.eq.s32.totalorder %s10, 0
    %p42 = por %p40, %p41
    %p43 = scmp.ne.s32.totalorder %s32, %s35
    %p44 = scmp.eq.s32.totalorder %s15, 1
    %p45 = por %p43, %p44
    %p46 = scmp.ne.s32.totalorder %s35, %s36
    %p47 = scmp.eq.s32.totalorder %s15, 0
    %p48 = por %p46, %p47
    %p49 = scmp.ne.s32.totalorder %s35, %s36
    %p50 = scmp.eq.s32.totalorder %s16, 1
    %p51 = por %p49, %p50
    %p53 = scmp.ne.s32.totalorder %s36, %s52
    %p54 = scmp.eq.s32.totalorder %s16, 0
    %p55 = por %p53, %p54
    %s57 = sadd.s32 %s56, 1
    %p60 = scmp.eq.s32.totalorder %s10, 1
    %p61 = scmp.ne.s32.totalorder %s56, %s58
    %p62 = scmp.eq.s32.totalorder %s10, 0
    %p63 = por %p61, %p62
    %p64 = scmp.ne.s32.totalorder %s56, %s58
    %p65 = scmp.eq.s32.totalorder %s15, 1
    %p66 = por %p64, %p65
    %p67 = scmp.ne.s32.totalorder %s58, %s59
    %p68 = scmp.eq.s32.totalorder %s15, 0
    %p69 = por %p67, %p68
    %p70 = scmp.ne.s32.totalorder %s58, %s59
    %p71 = scmp.eq.s32.totalorder %s16, 1
    %p72 = por %p70, %p71
    %p74 = scmp.ne.s32.totalorder %s59, %s73
    %p75 = scmp.eq.s32.totalorder %s16, 0
    %p76 = por %p74, %p75
    %s78 = sadd.s32 %s77, 1
    %p81 = scmp.eq.s32.totalorder %s10, 1
    %p82 = scmp.ne.s32.totalorder %s77, %s79
    %p83 = scmp.eq.s32.totalorder %s10, 0
    %p84 = por %p82, %p83
    %p85 = scmp.ne.s32.totalorder %s77, %s79
    %p86 = scmp.eq.s32.totalorder %s15, 1
    %p87 = por %p85, %p86
    %p88 = scmp.ne.s32.totalorder %s79, %s80
    %p89 = scmp.eq.s32.totalorder %s15, 0
    %p90 = por %p88, %p89
    %p91 = scmp.ne.s32.totalorder %s79, %s80
    %p92 = scmp.eq.s32.totalorder %s16, 1
    %p93 = por %p91, %p92
    %p95 = scmp.ne.s32.totalorder %s80, %s94
    %p96 = scmp.eq.s32.totalorder %s16, 0
    %p97 = por %p95, %p96
    %s99 = sadd.s32 %s98, 1
    %p102 = scmp.eq.s32.totalorder %s10, 1
    %p103 = scmp.ne.s32.totalorder %s98, %s100
    %p104 = scmp.eq.s32.totalorder %s10, 0
    %p105 = por %p103, %p104
    %p106 = scmp.ne.s32.totalorder %s98, %s100
    %p107 = scmp.eq.s32.totalorder %s15, 1
    %p108 = por %p106, %p107
    %p109 = scmp.ne.s32.totalorder %s100, %s101
    %p110 = scmp.eq.s32.totalorder %s15, 0
    %p111 = por %p109, %p110
    %p112 = scmp.ne.s32.totalorder %s100, %s101
    %p113 = scmp.eq.s32.totalorder %s16, 1
    %p114 = por %p112, %p113
    %p116 = scmp.ne.s32.totalorder %s101, %s115
    %p117 = scmp.eq.s32.totalorder %s16, 0
    %p118 = por %p116, %p117
    %s119 = ssub.s32 %s17, %s29
    %s120 = ssub.s32 %s18, %s25
    %s121 = sor.u32 %s119, %s120
    %p122 = scmp.eq.s32.totalorder %s121, 0
    %s124 = sadd.s32 %s123, 1
    %s125 = scalar_select %p122, %s123, %s124
    %p128 = pneg %p122
    %p129 = scmp.eq.s32.totalorder %s10, 1
    %p130 = por %p128, %p129
    %p131 = scmp.ne.s32.totalorder %s123, %s126
    %p132 = scmp.eq.s32.totalorder %s10, 0
    %p133 = por %p131, %p132
    %p134 = scmp.ne.s32.totalorder %s123, %s126
    %p135 = scmp.eq.s32.totalorder %s15, 1
    %p136 = por %p134, %p135
    %p137 = scmp.ne.s32.totalorder %s126, %s127
    %p138 = scmp.eq.s32.totalorder %s15, 0
    %p139 = por %p137, %p138
    %p140 = scmp.ne.s32.totalorder %s126, %s127
    %p141 = scmp.eq.s32.totalorder %s16, 1
    %p142 = por %p140, %p141
    %p144 = scmp.ne.s32.totalorder %s127, %s143
    %p145 = scmp.eq.s32.totalorder %s16, 0
    %p146 = por %p144, %p145
    %p147 = scmp.le.s32.totalorder 1, %s10
    %p148 = scmp.lt.s32.totalorder %s10, 3
    %p149 = pnand %p147, %p148
    %p150 = pneg %p149
    // Predicated region
    $region9: #{down_block2d_forward.3} parent=5 // pred_check
      _
    $region10: #{down_block2d_forward.3} parent=5 // pred_check_branch
      %152 = sbr.rel (%p149) target = $region12
    $region11: #{down_block2d_forward.3} parent=5 // pred_region
      %s153 = ssub.s32 %s10, 1
      // Predicated region
      $region13: #{down_block2d_forward.3} parent=11 // pred_check
        %p154 = pneg %p69
      $region14: #{down_block2d_forward.3} parent=11 // pred_check_branch
        %156 = sbr.rel (%p154) target = $region16
      $region15: #{down_block2d_forward.3} parent=11 // pred_region
        _
      $region16: #{down_block2d_forward.3} parent=11 // pred_fallthru
        _
      // Predicated region
      $region17: #{down_block2d_forward.3} parent=11 // pred_check
        %p157 = pneg %p90
      $region18: #{down_block2d_forward.3} parent=11 // pred_check_branch
        %159 = sbr.rel (%p157) target = $region20
      $region19: #{down_block2d_forward.3} parent=11 // pred_region
        _
      $region20: #{down_block2d_forward.3} parent=11 // pred_fallthru
        _
      // Predicated region
      $region21: #{down_block2d_forward.3} parent=11 // pred_check
        %p160 = pneg %p111
      $region22: #{down_block2d_forward.3} parent=11 // pred_check_branch
        %162 = sbr.rel (%p160) target = $region24
      $region23: #{down_block2d_forward.3} parent=11 // pred_region
        _
      $region24: #{down_block2d_forward.3} parent=11 // pred_fallthru
        _
    $region12: #{down_block2d_forward.3} parent=5 // pred_fallthru
      _
    %p163 = scmp.lt.s32.totalorder %s10, 2
    // Predicated region
    $region25: #{down_block2d_forward.3} parent=5 // pred_check
      %p164 = pneg %p163
    $region26: #{down_block2d_forward.3} parent=5 // pred_check_branch
      %166 = sbr.rel (%p164) target = $region28
    $region27: #{down_block2d_forward.3} parent=5 // pred_region
      // Predicated region
      $region29: #{down_block2d_forward.3} parent=27 // pred_check
        %p167 = pneg %p42
      $region30: #{down_block2d_forward.3} parent=27 // pred_check_branch
        %169 = sbr.rel (%p167) target = $region32
      $region31: #{down_block2d_forward.3} parent=27 // pred_region
        %p170 = scmp.lt.s32.totalorder %s17, 1
        %s171 = scalar_select %p170, %s17, 1
        %s172 = smul.addr %s171, 36
        %s173 = smul.addr %s172, 4
        %s174 = scalar_lea.vmem %s0, %s173
      $region32: #{down_block2d_forward.3} parent=27 // pred_fallthru
        _
    $region28: #{down_block2d_forward.3} parent=5 // pred_fallthru
      _
    %p175 = scmp.le.s32.totalorder 1, %s10
    %p176 = scmp.lt.s32.totalorder %s10, 3
    %p177 = pnand %p175, %p176
    %p178 = pneg %p177
    // Predicated region
    $region33: #{down_block2d_forward.3} parent=5 // pred_check
      _
    $region34: #{down_block2d_forward.3} parent=5 // pred_check_branch
      %180 = sbr.rel (%p177) target = $region36
    $region35: #{down_block2d_forward.3} parent=5 // pred_region
      %s181 = ssub.s32 %s10, 1
      %p182 = scmp.lt.s32.totalorder %s19, 1
      %s183 = scalar_select %p182, %s19, 1
      %s184 = smul.addr %s183, 36
      %s185 = smul.addr %s184, 4
      %s186 = scalar_lea.vmem %s0, %s185
      %p187 = pneg %p48
      %p188 = pneg %p45
      %p189 = pneg %p69
      %p190 = pneg %p66
      %p191 = pneg %p90
      %p192 = pneg %p87
      %p193 = pneg %p111
      %p194 = pneg %p108
      %p195 = pneg %p139
      %p196 = pneg %p136
      %s197 = smul.u32 8, %s20
      %p198 = scmp.lt.s32.totalorder %s19, 1
      %s199 = scalar_select %p198, %s19, 1
      %p200 = scmp.lt.s32.totalorder %s197, 7
      %s201 = scalar_select %p200, %s197, 7
      %s202 = smul.addr %s199, 8
      %s203 = sadd.s32 %s201, %s202
      %s204 = smul.addr %s203, 8
      %s205 = scalar_lea.vmem %s4, %s204
      %p206 = scmp.lt.s32.totalorder %s19, 1
      %s207 = scalar_select %p206, %s19, 1
      %s208 = smul.addr %s207, 36
      %s209 = smul.addr %s208, 4
      %s210 = scalar_lea.vmem %s0, %s209
      %s211 = smul.u32 8, %s20
      %p212 = scmp.lt.s32.totalorder %s19, 1
      %s213 = scalar_select %p212, %s19, 1
      %p214 = scmp.lt.s32.totalorder %s211, 7
      %s215 = scalar_select %p214, %s211, 7
      %s216 = smul.addr %s213, 8
      %s217 = sadd.s32 %s215, %s216
      %s218 = smul.addr %s217, 8
      %s219 = scalar_lea.vmem %s4, %s218
      %s220 = smul.u32 8, %s20
      %s222 = smul.u32 %s20, 16
      %s223 = smul.u32 %s222, 2
      %s224 = smul.addr %s223, 4
      %s225 = scalar_lea.vmem %s210, %s224
      %v226 = vld [vmem:[%s225] sm:$0xf]
      %v227 = vld [vmem:[%s225 + $0x4] sm:$0xf]
      %v228 = vld [vmem:[%s225 + $0x8] sm:$0xf]
      %v229 = vld [vmem:[%s225 + $0xc] sm:$0xf]
      %v230 = vld [vmem:[%s225 + $0x10] sm:$0xf]
      %v231 = vld [vmem:[%s225 + $0x14] sm:$0xf]
      %v232 = vld [vmem:[%s225 + $0x18] sm:$0xf]
      %v233 = vld [vmem:[%s225 + $0x1c] sm:$0xf]
      %v234 = vld [vmem:[%s225 + $0x20] sm:$0xf]
      %v235 = vld [vmem:[%s225 + $0x24] sm:$0xf]
      %v236 = vld [vmem:[%s225 + $0x28] sm:$0xf]
      %v237 = vld [vmem:[%s225 + $0x2c] sm:$0xf]
      %v238 = vld [vmem:[%s225 + $0x30] sm:$0xf]
      %v239 = vld [vmem:[%s225 + $0x34] sm:$0xf]
      %v240 = vld [vmem:[%s225 + $0x38] sm:$0xf]
      %v241 = vld [vmem:[%s225 + $0x3c] sm:$0xf]
      %v242 = vld [vmem:[%s225 + $0x40] sm:$0xf]
      %v243 = vld [vmem:[%s225 + $0x44] sm:$0xf]
      %v244 = vld [vmem:[%s225 + $0x48] sm:$0xf]
      %v245 = vld [vmem:[%s225 + $0x4c] sm:$0xf]
      %v246 = vld [vmem:[%s225 + $0x50] sm:$0xf]
      %v247 = vld [vmem:[%s225 + $0x54] sm:$0xf]
      %v248 = vld [vmem:[%s225 + $0x58] sm:$0xf]
      %v249 = vld [vmem:[%s225 + $0x5c] sm:$0xf]
      %v250 = vld [vmem:[%s225 + $0x60] sm:$0xf]
      %v251 = vld [vmem:[%s225 + $0x64] sm:$0xf]
      %v252 = vld [vmem:[%s225 + $0x68] sm:$0xf]
      %v253 = vld [vmem:[%s225 + $0x6c] sm:$0xf]
      %v254 = vld [vmem:[%s225 + $0x70] sm:$0xf]
      %v255 = vld [vmem:[%s225 + $0x74] sm:$0xf]
      %v256 = vld [vmem:[%s225 + $0x78] sm:$0xf]
      %v257 = vld [vmem:[%s225 + $0x7c] sm:$0xf]
      %v258 = vld [vmem:[%s1] sm:$0xf]
      %v259 = vld [vmem:[%s1 + $0x4] sm:$0x3]
      %v292 = vunpack.c.l.b16 %v226
      %v293 = vunpack.c.l.b16 %v227
      %v294 = vunpack.c.l.b16 %v228
      %v295 = vunpack.c.l.b16 %v229
      %v296 = vunpack.c.l.b16 %v230
      %v297 = vunpack.c.l.b16 %v231
      %v298 = vunpack.c.l.b16 %v232
      %v299 = vunpack.c.l.b16 %v233
      %v300 = vunpack.c.l.b16 %v234
      %v301 = vunpack.c.l.b16 %v235
      %v302 = vunpack.c.l.b16 %v236
      %v303 = vunpack.c.l.b16 %v237
      %v304 = vunpack.c.l.b16 %v238
      %v305 = vunpack.c.l.b16 %v239
      %v306 = vunpack.c.l.b16 %v240
      %v307 = vunpack.c.l.b16 %v241
      %v308 = vunpack.c.l.b16 %v242
      %v309 = vunpack.c.l.b16 %v243
      %v310 = vunpack.c.l.b16 %v244
      %v311 = vunpack.c.l.b16 %v245
      %v312 = vunpack.c.l.b16 %v246
      %v313 = vunpack.c.l.b16 %v247
      %v314 = vunpack.c.l.b16 %v248
      %v315 = vunpack.c.l.b16 %v249
      %v316 = vunpack.c.l.b16 %v250
      %v317 = vunpack.c.l.b16 %v251
      %v318 = vunpack.c.l.b16 %v252
      %v319 = vunpack.c.l.b16 %v253
      %v320 = vunpack.c.l.b16 %v254
      %v321 = vunpack.c.l.b16 %v255
      %v322 = vunpack.c.l.b16 %v256
      %v323 = vunpack.c.l.b16 %v257
      %v324 = vpack.c.b16 %v293, %v292
      %v325 = vpack.c.b16 %v295, %v294
      %v326 = vpack.c.b16 %v297, %v296
      %v327 = vpack.c.b16 %v299, %v298
      %v328 = vpack.c.b16 %v301, %v300
      %v329 = vpack.c.b16 %v303, %v302
      %v330 = vpack.c.b16 %v305, %v304
      %v331 = vpack.c.b16 %v307, %v306
      %v332 = vpack.c.b16 %v309, %v308
      %v333 = vpack.c.b16 %v311, %v310
      %v334 = vpack.c.b16 %v313, %v312
      %v335 = vpack.c.b16 %v315, %v314
      %v336 = vpack.c.b16 %v317, %v316
      %v337 = vpack.c.b16 %v319, %v318
      %v338 = vpack.c.b16 %v321, %v320
      %v339 = vpack.c.b16 %v323, %v322
      %v342 = vunpack.c.l.b16 %v258
      %v343 = vunpack.c.l.b16 %v259
      %v344 = vpack.c.b16 %v343, %v342
      %vm345 = vcmask 97280
      %v347 = vsel %vm345, %v324, 0
      %v350 = vsel %vm345, %v325, 0
      %v353 = vsel %vm345, %v326, 0
      %v356 = vsel %vm345, %v327, 0
      %v359 = vsel %vm345, %v328, 0
      %v362 = vsel %vm345, %v329, 0
      %v365 = vsel %vm345, %v330, 0
      %v368 = vsel %vm345, %v331, 0
      %v371 = vsel %vm345, %v332, 0
      %v374 = vsel %vm345, %v333, 0
      %v377 = vsel %vm345, %v334, 0
      %v380 = vsel %vm345, %v335, 0
      %v383 = vsel %vm345, %v336, 0
      %v386 = vsel %vm345, %v337, 0
      %v389 = vsel %vm345, %v338, 0
      %v392 = vsel %vm345, %v339, 0
      %vm394 = vcmask 1045504
      %v396 = vsel %vm394, %v344, 0
      %398 = vmatprep.subr.bf16.mxu0 0
      %399 = vmatpush1.bf16.msra.mxu0 %v396
      %400 = vmatprep.subr.bf16.mxu0 0
      %401 = vmatpush1.bf16.msra.mxu0 0
      %402 = vmatprep.subr.bf16.mxu0 0
      %403 = vmatpush1.bf16.msra.mxu0 0
      %404 = vmatprep.subr.bf16.mxu0 0
      %405 = vmatpush1.bf16.msra.mxu0 0
      %406 = vmatprep.subr.bf16.mxu0 0
      %407 = vmatpush1.bf16.msra.mxu0 0
      %408 = vmatprep.subr.bf16.mxu0 0
      %409 = vmatpush1.bf16.msra.mxu0 0
      %410 = vmatprep.subr.bf16.mxu0 0
      %411 = vmatpush1.bf16.msra.mxu0 0
      %412 = vmatprep.subr.bf16.mxu0 0
      %413 = vmatpush1.bf16.msra.mxu0 0
      %414 = vmatprep.subr.bf16.mxu0 0
      %415 = vmatpush1.bf16.msra.mxu0 0
      %416 = vmatprep.subr.bf16.mxu0 0
      %417 = vmatpush1.bf16.msra.mxu0 0
      %418 = vmatprep.subr.bf16.mxu0 0
      %419 = vmatpush1.bf16.msra.mxu0 0
      %420 = vmatprep.subr.bf16.mxu0 0
      %421 = vmatpush1.bf16.msra.mxu0 0
      %422 = vmatprep.subr.bf16.mxu0 0
      %423 = vmatpush1.bf16.msra.mxu0 0
      %424 = vmatprep.subr.bf16.mxu0 0
      %425 = vmatpush1.bf16.msra.mxu0 0
      %426 = vmatprep.subr.bf16.mxu0 0
      %427 = vmatpush1.bf16.msra.mxu0 0
      %428 = vmatprep.subr.bf16.mxu0 0
      %429 = vmatpush1.bf16.msra.mxu0 0
      %430 = vmatprep.mubr.bf16.mxu0 0
      %431 = vmatmul.mubr.bf16.gmra.mrb[0].mxu0 %v347
      %v432 = vpop.f32.mrb[0].mxu0
      %v433 = vadd.f32 0.0, %v432
      %v434 = vpop.f32.mrb[0].mxu0
      %v435 = vpop.f32.mrb[0].mxu0
      %v436 = vadd.f32 0.0, %v435
      %v437 = vpop.f32.mrb[0].mxu0
      %438 = vmatprep.mubr.bf16.mxu0 0
      %439 = vmatmul.mubr.bf16.gmra.mrb[0].mxu0 %v350
      %v440 = vpop.f32.mrb[0].mxu0
      %v441 = vadd.f32 0.0, %v440
      %v442 = vpop.f32.mrb[0].mxu0
      %v443 = vpop.f32.mrb[0].mxu0
      %v444 = vadd.f32 0.0, %v443
      %v445 = vpop.f32.mrb[0].mxu0
      %446 = vmatprep.mubr.bf16.mxu0 0
      %447 = vmatmul.mubr.bf16.gmra.mrb[0].mxu0 %v353
      %v448 = vpop.f32.mrb[0].mxu0
      %v449 = vadd.f32 0.0, %v448
      %v450 = vpop.f32.mrb[0].mxu0
      %v451 = vpop.f32.mrb[0].mxu0
      %v452 = vadd.f32 0.0, %v451
      %v453 = vpop.f32.mrb[0].mxu0
      %454 = vmatprep.mubr.bf16.mxu0 0
      %455 = vmatmul.mubr.bf16.gmra.mrb[0].mxu0 %v356
      %v456 = vpop.f32.mrb[0].mxu0
      %v457 = vadd.f32 0.0, %v456
      %v458 = vpop.f32.mrb[0].mxu0
      %v459 = vpop.f32.mrb[0].mxu0
      %v460 = vadd.f32 0.0, %v459
      %v461 = vpop.f32.mrb[0].mxu0
      %462 = vmatprep.mubr.bf16.mxu0 0
      %463 = vmatmul.mubr.bf16.gmra.mrb[0].mxu0 %v359
      %v464 = vpop.f32.mrb[0].mxu0
      %v465 = vadd.f32 0.0, %v464
      %v466 = vpop.f32.mrb[0].mxu0
      %v467 = vpop.f32.mrb[0].mxu0
      %v468 = vadd.f32 0.0, %v467
      %v469 = vpop.f32.mrb[0].mxu0
      %470 = vmatprep.mubr.bf16.mxu0 0
      %471 = vmatmul.mubr.bf16.gmra.mrb[0].mxu0 %v362
      %v472 = vpop.f32.mrb[0].mxu0
      %v473 = vadd.f32 0.0, %v472
      %v474 = vpop.f32.mrb[0].mxu0
      %v475 = vpop.f32.mrb[0].mxu0
      %v476 = vadd.f32 0.0, %v475
      %v477 = vpop.f32.mrb[0].mxu0
      %478 = vmatprep.mubr.bf16.mxu0 0
      %479 = vmatmul.mubr.bf16.gmra.mrb[0].mxu0 %v365
      %v480 = vpop.f32.mrb[0].mxu0
      %v481 = vadd.f32 0.0, %v480
      %v482 = vpop.f32.mrb[0].mxu0
      %v483 = vpop.f32.mrb[0].mxu0
      %v484 = vadd.f32 0.0, %v483
      %v485 = vpop.f32.mrb[0].mxu0
      %486 = vmatprep.mubr.bf16.mxu0 0
      %487 = vmatmul.mubr.bf16.gmra.mrb[0].mxu0 %v368
      %v488 = vpop.f32.mrb[0].mxu0
      %v489 = vadd.f32 0.0, %v488
      %v490 = vpop.f32.mrb[0].mxu0
      %v491 = vpop.f32.mrb[0].mxu0
      %v492 = vadd.f32 0.0, %v491
      %v493 = vpop.f32.mrb[0].mxu0
      %494 = vmatprep.mubr.bf16.mxu0 0
      %495 = vmatmul.mubr.bf16.gmra.mrb[0].mxu0 %v371
      %v496 = vpop.f32.mrb[0].mxu0
      %v497 = vadd.f32 0.0, %v496
      %v498 = vpop.f32.mrb[0].mxu0
      %v499 = vpop.f32.mrb[0].mxu0
      %v500 = vadd.f32 0.0, %v499
      %v501 = vpop.f32.mrb[0].mxu0
      %502 = vmatprep.mubr.bf16.mxu0 0
      %503 = vmatmul.mubr.bf16.gmra.mrb[0].mxu0 %v374
      %v504 = vpop.f32.mrb[0].mxu0
      %v505 = vadd.f32 0.0, %v504
      %v506 = vpop.f32.mrb[0].mxu0
      %v507 = vpop.f32.mrb[0].mxu0
      %v508 = vadd.f32 0.0, %v507
      %v509 = vpop.f32.mrb[0].mxu0
      %510 = vmatprep.mubr.bf16.mxu0 0
      %511 = vmatmul.mubr.bf16.gmra.mrb[0].mxu0 %v377
      %v512 = vpop.f32.mrb[0].mxu0
      %v513 = vadd.f32 0.0, %v512
      %v514 = vpop.f32.mrb[0].mxu0
      %v515 = vpop.f32.mrb[0].mxu0
      %v516 = vadd.f32 0.0, %v515
      %v517 = vpop.f32.mrb[0].mxu0
      %518 = vmatprep.mubr.bf16.mxu0 0
      %519 = vmatmul.mubr.bf16.gmra.mrb[0].mxu0 %v380
      %v520 = vpop.f32.mrb[0].mxu0
      %v521 = vadd.f32 0.0, %v520
      %v522 = vpop.f32.mrb[0].mxu0
      %v523 = vpop.f32.mrb[0].mxu0
      %v524 = vadd.f32 0.0, %v523
      %v525 = vpop.f32.mrb[0].mxu0
      %526 = vmatprep.mubr.bf16.mxu0 0
      %527 = vmatmul.mubr.bf16.gmra.mrb[0].mxu0 %v383
      %v528 = vpop.f32.mrb[0].mxu0
      %v529 = vadd.f32 0.0, %v528
      %v530 = vpop.f32.mrb[0].mxu0
      %v531 = vpop.f32.mrb[0].mxu0
      %v532 = vadd.f32 0.0, %v531
      %v533 = vpop.f32.mrb[0].mxu0
      %534 = vmatprep.mubr.bf16.mxu0 0
      %535 = vmatmul.mubr.bf16.gmra.mrb[0].mxu0 %v386
      %v536 = vpop.f32.mrb[0].mxu0
      %v537 = vadd.f32 0.0, %v536
      %v538 = vpop.f32.mrb[0].mxu0
      %v539 = vpop.f32.mrb[0].mxu0
      %v540 = vadd.f32 0.0, %v539
      %v541 = vpop.f32.mrb[0].mxu0
      %542 = vmatprep.mubr.bf16.mxu0 0
      %543 = vmatmul.mubr.bf16.gmra.mrb[0].mxu0 %v389
      %v544 = vpop.f32.mrb[0].mxu0
      %v545 = vadd.f32 0.0, %v544
      %v546 = vpop.f32.mrb[0].mxu0
      %v547 = vpop.f32.mrb[0].mxu0
      %v548 = vadd.f32 0.0, %v547
      %v549 = vpop.f32.mrb[0].mxu0
      %550 = vmatprep.mubr.bf16.mxu0 0
      %551 = vmatmul.mubr.bf16.gmra.mrb[0].mxu0 %v392
      %v552 = vpop.f32.mrb[0].mxu0
      %v553 = vadd.f32 0.0, %v552
      %v554 = vpop.f32.mrb[0].mxu0
      %v555 = vpop.f32.mrb[0].mxu0
      %v556 = vadd.f32 0.0, %v555
      %v557 = vpop.f32.mrb[0].mxu0
      %558 = vdwg.mxu0
      %559 = vst [vmem:[#allocation2] sm:$0xff] %v433
      %560 = vst [vmem:[#allocation2 + $0x8] sm:$0xff] %v436
      %561 = vst [vmem:[#allocation2 + $0x10] sm:$0xff] %v441
      %562 = vst [vmem:[#allocation2 + $0x18] sm:$0xff] %v444
      %563 = vst [vmem:[#allocation2 + $0x20] sm:$0xff] %v449
      %564 = vst [vmem:[#allocation2 + $0x28] sm:$0xff] %v452
      %565 = vst [vmem:[#allocation2 + $0x30] sm:$0xff] %v457
      %566 = vst [vmem:[#allocation2 + $0x38] sm:$0xff] %v460
      %567 = vst [vmem:[#allocation2 + $0x40] sm:$0xff] %v465
      %568 = vst [vmem:[#allocation2 + $0x48] sm:$0xff] %v468
      %569 = vst [vmem:[#allocation2 + $0x50] sm:$0xff] %v473
      %570 = vst [vmem:[#allocation2 + $0x58] sm:$0xff] %v476
      %571 = vst [vmem:[#allocation2 + $0x60] sm:$0xff] %v481
      %572 = vst [vmem:[#allocation2 + $0x68] sm:$0xff] %v484
      %573 = vst [vmem:[#allocation2 + $0x70] sm:$0xff] %v489
      %574 = vst [vmem:[#allocation2 + $0x78] sm:$0xff] %v492
      %575 = vst [vmem:[#allocation2 + $0x80] sm:$0xff] %v497
      %576 = vst [vmem:[#allocation2 + $0x88] sm:$0xff] %v500
      %577 = vst [vmem:[#allocation2 + $0x90] sm:$0xff] %v505
      %578 = vst [vmem:[#allocation2 + $0x98] sm:$0xff] %v508
      %579 = vst [vmem:[#allocation2 + $0xa0] sm:$0xff] %v513
      %580 = vst [vmem:[#allocation2 + $0xa8] sm:$0xff] %v516
      %581 = vst [vmem:[#allocation2 + $0xb0] sm:$0xff] %v521
      %582 = vst [vmem:[#allocation2 + $0xb8] sm:$0xff] %v524
      %583 = vst [vmem:[#allocation2 + $0xc0] sm:$0xff] %v529
      %584 = vst [vmem:[#allocation2 + $0xc8] sm:$0xff] %v532
      %585 = vst [vmem:[#allocation2 + $0xd0] sm:$0xff] %v537
      %586 = vst [vmem:[#allocation2 + $0xd8] sm:$0xff] %v540
      %587 = vst [vmem:[#allocation2 + $0xe0] sm:$0xff] %v545
      %588 = vst [vmem:[#allocation2 + $0xe8] sm:$0xff] %v548
      %589 = vst [vmem:[#allocation2 + $0xf0] sm:$0xff] %v553
      %590 = vst [vmem:[#allocation2 + $0xf8] sm:$0xff] %v556
      %s591 = sadd.s32 %s222, 1
      %s592 = smul.u32 %s591, 2
      %s593 = smul.addr %s592, 4
      %s594 = scalar_lea.vmem %s210, %s593
      %v595 = vld [vmem:[%s594] sm:$0xf]
      %v596 = vld [vmem:[%s594 + $0x4] sm:$0xf]
      %v597 = vld [vmem:[%s594 + $0x8] sm:$0xf]
      %v598 = vld [vmem:[%s594 + $0xc] sm:$0xf]
      %v599 = vld [vmem:[%s594 + $0x10] sm:$0xf]
      %v600 = vld [vmem:[%s594 + $0x14] sm:$0xf]
      %v601 = vld [vmem:[%s594 + $0x18] sm:$0xf]
      %v602 = vld [vmem:[%s594 + $0x1c] sm:$0xf]
      %v603 = vld [vmem:[%s594 + $0x20] sm:$0xf]
      %v604 = vld [vmem:[%s594 + $0x24] sm:$0xf]
      %v605 = vld [vmem:[%s594 + $0x28] sm:$0xf]
      %v606 = vld [vmem:[%s594 + $0x2c] sm:$0xf]
      %v607 = vld [vmem:[%s594 + $0x30] sm:$0xf]
      %v608 = vld [vmem:[%s594 + $0x34] sm:$0xf]
      %v609 = vld [vmem:[%s594 + $0x38] sm:$0xf]
      %v610 = vld [vmem:[%s594 + $0x3c] sm:$0xf]
      %v611 = vld [vmem:[%s594 + $0x40] sm:$0xf]
      %v612 = vld [vmem:[%s594 + $0x44] sm:$0xf]
      %v613 = vld [vmem:[%s594 + $0x48] sm:$0xf]
      %v614 = vld [vmem:[%s594 + $0x4c] sm:$0xf]
      %v615 = vld [vmem:[%s594 + $0x50] sm:$0xf]
      %v616 = vld [vmem:[%s594 + $0x54] sm:$0xf]
      %v617 = vld [vmem:[%s594 + $0x58] sm:$0xf]
      %v618 = vld [vmem:[%s594 + $0x5c] sm:$0xf]
      %v619 = vld [vmem:[%s594 + $0x60] sm:$0xf]
      %v620 = vld [vmem:[%s594 + $0x64] sm:$0xf]
      %v621 = vld [vmem:[%s594 + $0x68] sm:$0xf]
      %v622 = vld [vmem:[%s594 + $0x6c] sm:$0xf]
      %v623 = vld [vmem:[%s594 + $0x70] sm:$0xf]
      %v624 = vld [vmem:[%s594 + $0x74] sm:$0xf]
      %v625 = vld [vmem:[%s594 + $0x78] sm:$0xf]
      %v626 = vld [vmem:[%s594 + $0x7c] sm:$0xf]
      %s627 = scalar_lea.vmem %s1, 8
      %v628 = vld [vmem:[%s627] sm:$0xf]
      %v629 = vld [vmem:[%s627 + $0x4] sm:$0x3]
      %v662 = vunpack.c.l.b16 %v595
      %v663 = vunpack.c.l.b16 %v596
      %v664 = vunpack.c.l.b16 %v597
      %v665 = vunpack.c.l.b16 %v598
      %v666 = vunpack.c.l.b16 %v599
      %v667 = vunpack.c.l.b16 %v600
      %v668 = vunpack.c.l.b16 %v601
      %v669 = vunpack.c.l.b16 %v602
      %v670 = vunpack.c.l.b16 %v603
      %v671 = vunpack.c.l.b16 %v604
      %v672 = vunpack.c.l.b16 %v605
      %v673 = vunpack.c.l.b16 %v606
      %v674 = vunpack.c.l.b16 %v607
      %v675 = vunpack.c.l.b16 %v608
      %v676 = vunpack.c.l.b16 %v609
      %v677 = vunpack.c.l.b16 %v610
      %v678 = vunpack.c.l.b16 %v611
      %v679 = vunpack.c.l.b16 %v612
      %v680 = vunpack.c.l.b16 %v613
      %v681 = vunpack.c.l.b16 %v614
      %v682 = vunpack.c.l.b16 %v615
      %v683 = vunpack.c.l.b16 %v616
      %v684 = vunpack.c.l.b16 %v617
      %v685 = vunpack.c.l.b16 %v618
      %v686 = vunpack.c.l.b16 %v619
      %v687 = vunpack.c.l.b16 %v620
      %v688 = vunpack.c.l.b16 %v621
      %v689 = vunpack.c.l.b16 %v622
      %v690 = vunpack.c.l.b16 %v623
      %v691 = vunpack.c.l.b16 %v624
      %v692 = vunpack.c.l.b16 %v625
      %v693 = vunpack.c.l.b16 %v626
      %v694 = vpack.c.b16 %v663, %v662
      %v695 = vpack.c.b16 %v665, %v664
      %v696 = vpack.c.b16 %v667, %v666
      %v697 = vpack.c.b16 %v669, %v668
      %v698 = vpack.c.b16 %v671, %v670
      %v699 = vpack.c.b16 %v673, %v672
      %v700 = vpack.c.b16 %v675, %v674
      %v701 = vpack.c.b16 %v677, %v676
      %v702 = vpack.c.b16 %v679, %v678
      %v703 = vpack.c.b16 %v681, %v680
      %v704 = vpack.c.b16 %v683, %v682
      %v705 = vpack.c.b16 %v685, %v684
      %v706 = vpack.c.b16 %v687, %v686
      %v707 = vpack.c.b16 %v689, %v688
      %v708 = vpack.c.b16 %v691, %v690
      %v709 = vpack.c.b16 %v693, %v692
      %v712 = vunpack.c.l.b16 %v628
      %v713 = vunpack.c.l.b16 %v629
      %v714 = vpack.c.b16 %v713, %v712
      %v716 = vsel %vm345, %v694, 0
      %v719 = vsel %vm345, %v695, 0
      %v722 = vsel %vm345, %v696, 0
      %v725 = vsel %vm345, %v697, 0
      %v728 = vsel %vm345, %v698, 0
      %v731 = vsel %vm345, %v699, 0
      %v734 = vsel %vm345, %v700, 0
      %v737 = vsel %vm345, %v701, 0
      %v740 = vsel %vm345, %v702, 0
      %v743 = vsel %vm345, %v703, 0
      %v746 = vsel %vm345, %v704, 0
      %v749 = vsel %vm345, %v705, 0
      %v752 = vsel %vm345, %v706, 0
      %v755 = vsel %vm345, %v707, 0
      %v758 = vsel %vm345, %v708, 0
      %v761 = vsel %vm345, %v709, 0
      %v764 = vsel %vm394, %v714, 0
      %766 = vmatprep.subr.bf16.mxu0 0
      %767 = vmatpush1.bf16.msra.mxu0 %v764
      %768 = vmatprep.subr.bf16.mxu0 0
      %769 = vmatpush1.bf16.msra.mxu0 0
      %770 = vmatprep.subr.bf16.mxu0 0
      %771 = vmatpush1.bf16.msra.mxu0 0
      %772 = vmatprep.subr.bf16.mxu0 0
      %773 = vmatpush1.bf16.msra.mxu0 0
      %774 = vmatprep.subr.bf16.mxu0 0
      %775 = vmatpush1.bf16.msra.mxu0 0
      %776 = vmatprep.subr.bf16.mxu0 0
      %777 = vmatpush1.bf16.msra.mxu0 0
      %778 = vmatprep.subr.bf16.mxu0 0
      %779 = vmatpush1.bf16.msra.mxu0 0
      %780 = vmatprep.subr.bf16.mxu0 0
      %781 = vmatpush1.bf16.msra.mxu0 0
      %782 = vmatprep.subr.bf16.mxu0 0
      %783 = vmatpush1.bf16.msra.mxu0 0
      %784 = vmatprep.subr.bf16.mxu0 0
      %785 = vmatpush1.bf16.msra.mxu0 0
      %786 = vmatprep.subr.bf16.mxu0 0
      %787 = vmatpush1.bf16.msra.mxu0 0
      %788 = vmatprep.subr.bf16.mxu0 0
      %789 = vmatpush1.bf16.msra.mxu0 0
      %790 = vmatprep.subr.bf16.mxu0 0
      %791 = vmatpush1.bf16.msra.mxu0 0
      %792 = vmatprep.subr.bf16.mxu0 0
      %793 = vmatpush1.bf16.msra.mxu0 0
      %794 = vmatprep.subr.bf16.mxu0 0
      %795 = vmatpush1.bf16.msra.mxu0 0
      %796 = vmatprep.subr.bf16.mxu0 0
      %797 = vmatpush1.bf16.msra.mxu0 0
      %798 = vmatprep.mubr.bf16.mxu0 0
      %799 = vmatmul.mubr.bf16.gmra.mrb[0].mxu0 %v716
      %v800 = vpop.f32.mrb[0].mxu0
      %v801 = vadd.f32 0.0, %v800
      %v802 = vpop.f32.mrb[0].mxu0
      %v803 = vpop.f32.mrb[0].mxu0
      %v804 = vadd.f32 0.0, %v803
      %v805 = vpop.f32.mrb[0].mxu0
      %806 = vmatprep.mubr.bf16.mxu0 0
      %807 = vmatmul.mubr.bf16.gmra.mrb[0].mxu0 %v719
      %v808 = vpop.f32.mrb[0].mxu0
      %v809 = vadd.f32 0.0, %v808
      %v810 = vpop.f32.mrb[0].mxu0
      %v811 = vpop.f32.mrb[0].mxu0
      %v812 = vadd.f32 0.0, %v811
      %v813 = vpop.f32.mrb[0].mxu0
      %814 = vmatprep.mubr.bf16.mxu0 0
      %815 = vmatmul.mubr.bf16.gmra.mrb[0].mxu0 %v722
      %v816 = vpop.f32.mrb[0].mxu0
      %v817 = vadd.f32 0.0, %v816
      %v818 = vpop.f32.mrb[0].mxu0
      %v819 = vpop.f32.mrb[0].mxu0
      %v820 = vadd.f32 0.0, %v819
      %v821 = vpop.f32.mrb[0].mxu0
      %822 = vmatprep.mubr.bf16.mxu0 0
      %823 = vmatmul.mubr.bf16.gmra.mrb[0].mxu0 %v725
      %v824 = vpop.f32.mrb[0].mxu0
      %v825 = vadd.f32 0.0, %v824
      %v826 = vpop.f32.mrb[0].mxu0
      %v827 = vpop.f32.mrb[0].mxu0
      %v828 = vadd.f32 0.0, %v827
      %v829 = vpop.f32.mrb[0].mxu0
      %830 = vmatprep.mubr.bf16.mxu0 0
      %831 = vmatmul.mubr.bf16.gmra.mrb[0].mxu0 %v728
      %v832 = vpop.f32.mrb[0].mxu0
      %v833 = vadd.f32 0.0, %v832
      %v834 = vpop.f32.mrb[0].mxu0
      %v835 = vpop.f32.mrb[0].mxu0
      %v836 = vadd.f32 0.0, %v835
      %v837 = vpop.f32.mrb[0].mxu0
      %838 = vmatprep.mubr.bf16.mxu0 0
      %839 = vmatmul.mubr.bf16.gmra.mrb[0].mxu0 %v731
      %v840 = vpop.f32.mrb[0].mxu0
      %v841 = vadd.f32 0.0, %v840
      %v842 = vpop.f32.mrb[0].mxu0
      %v843 = vpop.f32.mrb[0].mxu0
      %v844 = vadd.f32 0.0, %v843
      %v845 = vpop.f32.mrb[0].mxu0
      %846 = vmatprep.mubr.bf16.mxu0 0
      %847 = vmatmul.mubr.bf16.gmra.mrb[0].mxu0 %v734
      %v848 = vpop.f32.mrb[0].mxu0
      %v849 = vadd.f32 0.0, %v848
      %v850 = vpop.f32.mrb[0].mxu0
      %v851 = vpop.f32.mrb[0].mxu0
      %v852 = vadd.f32 0.0, %v851
      %v853 = vpop.f32.mrb[0].mxu0
      %854 = vmatprep.mubr.bf16.mxu0 0
      %855 = vmatmul.mubr.bf16.gmra.mrb[0].mxu0 %v737
      %v856 = vpop.f32.mrb[0].mxu0
      %v857 = vadd.f32 0.0, %v856
      %v858 = vpop.f32.mrb[0].mxu0
      %v859 = vpop.f32.mrb[0].mxu0
      %v860 = vadd.f32 0.0, %v859
      %v861 = vpop.f32.mrb[0].mxu0
      %862 = vmatprep.mubr.bf16.mxu0 0
      %863 = vmatmul.mubr.bf16.gmra.mrb[0].mxu0 %v740
      %v864 = vpop.f32.mrb[0].mxu0
      %v865 = vadd.f32 0.0, %v864
      %v866 = vpop.f32.mrb[0].mxu0
      %v867 = vpop.f32.mrb[0].mxu0
      %v868 = vadd.f32 0.0, %v867
      %v869 = vpop.f32.mrb[0].mxu0
      %870 = vmatprep.mubr.bf16.mxu0 0
      %871 = vmatmul.mubr.bf16.gmra.mrb[0].mxu0 %v743
      %v872 = vpop.f32.mrb[0].mxu0
      %v873 = vadd.f32 0.0, %v872
      %v874 = vpop.f32.mrb[0].mxu0
      %v875 = vpop.f32.mrb[0].mxu0
      %v876 = vadd.f32 0.0, %v875
      %v877 = vpop.f32.mrb[0].mxu0
      %878 = vmatprep.mubr.bf16.mxu0 0
      %879 = vmatmul.mubr.bf16.gmra.mrb[0].mxu0 %v746
      %v880 = vpop.f32.mrb[0].mxu0
      %v881 = vadd.f32 0.0, %v880
      %v882 = vpop.f32.mrb[0].mxu0
      %v883 = vpop.f32.mrb[0].mxu0
      %v884 = vadd.f32 0.0, %v883
      %v885 = vpop.f32.mrb[0].mxu0
      %886 = vmatprep.mubr.bf16.mxu0 0
      %887 = vmatmul.mubr.bf16.gmra.mrb[0].mxu0 %v749
      %v888 = vpop.f32.mrb[0].mxu0
      %v889 = vadd.f32 0.0, %v888
      %v890 = vpop.f32.mrb[0].mxu0
      %v891 = vpop.f32.mrb[0].mxu0
      %v892 = vadd.f32 0.0, %v891
      %v893 = vpop.f32.mrb[0].mxu0
      %894 = vmatprep.mubr.bf16.mxu0 0
      %895 = vmatmul.mubr.bf16.gmra.mrb[0].mxu0 %v752
      %v896 = vpop.f32.mrb[0].mxu0
      %v897 = vadd.f32 0.0, %v896
      %v898 = vpop.f32.mrb[0].mxu0
      %v899 = vpop.f32.mrb[0].mxu0
      %v900 = vadd.f32 0.0, %v899
      %v901 = vpop.f32.mrb[0].mxu0
      %902 = vmatprep.mubr.bf16.mxu0 0
      %903 = vmatmul.mubr.bf16.gmra.mrb[0].mxu0 %v755
      %v904 = vpop.f32.mrb[0].mxu0
      %v905 = vadd.f32 0.0, %v904
      %v906 = vpop.f32.mrb[0].mxu0
      %v907 = vpop.f32.mrb[0].mxu0
      %v908 = vadd.f32 0.0, %v907
      %v909 = vpop.f32.mrb[0].mxu0
      %910 = vmatprep.mubr.bf16.mxu0 0
      %911 = vmatmul.mubr.bf16.gmra.mrb[0].mxu0 %v758
      %v912 = vpop.f32.mrb[0].mxu0
      %v913 = vadd.f32 0.0, %v912
      %v914 = vpop.f32.mrb[0].mxu0
      %v915 = vpop.f32.mrb[0].mxu0
      %v916 = vadd.f32 0.0, %v915
      %v917 = vpop.f32.mrb[0].mxu0
      %918 = vmatprep.mubr.bf16.mxu0 0
      %919 = vmatmul.mubr.bf16.gmra.mrb[0].mxu0 %v761
      %v920 = vpop.f32.mrb[0].mxu0
      %v921 = vadd.f32 0.0, %v920
      %v922 = vpop.f32.mrb[0].mxu0
      %v923 = vpop.f32.mrb[0].mxu0
      %v924 = vadd.f32 0.0, %v923
      %v925 = vpop.f32.mrb[0].mxu0
      %926 = vdwg.mxu0
      %v927 = vld [vmem:[#allocation2] sm:$0xff]
      %v928 = vld [vmem:[#allocation2 + $0x8] sm:$0xff]
      %v929 = vld [vmem:[#allocation2 + $0x10] sm:$0xff]
      %v930 = vld [vmem:[#allocation2 + $0x18] sm:$0xff]
      %v931 = vld [vmem:[#allocation2 + $0x20] sm:$0xff]
      %v932 = vld [vmem:[#allocation2 + $0x28] sm:$0xff]
      %v933 = vld [vmem:[#allocation2 + $0x30] sm:$0xff]
      %v934 = vld [vmem:[#allocation2 + $0x38] sm:$0xff]
      %v935 = vld [vmem:[#allocation2 + $0x40] sm:$0xff]
      %v936 = vld [vmem:[#allocation2 + $0x48] sm:$0xff]
      %v937 = vld [vmem:[#allocation2 + $0x50] sm:$0xff]
      %v938 = vld [vmem:[#allocation2 + $0x58] sm:$0xff]
      %v939 = vld [vmem:[#allocation2 + $0x60] sm:$0xff]
      %v940 = vld [vmem:[#allocation2 + $0x68] sm:$0xff]
      %v941 = vld [vmem:[#allocation2 + $0x70] sm:$0xff]
      %v942 = vld [vmem:[#allocation2 + $0x78] sm:$0xff]
      %v943 = vld [vmem:[#allocation2 + $0x80] sm:$0xff]
      %v944 = vld [vmem:[#allocation2 + $0x88] sm:$0xff]
      %v945 = vld [vmem:[#allocation2 + $0x90] sm:$0xff]
      %v946 = vld [vmem:[#allocation2 + $0x98] sm:$0xff]
      %v947 = vld [vmem:[#allocation2 + $0xa0] sm:$0xff]
      %v948 = vld [vmem:[#allocation2 + $0xa8] sm:$0xff]
      %v949 = vld [vmem:[#allocation2 + $0xb0] sm:$0xff]
      %v950 = vld [vmem:[#allocation2 + $0xb8] sm:$0xff]
      %v951 = vld [vmem:[#allocation2 + $0xc0] sm:$0xff]
      %v952 = vld [vmem:[#allocation2 + $0xc8] sm:$0xff]
      %v953 = vld [vmem:[#allocation2 + $0xd0] sm:$0xff]
      %v954 = vld [vmem:[#allocation2 + $0xd8] sm:$0xff]
      %v955 = vld [vmem:[#allocation2 + $0xe0] sm:$0xff]
      %v956 = vld [vmem:[#allocation2 + $0xe8] sm:$0xff]
      %v957 = vld [vmem:[#allocation2 + $0xf0] sm:$0xff]
      %v958 = vld [vmem:[#allocation2 + $0xf8] sm:$0xff]
      %v959 = vadd.f32 %v927, %v801
      %v960 = vadd.f32 %v928, %v804
      %v961 = vadd.f32 %v929, %v809
      %v962 = vadd.f32 %v930, %v812
      %v963 = vadd.f32 %v931, %v817
      %v964 = vadd.f32 %v932, %v820
      %v965 = vadd.f32 %v933, %v825
      %v966 = vadd.f32 %v934, %v828
      %v967 = vadd.f32 %v935, %v833
      %v968 = vadd.f32 %v936, %v836
      %v969 = vadd.f32 %v937, %v841
      %v970 = vadd.f32 %v938, %v844
      %v971 = vadd.f32 %v939, %v849
      %v972 = vadd.f32 %v940, %v852
      %v973 = vadd.f32 %v941, %v857
      %v974 = vadd.f32 %v942, %v860
      %v975 = vadd.f32 %v943, %v865
      %v976 = vadd.f32 %v944, %v868
      %v977 = vadd.f32 %v945, %v873
      %v978 = vadd.f32 %v946, %v876
      %v979 = vadd.f32 %v947, %v881
      %v980 = vadd.f32 %v948, %v884
      %v981 = vadd.f32 %v949, %v889
      %v982 = vadd.f32 %v950, %v892
      %v983 = vadd.f32 %v951, %v897
      %v984 = vadd.f32 %v952, %v900
      %v985 = vadd.f32 %v953, %v905
      %v986 = vadd.f32 %v954, %v908
      %v987 = vadd.f32 %v955, %v913
      %v988 = vadd.f32 %v956, %v916
      %v989 = vadd.f32 %v957, %v921
      %v990 = vadd.f32 %v958, %v924
      %991 = vst [vmem:[#allocation2] sm:$0xff] %v959
      %992 = vst [vmem:[#allocation2 + $0x8] sm:$0xff] %v960
      %993 = vst [vmem:[#allocation2 + $0x10] sm:$0xff] %v961
      %994 = vst [vmem:[#allocation2 + $0x18] sm:$0xff] %v962
      %995 = vst [vmem:[#allocation2 + $0x20] sm:$0xff] %v963
      %996 = vst [vmem:[#allocation2 + $0x28] sm:$0xff] %v964
      %997 = vst [vmem:[#allocation2 + $0x30] sm:$0xff] %v965
      %998 = vst [vmem:[#allocation2 + $0x38] sm:$0xff] %v966
      %999 = vst [vmem:[#allocation2 + $0x40] sm:$0xff] %v967
      %1000 = vst [vmem:[#allocation2 + $0x48] sm:$0xff] %v968
      %1001 = vst [vmem:[#allocation2 + $0x50] sm:$0xff] %v969
      %1002 = vst [vmem:[#allocation2 + $0x58] sm:$0xff] %v970
      %1003 = vst [vmem:[#allocation2 + $0x60] sm:$0xff] %v971
      %1004 = vst [vmem:[#allocation2 + $0x68] sm:$0xff] %v972
      %1005 = vst [vmem:[#allocation2 + $0x70] sm:$0xff] %v973
      %1006 = vst [vmem:[#allocation2 + $0x78] sm:$0xff] %v974
      %1007 = vst [vmem:[#allocation2 + $0x80] sm:$0xff] %v975
      %1008 = vst [vmem:[#allocation2 + $0x88] sm:$0xff] %v976
      %1009 = vst [vmem:[#allocation2 + $0x90] sm:$0xff] %v977
      %1010 = vst [vmem:[#allocation2 + $0x98] sm:$0xff] %v978
      %1011 = vst [vmem:[#allocation2 + $0xa0] sm:$0xff] %v979
      %1012 = vst [vmem:[#allocation2 + $0xa8] sm:$0xff] %v980
      %1013 = vst [vmem:[#allocation2 + $0xb0] sm:$0xff] %v981
      %1014 = vst [vmem:[#allocation2 + $0xb8] sm:$0xff] %v982
      %1015 = vst [vmem:[#allocation2 + $0xc0] sm:$0xff] %v983
      %1016 = vst [vmem:[#allocation2 + $0xc8] sm:$0xff] %v984
      %1017 = vst [vmem:[#allocation2 + $0xd0] sm:$0xff] %v985
      %1018 = vst [vmem:[#allocation2 + $0xd8] sm:$0xff] %v986
      %1019 = vst [vmem:[#allocation2 + $0xe0] sm:$0xff] %v987
      %1020 = vst [vmem:[#allocation2 + $0xe8] sm:$0xff] %v988
      %1021 = vst [vmem:[#allocation2 + $0xf0] sm:$0xff] %v989
      %1022 = vst [vmem:[#allocation2 + $0xf8] sm:$0xff] %v990
      %s1023 = sadd.s32 %s222, 2
      %s1024 = smul.u32 %s1023, 2
      %s1025 = smul.addr %s1024, 4
      %s1026 = scalar_lea.vmem %s210, %s1025
      %v1027 = vld [vmem:[%s1026] sm:$0xf]
      %v1028 = vld [vmem:[%s1026 + $0x4] sm:$0xf]
      %v1029 = vld [vmem:[%s1026 + $0x8] sm:$0xf]
      %v1030 = vld [vmem:[%s1026 + $0xc] sm:$0xf]
      %v1031 = vld [vmem:[%s1026 + $0x10] sm:$0xf]
      %v1032 = vld [vmem:[%s1026 + $0x14] sm:$0xf]
      %v1033 = vld [vmem:[%s1026 + $0x18] sm:$0xf]
      %v1034 = vld [vmem:[%s1026 + $0x1c] sm:$0xf]
      %v1035 = vld [vmem:[%s1026 + $0x20] sm:$0xf]
      %v1036 = vld [vmem:[%s1026 + $0x24] sm:$0xf]
      %v1037 = vld [vmem:[%s1026 + $0x28] sm:$0xf]
      %v1038 = vld [vmem:[%s1026 + $0x2c] sm:$0xf]
      %v1039 = vld [vmem:[%s1026 + $0x30] sm:$0xf]
      %v1040 = vld [vmem:[%s1026 + $0x34] sm:$0xf]
      %v1041 = vld [vmem:[%s1026 + $0x38] sm:$0xf]
      %v1042 = vld [vmem:[%s1026 + $0x3c] sm:$0xf]
      %v1043 = vld [vmem:[%s1026 + $0x40] sm:$0xf]
      %v1044 = vld [vmem:[%s1026 + $0x44] sm:$0xf]
      %v1045 = vld [vmem:[%s1026 + $0x48] sm:$0xf]
      %v1046 = vld [vmem:[%s1026 + $0x4c] sm:$0xf]
      %v1047 = vld [vmem:[%s1026 + $0x50] sm:$0xf]
      %v1048 = vld [vmem:[%s1026 + $0x54] sm:$0xf]
      %v1049 = vld [vmem:[%s1026 + $0x58] sm:$0xf]
      %v1050 = vld [vmem:[%s1026 + $0x5c] sm:$0xf]
      %v1051 = vld [vmem:[%s1026 + $0x60] sm:$0xf]
      %v1052 = vld [vmem:[%s1026 + $0x64] sm:$0xf]
      %v1053 = vld [vmem:[%s1026 + $0x68] sm:$0xf]
      %v1054 = vld [vmem:[%s1026 + $0x6c] sm:$0xf]
      %v1055 = vld [vmem:[%s1026 + $0x70] sm:$0xf]
      %v1056 = vld [vmem:[%s1026 + $0x74] sm:$0xf]
      %v1057 = vld [vmem:[%s1026 + $0x78] sm:$0xf]
      %v1058 = vld [vmem:[%s1026 + $0x7c] sm:$0xf]
      %s1059 = scalar_lea.vmem %s1, 16
      %v1060 = vld [vmem:[%s1059] sm:$0xf]
      %v1061 = vld [vmem:[%s1059 + $0x4] sm:$0x3]
      %v1094 = vunpack.c.l.b16 %v1027
      %v1095 = vunpack.c.l.b16 %v1028
      %v1096 = vunpack.c.l.b16 %v1029
      %v1097 = vunpack.c.l.b16 %v1030
      %v1098 = vunpack.c.l.b16 %v1031
      %v1099 = vunpack.c.l.b16 %v1032
      %v1100 = vunpack.c.l.b16 %v1033
      %v1101 = vunpack.c.l.b16 %v1034
      %v1102 = vunpack.c.l.b16 %v1035
      %v1103 = vunpack.c.l.b16 %v1036
      %v1104 = vunpack.c.l.b16 %v1037
      %v1105 = vunpack.c.l.b16 %v1038
      %v1106 = vunpack.c.l.b16 %v1039
      %v1107 = vunpack.c.l.b16 %v1040
      %v1108 = vunpack.c.l.b16 %v1041
      %v1109 = vunpack.c.l.b16 %v1042
      %v1110 = vunpack.c.l.b16 %v1043
      %v1111 = vunpack.c.l.b16 %v1044
      %v1112 = vunpack.c.l.b16 %v1045
      %v1113 = vunpack.c.l.b16 %v1046
      %v1114 = vunpack.c.l.b16 %v1047
      %v1115 = vunpack.c.l.b16 %v1048
      %v1116 = vunpack.c.l.b16 %v1049
      %v1117 = vunpack.c.l.b16 %v1050
      %v1118 = vunpack.c.l.b16 %v1051
      %v1119 = vunpack.c.l.b16 %v1052
      %v1120 = vunpack.c.l.b16 %v1053
      %v1121 = vunpack.c.l.b16 %v1054
      %v1122 = vunpack.c.l.b16 %v1055
      %v1123 = vunpack.c.l.b16 %v1056
      %v1124 = vunpack.c.l.b16 %v1057
      %v1125 = vunpack.c.l.b16 %v1058
      %v1126 = vpack.c.b16 %v1095, %v1094
      %v1127 = vpack.c.b16 %v1097, %v1096
      %v1128 = vpack.c.b16 %v1099, %v1098
      %v1129 = vpack.c.b16 %v1101, %v1100
      %v1130 = vpack.c.b16 %v1103, %v1102
      %v1131 = vpack.c.b16 %v1105, %v1104
      %v1132 = vpack.c.b16 %v1107, %v1106
      %v1133 = vpack.c.b16 %v1109, %v1108
      %v1134 = vpack.c.b16 %v1111, %v1110
      %v1135 = vpack.c.b16 %v1113, %v1112
      %v1136 = vpack.c.b16 %v1115, %v1114
      %v1137 = vpack.c.b16 %v1117, %v1116
      %v1138 = vpack.c.b16 %v1119, %v1118
      %v1139 = vpack.c.b16 %v1121, %v1120
      %v1140 = vpack.c.b16 %v1123, %v1122
      %v1141 = vpack.c.b16 %v1125, %v1124
      %v1144 = vunpack.c.l.b16 %v1060
      %v1145 = vunpack.c.l.b16 %v1061
      %v1146 = vpack.c.b16 %v1145, %v1144
      %v1148 = vsel %vm345, %v1126, 0
      %v1151 = vsel %vm345, %v1127, 0
      %v1154 = vsel %vm345, %v1128, 0
      %v1157 = vsel %vm345, %v1129, 0
      %v1160 = vsel %vm345, %v1130, 0
      %v1163 = vsel %vm345, %v1131, 0
      %v1166 = vsel %vm345, %v1132, 0
      %v1169 = vsel %vm345, %v1133, 0
      %v1172 = vsel %vm345, %v1134, 0
      %v1175 = vsel %vm345, %v1135, 0
      %v1178 = vsel %vm345, %v1136, 0
      %v1181 = vsel %vm345, %v1137, 0
      %v1184 = vsel %vm345, %v1138, 0
      %v1187 = vsel %vm345, %v1139, 0
      %v1190 = vsel %vm345, %v1140, 0
      %v1193 = vsel %vm345, %v1141, 0
      %v1196 = vsel %vm394, %v1146, 0
      %1198 = vmatprep.subr.bf16.mxu0 0
      %1199 = vmatpush1.bf16.msra.mxu0 %v1196
      %1200 = vmatprep.subr.bf16.mxu0 0
      %1201 = vmatpush1.bf16.msra.mxu0 0
      %1202 = vmatprep.subr.bf16.mxu0 0
      %1203 = vmatpush1.bf16.msra.mxu0 0
      %1204 = vmatprep.subr.bf16.mxu0 0
      %1205 = vmatpush1.bf16.msra.mxu0 0
      %1206 = vmatprep.subr.bf16.mxu0 0
      %1207 = vmatpush1.bf16.msra.mxu0 0
      %1208 = vmatprep.subr.bf16.mxu0 0
      %1209 = vmatpush1.bf16.msra.mxu0 0
      %1210 = vmatprep.subr.bf16.mxu0 0
      %1211 = vmatpush1.bf16.msra.mxu0 0
      %1212 = vmatprep.subr.bf16.mxu0 0
      %1213 = vmatpush1.bf16.msra.mxu0 0
      %1214 = vmatprep.subr.bf16.mxu0 0
      %1215 = vmatpush1.bf16.msra.mxu0 0
      %1216 = vmatprep.subr.bf16.mxu0 0
      %1217 = vmatpush1.bf16.msra.mxu0 0
      %1218 = vmatprep.subr.bf16.mxu0 0
      %1219 = vmatpush1.bf16.msra.mxu0 0
      %1220 = vmatprep.subr.bf16.mxu0 0
      %1221 = vmatpush1.bf16.msra.mxu0 0
      %1222 = vmatprep.subr.bf16.mxu0 0
      %1223 = vmatpush1.bf16.msra.mxu0 0
      %1224 = vmatprep.subr.bf16.mxu0 0
      %1225 = vmatpush1.bf16.msra.mxu0 0
      %1226 = vmatprep.subr.bf16.mxu0 0
      %1227 = vmatpush1.bf16.msra.mxu0 0
      %1228 = vmatprep.subr.bf16.mxu0 0
      %1229 = vmatpush1.bf16.msra.mxu0 0
      %1230 = vmatprep.mubr.bf16.mxu0 0
      %1231 = vmatmul.mubr.bf16.gmra.mrb[0].mxu0 %v1148
      %v1232 = vpop.f32.mrb[0].mxu0
      %v1233 = vadd.f32 0.0, %v1232
      %v1234 = vpop.f32.mrb[0].mxu0
      %v1235 = vpop.f32.mrb[0].mxu0
      %v1236 = vadd.f32 0.0, %v1235
      %v1237 = vpop.f32.mrb[0].mxu0
      %1238 = vmatprep.mubr.bf16.mxu0 0
      %1239 = vmatmul.mubr.bf16.gmra.mrb[0].mxu0 %v1151
      %v1240 = vpop.f32.mrb[0].mxu0
      %v1241 = vadd.f32 0.0, %v1240
      %v1242 = vpop.f32.mrb[0].mxu0
      %v1243 = vpop.f32.mrb[0].mxu0
      %v1244 = vadd.f32 0.0, %v1243
      %v1245 = vpop.f32.mrb[0].mxu0
      %1246 = vmatprep.mubr.bf16.mxu0 0
      %1247 = vmatmul.mubr.bf16.gmra.mrb[0].mxu0 %v1154
      %v1248 = vpop.f32.mrb[0].mxu0
      %v1249 = vadd.f32 0.0, %v1248
      %v1250 = vpop.f32.mrb[0].mxu0
      %v1251 = vpop.f32.mrb[0].mxu0
      %v1252 = vadd.f32 0.0, %v1251
      %v1253 = vpop.f32.mrb[0].mxu0
      %1254 = vmatprep.mubr.bf16.mxu0 0
      %1255 = vmatmul.mubr.bf16.gmra.mrb[0].mxu0 %v1157
      %v1256 = vpop.f32.mrb[0].mxu0
      %v1257 = vadd.f32 0.0, %v1256
      %v1258 = vpop.f32.mrb[0].mxu0
      %v1259 = vpop.f32.mrb[0].mxu0
      %v1260 = vadd.f32 0.0, %v1259
      %v1261 = vpop.f32.mrb[0].mxu0
      %1262 = vmatprep.mubr.bf16.mxu0 0
      %1263 = vmatmul.mubr.bf16.gmra.mrb[0].mxu0 %v1160
      %v1264 = vpop.f32.mrb[0].mxu0
      %v1265 = vadd.f32 0.0, %v1264
      %v1266 = vpop.f32.mrb[0].mxu0
      %v1267 = vpop.f32.mrb[0].mxu0
      %v1268 = vadd.f32 0.0, %v1267
      %v1269 = vpop.f32.mrb[0].mxu0
      %1270 = vmatprep.mubr.bf16.mxu0 0
      %1271 = vmatmul.mubr.bf16.gmra.mrb[0].mxu0 %v1163
      %v1272 = vpop.f32.mrb[0].mxu0
      %v1273 = vadd.f32 0.0, %v1272
      %v1274 = vpop.f32.mrb[0].mxu0
      %v1275 = vpop.f32.mrb[0].mxu0
      %v1276 = vadd.f32 0.0, %v1275
      %v1277 = vpop.f32.mrb[0].mxu0
      %1278 = vmatprep.mubr.bf16.mxu0 0
      %1279 = vmatmul.mubr.bf16.gmra.mrb[0].mxu0 %v1166
      %v1280 = vpop.f32.mrb[0].mxu0
      %v1281 = vadd.f32 0.0, %v1280
      %v1282 = vpop.f32.mrb[0].mxu0
      %v1283 = vpop.f32.mrb[0].mxu0
      %v1284 = vadd.f32 0.0, %v1283
      %v1285 = vpop.f32.mrb[0].mxu0
      %1286 = vmatprep.mubr.bf16.mxu0 0
      %1287 = vmatmul.mubr.bf16.gmra.mrb[0].mxu0 %v1169
      %v1288 = vpop.f32.mrb[0].mxu0
      %v1289 = vadd.f32 0.0, %v1288
      %v1290 = vpop.f32.mrb[0].mxu0
      %v1291 = vpop.f32.mrb[0].mxu0
      %v1292 = vadd.f32 0.0, %v1291
      %v1293 = vpop.f32.mrb[0].mxu0
      %1294 = vmatprep.mubr.bf16.mxu0 0
      %1295 = vmatmul.mubr.bf16.gmra.mrb[0].mxu0 %v1172
      %v1296 = vpop.f32.mrb[0].mxu0
      %v1297 = vadd.f32 0.0, %v1296
      %v1298 = vpop.f32.mrb[0].mxu0
      %v1299 = vpop.f32.mrb[0].mxu0
      %v1300 = vadd.f32 0.0, %v1299
      %v1301 = vpop.f32.mrb[0].mxu0
      %1302 = vmatprep.mubr.bf16.mxu0 0
      %1303 = vmatmul.mubr.bf16.gmra.mrb[0].mxu0 %v1175
      %v1304 = vpop.f32.mrb[0].mxu0
      %v1305 = vadd.f32 0.0, %v1304
      %v1306 = vpop.f32.mrb[0].mxu0
      %v1307 = vpop.f32.mrb[0].mxu0
      %v1308 = vadd.f32 0.0, %v1307
      %v1309 = vpop.f32.mrb[0].mxu0
      %1310 = vmatprep.mubr.bf16.mxu0 0
      %1311 = vmatmul.mubr.bf16.gmra.mrb[0].mxu0 %v1178
      %v1312 = vpop.f32.mrb[0].mxu0
      %v1313 = vadd.f32 0.0, %v1312
      %v1314 = vpop.f32.mrb[0].mxu0
      %v1315 = vpop.f32.mrb[0].mxu0
      %v1316 = vadd.f32 0.0, %v1315
      %v1317 = vpop.f32.mrb[0].mxu0
      %1318 = vmatprep.mubr.bf16.mxu0 0
      %1319 = vmatmul.mubr.bf16.gmra.mrb[0].mxu0 %v1181
      %v1320 = vpop.f32.mrb[0].mxu0
      %v1321 = vadd.f32 0.0, %v1320
      %v1322 = vpop.f32.mrb[0].mxu0
      %v1323 = vpop.f32.mrb[0].mxu0
      %v1324 = vadd.f32 0.0, %v1323
      %v1325 = vpop.f32.mrb[0].mxu0
      %1326 = vmatprep.mubr.bf16.mxu0 0
      %1327 = vmatmul.mubr.bf16.gmra.mrb[0].mxu0 %v1184
      %v1328 = vpop.f32.mrb[0].mxu0
      %v1329 = vadd.f32 0.0, %v1328
      %v1330 = vpop.f32.mrb[0].mxu0
      %v1331 = vpop.f32.mrb[0].mxu0
      %v1332 = vadd.f32 0.0, %v1331
      %v1333 = vpop.f32.mrb[0].mxu0
      %1334 = vmatprep.mubr.bf16.mxu0 0
      %1335 = vmatmul.mubr.bf16.gmra.mrb[0].mxu0 %v1187
      %v1336 = vpop.f32.mrb[0].mxu0
      %v1337 = vadd.f32 0.0, %v1336
      %v1338 = vpop.f32.mrb[0].mxu0
      %v1339 = vpop.f32.mrb[0].mxu0
      %v1340 = vadd.f32 0.0, %v1339
      %v1341 = vpop.f32.mrb[0].mxu0
      %1342 = vmatprep.mubr.bf16.mxu0 0
      %1343 = vmatmul.mubr.bf16.gmra.mrb[0].mxu0 %v1190
      %v1344 = vpop.f32.mrb[0].mxu0
      %v1345 = vadd.f32 0.0, %v1344
      %v1346 = vpop.f32.mrb[0].mxu0
      %v1347 = vpop.f32.mrb[0].mxu0
      %v1348 = vadd.f32 0.0, %v1347
      %v1349 = vpop.f32.mrb[0].mxu0
      %1350 = vmatprep.mubr.bf16.mxu0 0
      %1351 = vmatmul.mubr.bf16.gmra.mrb[0].mxu0 %v1193
      %v1352 = vpop.f32.mrb[0].mxu0
      %v1353 = vadd.f32 0.0, %v1352
      %v1354 = vpop.f32.mrb[0].mxu0
      %v1355 = vpop.f32.mrb[0].mxu0
      %v1356 = vadd.f32 0.0, %v1355
      %v1357 = vpop.f32.mrb[0].mxu0
      %1358 = vdwg.mxu0
      %v1359 = vld [vmem:[#allocation2] sm:$0xff]
      %v1360 = vld [vmem:[#allocation2 + $0x8] sm:$0xff]
      %v1361 = vld [vmem:[#allocation2 + $0x10] sm:$0xff]
      %v1362 = vld [vmem:[#allocation2 + $0x18] sm:$0xff]
      %v1363 = vld [vmem:[#allocation2 + $0x20] sm:$0xff]
      %v1364 = vld [vmem:[#allocation2 + $0x28] sm:$0xff]
      %v1365 = vld [vmem:[#allocation2 + $0x30] sm:$0xff]
      %v1366 = vld [vmem:[#allocation2 + $0x38] sm:$0xff]
      %v1367 = vld [vmem:[#allocation2 + $0x40] sm:$0xff]
      %v1368 = vld [vmem:[#allocation2 + $0x48] sm:$0xff]
      %v1369 = vld [vmem:[#allocation2 + $0x50] sm:$0xff]
      %v1370 = vld [vmem:[#allocation2 + $0x58] sm:$0xff]
      %v1371 = vld [vmem:[#allocation2 + $0x60] sm:$0xff]
      %v1372 = vld [vmem:[#allocation2 + $0x68] sm:$0xff]
      %v1373 = vld [vmem:[#allocation2 + $0x70] sm:$0xff]
      %v1374 = vld [vmem:[#allocation2 + $0x78] sm:$0xff]
      %v1375 = vld [vmem:[#allocation2 + $0x80] sm:$0xff]
      %v1376 = vld [vmem:[#allocation2 + $0x88] sm:$0xff]
      %v1377 = vld [vmem:[#allocation2 + $0x90] sm:$0xff]
      %v1378 = vld [vmem:[#allocation2 + $0x98] sm:$0xff]
      %v1379 = vld [vmem:[#allocation2 + $0xa0] sm:$0xff]
      %v1380 = vld [vmem:[#allocation2 + $0xa8] sm:$0xff]
      %v1381 = vld [vmem:[#allocation2 + $0xb0] sm:$0xff]
      %v1382 = vld [vmem:[#allocation2 + $0xb8] sm:$0xff]
      %v1383 = vld [vmem:[#allocation2 + $0xc0] sm:$0xff]
      %v1384 = vld [vmem:[#allocation2 + $0xc8] sm:$0xff]
      %v1385 = vld [vmem:[#allocation2 + $0xd0] sm:$0xff]
      %v1386 = vld [vmem:[#allocation2 + $0xd8] sm:$0xff]
      %v1387 = vld [vmem:[#allocation2 + $0xe0] sm:$0xff]
      %v1388 = vld [vmem:[#allocation2 + $0xe8] sm:$0xff]
      %v1389 = vld [vmem:[#allocation2 + $0xf0] sm:$0xff]
      %v1390 = vld [vmem:[#allocation2 + $0xf8] sm:$0xff]
      %v1391 = vadd.f32 %v1359, %v1233
      %v1392 = vadd.f32 %v1360, %v1236
      %v1393 = vadd.f32 %v1361, %v1241
      %v1394 = vadd.f32 %v1362, %v1244
      %v1395 = vadd.f32 %v1363, %v1249
      %v1396 = vadd.f32 %v1364, %v1252
      %v1397 = vadd.f32 %v1365, %v1257
      %v1398 = vadd.f32 %v1366, %v1260
      %v1399 = vadd.f32 %v1367, %v1265
      %v1400 = vadd.f32 %v1368, %v1268
      %v1401 = vadd.f32 %v1369, %v1273
      %v1402 = vadd.f32 %v1370, %v1276
      %v1403 = vadd.f32 %v1371, %v1281
      %v1404 = vadd.f32 %v1372, %v1284
      %v1405 = vadd.f32 %v1373, %v1289
      %v1406 = vadd.f32 %v1374, %v1292
      %v1407 = vadd.f32 %v1375, %v1297
      %v1408 = vadd.f32 %v1376, %v1300
      %v1409 = vadd.f32 %v1377, %v1305
      %v1410 = vadd.f32 %v1378, %v1308
      %v1411 = vadd.f32 %v1379, %v1313
      %v1412 = vadd.f32 %v1380, %v1316
      %v1413 = vadd.f32 %v1381, %v1321
      %v1414 = vadd.f32 %v1382, %v1324
      %v1415 = vadd.f32 %v1383, %v1329
      %v1416 = vadd.f32 %v1384, %v1332
      %v1417 = vadd.f32 %v1385, %v1337
      %v1418 = vadd.f32 %v1386, %v1340
      %v1419 = vadd.f32 %v1387, %v1345
      %v1420 = vadd.f32 %v1388, %v1348
      %v1421 = vadd.f32 %v1389, %v1353
      %v1422 = vadd.f32 %v1390, %v1356
      %1423 = vst [vmem:[#allocation2] sm:$0xff] %v1391
      %1424 = vst [vmem:[#allocation2 + $0x8] sm:$0xff] %v1392
      %1425 = vst [vmem:[#allocation2 + $0x10] sm:$0xff] %v1393
      %1426 = vst [vmem:[#allocation2 + $0x18] sm:$0xff] %v1394
      %1427 = vst [vmem:[#allocation2 + $0x20] sm:$0xff] %v1395
      %1428 = vst [vmem:[#allocation2 + $0x28] sm:$0xff] %v1396
      %1429 = vst [vmem:[#allocation2 + $0x30] sm:$0xff] %v1397
      %1430 = vst [vmem:[#allocation2 + $0x38] sm:$0xff] %v1398
      %1431 = vst [vmem:[#allocation2 + $0x40] sm:$0xff] %v1399
      %1432 = vst [vmem:[#allocation2 + $0x48] sm:$0xff] %v1400
      %1433 = vst [vmem:[#allocation2 + $0x50] sm:$0xff] %v1401
      %1434 = vst [vmem:[#allocation2 + $0x58] sm:$0xff] %v1402
      %1435 = vst [vmem:[#allocation2 + $0x60] sm:$0xff] %v1403
      %1436 = vst [vmem:[#allocation2 + $0x68] sm:$0xff] %v1404
      %1437 = vst [vmem:[#allocation2 + $0x70] sm:$0xff] %v1405
      %1438 = vst [vmem:[#allocation2 + $0x78] sm:$0xff] %v1406
      %1439 = vst [vmem:[#allocation2 + $0x80] sm:$0xff] %v1407
      %1440 = vst [vmem:[#allocation2 + $0x88] sm:$0xff] %v1408
      %1441 = vst [vmem:[#allocation2 + $0x90] sm:$0xff] %v1409
      %1442 = vst [vmem:[#allocation2 + $0x98] sm:$0xff] %v1410
      %1443 = vst [vmem:[#allocation2 + $0xa0] sm:$0xff] %v1411
      %1444 = vst [vmem:[#allocation2 + $0xa8] sm:$0xff] %v1412
      %1445 = vst [vmem:[#allocation2 + $0xb0] sm:$0xff] %v1413
      %1446 = vst [vmem:[#allocation2 + $0xb8] sm:$0xff] %v1414
      %1447 = vst [vmem:[#allocation2 + $0xc0] sm:$0xff] %v1415
      %1448 = vst [vmem:[#allocation2 + $0xc8] sm:$0xff] %v1416
      %1449 = vst [vmem:[#allocation2 + $0xd0] sm:$0xff] %v1417
      %1450 = vst [vmem:[#allocation2 + $0xd8] sm:$0xff] %v1418
      %1451 = vst [vmem:[#allocation2 + $0xe0] sm:$0xff] %v1419
      %1452 = vst [vmem:[#allocation2 + $0xe8] sm:$0xff] %v1420
      %1453 = vst [vmem:[#allocation2 + $0xf0] sm:$0xff] %v1421
      %1454 = vst [vmem:[#allocation2 + $0xf8] sm:$0xff] %v1422
      %v1455 = vld [vmem:[#allocation2] sm:$0xff]
      %v1456 = vld [vmem:[#allocation2 + $0x8] sm:$0xff]
      %v1457 = vld [vmem:[#allocation2 + $0x10] sm:$0xff]
      %v1458 = vld [vmem:[#allocation2 + $0x18] sm:$0xff]
      %v1459 = vld [vmem:[#allocation2 + $0x20] sm:$0xff]
      %v1460 = vld [vmem:[#allocation2 + $0x28] sm:$0xff]
      %v1461 = vld [vmem:[#allocation2 + $0x30] sm:$0xff]
      %v1462 = vld [vmem:[#allocation2 + $0x38] sm:$0xff]
      %v1463 = vld [vmem:[#allocation2 + $0x40] sm:$0xff]
      %v1464 = vld [vmem:[#allocation2 + $0x48] sm:$0xff]
      %v1465 = vld [vmem:[#allocation2 + $0x50] sm:$0xff]
      %v1466 = vld [vmem:[#allocation2 + $0x58] sm:$0xff]
      %v1467 = vld [vmem:[#allocation2 + $0x60] sm:$0xff]
      %v1468 = vld [vmem:[#allocation2 + $0x68] sm:$0xff]
      %v1469 = vld [vmem:[#allocation2 + $0x70] sm:$0xff]
      %v1470 = vld [vmem:[#allocation2 + $0x78] sm:$0xff]
      %v1471 = vld [vmem:[#allocation2 + $0x80] sm:$0xff]
      %v1472 = vld [vmem:[#allocation2 + $0x88] sm:$0xff]
      %v1473 = vld [vmem:[#allocation2 + $0x90] sm:$0xff]
      %v1474 = vld [vmem:[#allocation2 + $0x98] sm:$0xff]
      %v1475 = vld [vmem:[#allocation2 + $0xa0] sm:$0xff]
      %v1476 = vld [vmem:[#allocation2 + $0xa8] sm:$0xff]
      %v1477 = vld [vmem:[#allocation2 + $0xb0] sm:$0xff]
      %v1478 = vld [vmem:[#allocation2 + $0xb8] sm:$0xff]
      %v1479 = vld [vmem:[#allocation2 + $0xc0] sm:$0xff]
      %v1480 = vld [vmem:[#allocation2 + $0xc8] sm:$0xff]
      %v1481 = vld [vmem:[#allocation2 + $0xd0] sm:$0xff]
      %v1482 = vld [vmem:[#allocation2 + $0xd8] sm:$0xff]
      %v1483 = vld [vmem:[#allocation2 + $0xe0] sm:$0xff]
      %v1484 = vld [vmem:[#allocation2 + $0xe8] sm:$0xff]
      %v1485 = vld [vmem:[#allocation2 + $0xf0] sm:$0xff]
      %v1486 = vld [vmem:[#allocation2 + $0xf8] sm:$0xff]
      %v1487 = vld [vmem:[%s2] sm:$0x1]
      %v1489 = vlaneseq
      %v1490 = vshrl.u32 %v1489, 7
      %v1491 = vsub.s32 0, %v1490
      %v1492 = vrot.slane %v1487, %v1491
      %v1494 = vmul.f32 %v1455, %v1492
      %v1495 = vmul.f32 %v1456, %v1492
      %v1496 = vmul.f32 %v1457, %v1492
      %v1497 = vmul.f32 %v1458, %v1492
      %v1498 = vmul.f32 %v1459, %v1492
      %v1499 = vmul.f32 %v1460, %v1492
      %v1500 = vmul.f32 %v1461, %v1492
      %v1501 = vmul.f32 %v1462, %v1492
      %v1502 = vmul.f32 %v1463, %v1492
      %v1503 = vmul.f32 %v1464, %v1492
      %v1504 = vmul.f32 %v1465, %v1492
      %v1505 = vmul.f32 %v1466, %v1492
      %v1506 = vmul.f32 %v1467, %v1492
      %v1507 = vmul.f32 %v1468, %v1492
      %v1508 = vmul.f32 %v1469, %v1492
      %v1509 = vmul.f32 %v1470, %v1492
      %v1510 = vmul.f32 %v1471, %v1492
      %v1511 = vmul.f32 %v1472, %v1492
      %v1512 = vmul.f32 %v1473, %v1492
      %v1513 = vmul.f32 %v1474, %v1492
      %v1514 = vmul.f32 %v1475, %v1492
      %v1515 = vmul.f32 %v1476, %v1492
      %v1516 = vmul.f32 %v1477, %v1492
      %v1517 = vmul.f32 %v1478, %v1492
      %v1518 = vmul.f32 %v1479, %v1492
      %v1519 = vmul.f32 %v1480, %v1492
      %v1520 = vmul.f32 %v1481, %v1492
      %v1521 = vmul.f32 %v1482, %v1492
      %v1522 = vmul.f32 %v1483, %v1492
      %v1523 = vmul.f32 %v1484, %v1492
      %v1524 = vmul.f32 %v1485, %v1492
      %v1525 = vmul.f32 %v1486, %v1492
      %v1526 = vld [vmem:[%s3] sm:$0x1]
      %v1528 = vlaneseq
      %v1529 = vshrl.u32 %v1528, 7
      %v1530 = vsub.s32 0, %v1529
      %v1531 = vrot.slane %v1526, %v1530
      %v1533 = vadd.f32 %v1494, %v1531
      %v1534 = vadd.f32 %v1495, %v1531
      %v1535 = vadd.f32 %v1496, %v1531
      %v1536 = vadd.f32 %v1497, %v1531
      %v1537 = vadd.f32 %v1498, %v1531
      %v1538 = vadd.f32 %v1499, %v1531
      %v1539 = vadd.f32 %v1500, %v1531
      %v1540 = vadd.f32 %v1501, %v1531
      %v1541 = vadd.f32 %v1502, %v1531
      %v1542 = vadd.f32 %v1503, %v1531
      %v1543 = vadd.f32 %v1504, %v1531
      %v1544 = vadd.f32 %v1505, %v1531
      %v1545 = vadd.f32 %v1506, %v1531
      %v1546 = vadd.f32 %v1507, %v1531
      %v1547 = vadd.f32 %v1508, %v1531
      %v1548 = vadd.f32 %v1509, %v1531
      %v1549 = vadd.f32 %v1510, %v1531
      %v1550 = vadd.f32 %v1511, %v1531
      %v1551 = vadd.f32 %v1512, %v1531
      %v1552 = vadd.f32 %v1513, %v1531
      %v1553 = vadd.f32 %v1514, %v1531
      %v1554 = vadd.f32 %v1515, %v1531
      %v1555 = vadd.f32 %v1516, %v1531
      %v1556 = vadd.f32 %v1517, %v1531
      %v1557 = vadd.f32 %v1518, %v1531
      %v1558 = vadd.f32 %v1519, %v1531
      %v1559 = vadd.f32 %v1520, %v1531
      %v1560 = vadd.f32 %v1521, %v1531
      %v1561 = vadd.f32 %v1522, %v1531
      %v1562 = vadd.f32 %v1523, %v1531
      %v1563 = vadd.f32 %v1524, %v1531
      %v1564 = vadd.f32 %v1525, %v1531
      %v1565 = vmax.f32 %v1533, 0.0
      %v1566 = vmax.f32 %v1534, 0.0
      %v1567 = vmax.f32 %v1535, 0.0
      %v1568 = vmax.f32 %v1536, 0.0
      %v1569 = vmax.f32 %v1537, 0.0
      %v1570 = vmax.f32 %v1538, 0.0
      %v1571 = vmax.f32 %v1539, 0.0
      %v1572 = vmax.f32 %v1540, 0.0
      %v1573 = vmax.f32 %v1541, 0.0
      %v1574 = vmax.f32 %v1542, 0.0
      %v1575 = vmax.f32 %v1543, 0.0
      %v1576 = vmax.f32 %v1544, 0.0
      %v1577 = vmax.f32 %v1545, 0.0
      %v1578 = vmax.f32 %v1546, 0.0
      %v1579 = vmax.f32 %v1547, 0.0
      %v1580 = vmax.f32 %v1548, 0.0
      %v1581 = vmax.f32 %v1549, 0.0
      %v1582 = vmax.f32 %v1550, 0.0
      %v1583 = vmax.f32 %v1551, 0.0
      %v1584 = vmax.f32 %v1552, 0.0
      %v1585 = vmax.f32 %v1553, 0.0
      %v1586 = vmax.f32 %v1554, 0.0
      %v1587 = vmax.f32 %v1555, 0.0
      %v1588 = vmax.f32 %v1556, 0.0
      %v1589 = vmax.f32 %v1557, 0.0
      %v1590 = vmax.f32 %v1558, 0.0
      %v1591 = vmax.f32 %v1559, 0.0
      %v1592 = vmax.f32 %v1560, 0.0
      %v1593 = vmax.f32 %v1561, 0.0
      %v1594 = vmax.f32 %v1562, 0.0
      %v1595 = vmax.f32 %v1563, 0.0
      %v1596 = vmax.f32 %v1564, 0.0
      %1597 = vst [vmem:[#allocation2] sm:$0xff] %v1565
      %1598 = vst [vmem:[#allocation2 + $0x8] sm:$0xff] %v1566
      %1599 = vst [vmem:[#allocation2 + $0x10] sm:$0xff] %v1567
      %1600 = vst [vmem:[#allocation2 + $0x18] sm:$0xff] %v1568
      %1601 = vst [vmem:[#allocation2 + $0x20] sm:$0xff] %v1569
      %1602 = vst [vmem:[#allocation2 + $0x28] sm:$0xff] %v1570
      %1603 = vst [vmem:[#allocation2 + $0x30] sm:$0xff] %v1571
      %1604 = vst [vmem:[#allocation2 + $0x38] sm:$0xff] %v1572
      %1605 = vst [vmem:[#allocation2 + $0x40] sm:$0xff] %v1573
      %1606 = vst [vmem:[#allocation2 + $0x48] sm:$0xff] %v1574
      %1607 = vst [vmem:[#allocation2 + $0x50] sm:$0xff] %v1575
      %1608 = vst [vmem:[#allocation2 + $0x58] sm:$0xff] %v1576
      %1609 = vst [vmem:[#allocation2 + $0x60] sm:$0xff] %v1577
      %1610 = vst [vmem:[#allocation2 + $0x68] sm:$0xff] %v1578
      %1611 = vst [vmem:[#allocation2 + $0x70] sm:$0xff] %v1579
      %1612 = vst [vmem:[#allocation2 + $0x78] sm:$0xff] %v1580
      %1613 = vst [vmem:[#allocation2 + $0x80] sm:$0xff] %v1581
      %1614 = vst [vmem:[#allocation2 + $0x88] sm:$0xff] %v1582
      %1615 = vst [vmem:[#allocation2 + $0x90] sm:$0xff] %v1583
      %1616 = vst [vmem:[#allocation2 + $0x98] sm:$0xff] %v1584
      %1617 = vst [vmem:[#allocation2 + $0xa0] sm:$0xff] %v1585
      %1618 = vst [vmem:[#allocation2 + $0xa8] sm:$0xff] %v1586
      %1619 = vst [vmem:[#allocation2 + $0xb0] sm:$0xff] %v1587
      %1620 = vst [vmem:[#allocation2 + $0xb8] sm:$0xff] %v1588
      %1621 = vst [vmem:[#allocation2 + $0xc0] sm:$0xff] %v1589
      %1622 = vst [vmem:[#allocation2 + $0xc8] sm:$0xff] %v1590
      %1623 = vst [vmem:[#allocation2 + $0xd0] sm:$0xff] %v1591
      %1624 = vst [vmem:[#allocation2 + $0xd8] sm:$0xff] %v1592
      %1625 = vst [vmem:[#allocation2 + $0xe0] sm:$0xff] %v1593
      %1626 = vst [vmem:[#allocation2 + $0xe8] sm:$0xff] %v1594
      %1627 = vst [vmem:[#allocation2 + $0xf0] sm:$0xff] %v1595
      %1628 = vst [vmem:[#allocation2 + $0xf8] sm:$0xff] %v1596
      %v1629 = vld [vmem:[#allocation2] ss:$2 sm:$0xff]
      %s1630 = scalar_lea.vmem [#allocation2], 16
      %v1631 = vld [vmem:[%s1630] ss:$2 sm:$0xff]
      %s1632 = scalar_lea.vmem [#allocation2], 32
      %v1633 = vld [vmem:[%s1632] ss:$2 sm:$0xff]
      %s1634 = scalar_lea.vmem [#allocation2], 48
      %v1635 = vld [vmem:[%s1634] ss:$2 sm:$0xff]
      %s1636 = scalar_lea.vmem [#allocation2], 64
      %v1637 = vld [vmem:[%s1636] ss:$2 sm:$0xff]
      %s1638 = scalar_lea.vmem [#allocation2], 80
      %v1639 = vld [vmem:[%s1638] ss:$2 sm:$0xff]
      %s1640 = scalar_lea.vmem [#allocation2], 96
      %v1641 = vld [vmem:[%s1640] ss:$2 sm:$0xff]
      %s1642 = scalar_lea.vmem [#allocation2], 112
      %v1643 = vld [vmem:[%s1642] ss:$2 sm:$0xff]
      %s1644 = scalar_lea.vmem [#allocation2], 128
      %v1645 = vld [vmem:[%s1644] ss:$2 sm:$0xff]
      %s1646 = scalar_lea.vmem [#allocation2], 144
      %v1647 = vld [vmem:[%s1646] ss:$2 sm:$0xff]
      %s1648 = scalar_lea.vmem [#allocation2], 160
      %v1649 = vld [vmem:[%s1648] ss:$2 sm:$0xff]
      %s1650 = scalar_lea.vmem [#allocation2], 176
      %v1651 = vld [vmem:[%s1650] ss:$2 sm:$0xff]
      %s1652 = scalar_lea.vmem [#allocation2], 192
      %v1653 = vld [vmem:[%s1652] ss:$2 sm:$0xff]
      %s1654 = scalar_lea.vmem [#allocation2], 208
      %v1655 = vld [vmem:[%s1654] ss:$2 sm:$0xff]
      %s1656 = scalar_lea.vmem [#allocation2], 224
      %v1657 = vld [vmem:[%s1656] ss:$2 sm:$0xff]
      %s1658 = scalar_lea.vmem [#allocation2], 240
      %v1659 = vld [vmem:[%s1658] ss:$2 sm:$0xff]
      %s1660 = scalar_lea.vmem [#allocation2], 1
      %v1661 = vld [vmem:[%s1660] ss:$2 sm:$0xff]
      %s1662 = scalar_lea.vmem [#allocation2], 17
      %v1663 = vld [vmem:[%s1662] ss:$2 sm:$0xff]
      %s1664 = scalar_lea.vmem [#allocation2], 33
      %v1665 = vld [vmem:[%s1664] ss:$2 sm:$0xff]
      %s1666 = scalar_lea.vmem [#allocation2], 49
      %v1667 = vld [vmem:[%s1666] ss:$2 sm:$0xff]
      %s1668 = scalar_lea.vmem [#allocation2], 65
      %v1669 = vld [vmem:[%s1668] ss:$2 sm:$0xff]
      %s1670 = scalar_lea.vmem [#allocation2], 81
      %v1671 = vld [vmem:[%s1670] ss:$2 sm:$0xff]
      %s1672 = scalar_lea.vmem [#allocation2], 97
      %v1673 = vld [vmem:[%s1672] ss:$2 sm:$0xff]
      %s1674 = scalar_lea.vmem [#allocation2], 113
      %v1675 = vld [vmem:[%s1674] ss:$2 sm:$0xff]
      %s1676 = scalar_lea.vmem [#allocation2], 129
      %v1677 = vld [vmem:[%s1676] ss:$2 sm:$0xff]
      %s1678 = scalar_lea.vmem [#allocation2], 145
      %v1679 = vld [vmem:[%s1678] ss:$2 sm:$0xff]
      %s1680 = scalar_lea.vmem [#allocation2], 161
      %v1681 = vld [vmem:[%s1680] ss:$2 sm:$0xff]
      %s1682 = scalar_lea.vmem [#allocation2], 177
      %v1683 = vld [vmem:[%s1682] ss:$2 sm:$0xff]
      %s1684 = scalar_lea.vmem [#allocation2], 193
      %v1685 = vld [vmem:[%s1684] ss:$2 sm:$0xff]
      %s1686 = scalar_lea.vmem [#allocation2], 209
      %v1687 = vld [vmem:[%s1686] ss:$2 sm:$0xff]
      %s1688 = scalar_lea.vmem [#allocation2], 225
      %v1689 = vld [vmem:[%s1688] ss:$2 sm:$0xff]
      %s1690 = scalar_lea.vmem [#allocation2], 241
      %v1691 = vld [vmem:[%s1690] ss:$2 sm:$0xff]
      %v1692 = vadd.f32 %v1629, %v1661
      %v1693 = vadd.f32 %v1631, %v1663
      %v1694 = vadd.f32 %v1633, %v1665
      %v1695 = vadd.f32 %v1635, %v1667
      %v1696 = vadd.f32 %v1637, %v1669
      %v1697 = vadd.f32 %v1639, %v1671
      %v1698 = vadd.f32 %v1641, %v1673
      %v1699 = vadd.f32 %v1643, %v1675
      %v1700 = vadd.f32 %v1645, %v1677
      %v1701 = vadd.f32 %v1647, %v1679
      %v1702 = vadd.f32 %v1649, %v1681
      %v1703 = vadd.f32 %v1651, %v1683
      %v1704 = vadd.f32 %v1653, %v1685
      %v1705 = vadd.f32 %v1655, %v1687
      %v1706 = vadd.f32 %v1657, %v1689
      %v1707 = vadd.f32 %v1659, %v1691
      %v1708 = vadd.f32 %v1692, %v1693
      %v1709 = vadd.f32 %v1694, %v1695
      %v1710 = vadd.f32 %v1696, %v1697
      %v1711 = vadd.f32 %v1698, %v1699
      %v1712 = vadd.f32 %v1700, %v1701
      %v1713 = vadd.f32 %v1702, %v1703
      %v1714 = vadd.f32 %v1704, %v1705
      %v1715 = vadd.f32 %v1706, %v1707
      %v1716 = vmul.f32 %v1708, 0.25
      %v1717 = vmul.f32 %v1709, 0.25
      %v1718 = vmul.f32 %v1710, 0.25
      %v1719 = vmul.f32 %v1711, 0.25
      %v1720 = vmul.f32 %v1712, 0.25
      %v1721 = vmul.f32 %v1713, 0.25
      %v1722 = vmul.f32 %v1714, 0.25
      %v1723 = vmul.f32 %v1715, 0.25
      %1724 = vst [vmem:[%s219] sm:$0xff] %v1716
      %1725 = vst [vmem:[%s219 + $0x8] sm:$0xff] %v1717
      %1726 = vst [vmem:[%s219 + $0x10] sm:$0xff] %v1718
      %1727 = vst [vmem:[%s219 + $0x18] sm:$0xff] %v1719
      %1728 = vst [vmem:[%s219 + $0x20] sm:$0xff] %v1720
      %1729 = vst [vmem:[%s219 + $0x28] sm:$0xff] %v1721
      %1730 = vst [vmem:[%s219 + $0x30] sm:$0xff] %v1722
      %1731 = vst [vmem:[%s219 + $0x38] sm:$0xff] %v1723
      %s1732 = smul.u32 8, %s20
      %p1733 = scmp.lt.s32.totalorder %s19, 1
      %s1734 = scalar_select %p1733, %s19, 1
      %p1735 = scmp.lt.s32.totalorder %s1732, 7
      %s1736 = scalar_select %p1735, %s1732, 7
      %s1737 = smul.addr %s1734, 8
      %s1738 = sadd.s32 %s1736, %s1737
      %s1739 = smul.addr %s1738, 8
      %s1740 = scalar_lea.vmem %s4, %s1739
      // Predicated region
      $region37: #{down_block2d_forward.3} parent=35 // pred_check
        %p1741 = pneg %p136
      $region38: #{down_block2d_forward.3} parent=35 // pred_check_branch
        %1743 = sbr.rel (%p1741) target = $region40
      $region39: #{down_block2d_forward.3} parent=35 // pred_region
        %s1744 = smul.u32 8, %s20
      $region40: #{down_block2d_forward.3} parent=35 // pred_fallthru
        _
    $region36: #{down_block2d_forward.3} parent=5 // pred_fallthru
      _
    %p1745 = scmp.le.s32.totalorder 2, %s10
    // Predicated region
    $region41: #{down_block2d_forward.3} parent=5 // pred_check
      %p1746 = pneg %p1745
    $region42: #{down_block2d_forward.3} parent=5 // pred_check_branch
      %1748 = sbr.rel (%p1746) target = $region44
    $region43: #{down_block2d_forward.3} parent=5 // pred_region
      %s1749 = ssub.s32 %s10, 2
      // Predicated region
      $region45: #{down_block2d_forward.3} parent=43 // pred_check
        %p1750 = pneg %p142
      $region46: #{down_block2d_forward.3} parent=43 // pred_check_branch
        %1752 = sbr.rel (%p1750) target = $region48
      $region47: #{down_block2d_forward.3} parent=43 // pred_region
        %s1753 = smul.u32 8, %s22
        %p1754 = scmp.lt.s32.totalorder %s21, 1
        %s1755 = scalar_select %p1754, %s21, 1
        %p1756 = scmp.lt.s32.totalorder %s1753, 7
        %s1757 = scalar_select %p1756, %s1753, 7
        %s1758 = smul.addr %s1755, 8
        %s1759 = sadd.s32 %s1757, %s1758
        %s1760 = smul.addr %s1759, 8
        %s1761 = scalar_lea.vmem %s4, %s1760
      $region48: #{down_block2d_forward.3} parent=43 // pred_fallthru
        _
    $region44: #{down_block2d_forward.3} parent=5 // pred_fallthru
      _
  $region6: #{down_block2d_forward.3} parent=0 // loop_footer
    %s14 = sadd.s32 1, %s10
  $region7: #{down_block2d_forward.3} parent=0 // loop_footer_branch
    %9 = sbr.rel target = $region3
  $region8: #{down_block2d_forward.3} parent=0 // loop_exit
    _

</llo_original>
